<compile_context>
chip_gen: v5e
topology: v5e:2x2
jax: 0.10.0
libtpu: 0.0.40
codegen_flags: <defaults>
</compile_context>

<pallas_src>
import functools

import jax
import jax.numpy as jnp
from jax.experimental import pallas as pl
from jax.experimental.pallas import tpu as pltpu

LANE = 128


# ----------------------------- quaternion weight ------------------------------
def make_quaternion_weight(r_w, i_w, j_w, k_w):
    """Full (Cout, Cin, KH, KW) conv weight, exactly as quaternion_conv()."""
    row_r = jnp.concatenate([r_w, -i_w, -j_w, -k_w], axis=1)
    row_i = jnp.concatenate([i_w,  r_w, -k_w,  j_w], axis=1)
    row_j = jnp.concatenate([j_w,  k_w,  r_w, -i_w], axis=1)
    row_k = jnp.concatenate([k_w, -j_w,  i_w,  r_w], axis=1)
    return jnp.concatenate([row_r, row_i, row_j, row_k], axis=0)


def _round_up(x, m):
    return -(-x // m) * m


def prepare_qconv_params(r_w, i_w, j_w, k_w, bias):
    """Kernel-ready weight/bias layout (hoist/cache this for inference reuse).

    Returns:
      w_k : (KH*KW*Cin, CP) bf16, im2col-ordered: w_k[(r*KW+c)*Cin+ci, co] = W[co,ci,r,c]
      b   : (1, CP) f32 zero-padded bias row
      dims: (cout, cin, kh, kw, cp)
    """
    w_full = make_quaternion_weight(r_w, i_w, j_w, k_w)        # (Cout, Cin, KH, KW)
    cout, cin, kh, kw = w_full.shape
    # 256-wide Cout tiles fill the v6e/v7x MXU; 128 minimum (v5e tile) otherwise.
    cp = _round_up(cout, 256) if cout > LANE else LANE
    w_k = jnp.transpose(w_full, (2, 3, 1, 0)).reshape(kh * kw * cin, cout)
    w_k = jnp.pad(w_k, ((0, 0), (0, cp - cout))).astype(jnp.bfloat16)
    b = jnp.pad(bias.astype(jnp.float32), (0, cp - cout)).reshape(1, cp)
    return w_k, b, (cout, cin, kh, kw, cp)


def _pick_row_tile(oh, ow, target_m=256):
    """Smallest divisor T of OH with T*OW >= target_m (MXU M axis), else OH."""
    for t in range(1, oh + 1):
        if oh % t == 0 and t * ow >= target_m:
            return t
    return oh


# --------------------------------- kernel -------------------------------------
def _make_qconv_kernel(t_rows, ow, kh, kw, cin, stride, dilation):
    """Per grid step (b, t): one row group of T output rows.
       x_ref:     (1, Hp, Wp, Cin) bf16  padded NHWC image (resident per b)
       w_ref:     (KH*KW*Cin, CP)  bf16
       b_ref:     (1, CP)          f32
       o_ref:     (1, T*OW, CP)    bf16
       patch_ref: (T, OW, KH*KW*Cin) bf16 VMEM scratch (im2col tile)
    """
    k_dim = kh * kw * cin

    def kernel(x_ref, w_ref, b_ref, o_ref, patch_ref):
        t = pl.program_id(1)
        row0 = pl.multiple_of(t * (t_rows * stride), t_rows * stride)

        # ---- fused im2col: one gather per tap per ROW GROUP -----------------
        for r in range(kh):
            for c in range(kw):
                tap = r * kw + c
                if stride == 1:
                    rows = x_ref[0, pl.ds(row0 + r * dilation, t_rows),
                                 pl.ds(c * dilation, ow), :]
                else:
                    rows = x_ref[0, pl.ds(row0 + r * dilation, t_rows, stride),
                                 pl.ds(c * dilation, ow, stride), :]
                patch_ref[:, :, tap * cin:(tap + 1) * cin] = rows

        # ---- single MXU contraction: (T*OW, K) @ (K, CP), f32 accumulation --
        patch = patch_ref[...].reshape(t_rows * ow, k_dim)
        acc = jnp.dot(patch, w_ref[...], preferred_element_type=jnp.float32)
        acc = acc + b_ref[...]                    # bias only in the epilogue
        o_ref[0, :, :] = acc.astype(o_ref.dtype)  # one lane-dense slab store

    return kernel


# --------------------------------- wrapper -------------------------------------
@functools.partial(jax.jit, static_argnames=("stride", "padding", "dilation"))
def quaternion_conv2d(x, r_w, i_w, j_w, k_w, bias, *, stride=1, padding=0,
                      dilation=1):
    """Forward of QuaternionConv (convolution2d, rotation=False, groups=1).
    x is NCHW float32; returns NCHW float32 (bf16 MXU path, f32 accumulation)."""
    n, cin, h, w = x.shape
    w_k, b_row, (cout, cin_w, kh, kw, cp) = prepare_qconv_params(
        r_w, i_w, j_w, k_w, bias)
    assert cin_w == cin, "channel mismatch"

    oh = (h + 2 * padding - dilation * (kh - 1) - 1) // stride + 1
    ow = (w + 2 * padding - dilation * (kw - 1) - 1) // stride + 1
    hp, wp = h + 2 * padding, w + 2 * padding
    t_rows = _pick_row_tile(oh, ow)
    k_dim = kh * kw * cin

    # Pad spatially, NHWC, bf16 (XLA fuses these into one pass).
    xp = jnp.pad(x, ((0, 0), (0, 0), (padding, padding), (padding, padding)))
    xp = jnp.transpose(xp, (0, 2, 3, 1)).astype(jnp.bfloat16)   # (N, Hp, Wp, Cin)

    kernel = _make_qconv_kernel(t_rows, ow, kh, kw, cin, stride, dilation)

    flops = 2 * n * oh * ow * k_dim * cout                      # real Cout
    bytes_accessed = (n * hp * wp * cin * 2                     # bf16 input
                      + k_dim * cp * 2                          # bf16 weight
                      + cp * 4                                  # bias
                      + n * oh * ow * cp * 2)                   # bf16 output

    out = pl.pallas_call(
        kernel,
        out_shape=jax.ShapeDtypeStruct((n, oh * ow, cp), jnp.bfloat16),
        grid_spec=pltpu.PrefetchScalarGridSpec(
            num_scalar_prefetch=0,
            grid=(n, oh // t_rows),
            in_specs=[
                # whole padded image, resident across the row-tile axis
                pl.BlockSpec((1, hp, wp, cin), lambda b, t: (b, 0, 0, 0)),
                pl.BlockSpec((k_dim, cp), lambda b, t: (0, 0)),   # weight
                pl.BlockSpec((1, cp), lambda b, t: (0, 0)),       # bias
            ],
            out_specs=pl.BlockSpec((1, t_rows * ow, cp), lambda b, t: (b, t, 0)),
            scratch_shapes=[pltpu.VMEM((t_rows, ow, k_dim), jnp.bfloat16)],
        ),
        compiler_params=pltpu.CompilerParams(
            dimension_semantics=("parallel", "parallel")),
        cost_estimate=pl.CostEstimate(flops=int(flops), transcendentals=0,
                                      bytes_accessed=int(bytes_accessed)),
    )(xp, w_k, b_row)

    out = out.reshape(n, oh, ow, cp)[..., :cout]          # drop lane padding
    # NCHW + f32 for PyTorch API parity (single fused XLA pass).
    return jnp.transpose(out, (0, 3, 1, 2)).astype(jnp.float32)


# ----------------------------------- main --------------------------------------
if __name__ == "__main__":
    # Module config: in_channels=8, out_channels=8, kernel=3, stride=1, pad=1.
    in_channels, out_channels = 8, 8
    kernel_size, stride, padding, dilation = 3, 1, 1, 1
    N, H, W = 2, 16, 16

    cin_q = in_channels // 4      # per-component in channels
    cout_q = out_channels // 4    # per-component out channels
    w_shape = (cout_q, cin_q, kernel_size, kernel_size)

    key = jax.random.PRNGKey(0)
    kx, kr, ki, kj, kk = jax.random.split(key, 5)

    # Deterministic synthetic parameters (quaternion_init not reproduced;
    # only shapes matter for forward semantics).
    fan = cin_q * kernel_size * kernel_size
    scale = 1.0 / jnp.sqrt(jnp.float32(fan))
    r_weight = jax.random.normal(kr, w_shape, jnp.float32) * scale
    i_weight = jax.random.normal(ki, w_shape, jnp.float32) * scale
    j_weight = jax.random.normal(kj, w_shape, jnp.float32) * scale
    k_weight = jax.random.normal(kk, w_shape, jnp.float32) * scale
    bias = jnp.zeros((out_channels,), jnp.float32)   # reset_parameters zeroes it

    x = jax.random.normal(kx, (N, in_channels, H, W), jnp.float32)

    out = quaternion_conv2d(x, r_weight, i_weight, j_weight, k_weight, bias,
                            stride=stride, padding=padding, dilation=dilation)
    out = jax.block_until_ready(out)

    # Reference: XLA conv on the same bf16-rounded operands with f32
    # accumulation, then rounded to bf16 like the kernel's output path.
    w_full = make_quaternion_weight(r_weight, i_weight, j_weight, k_weight)
    ref = jax.lax.conv_general_dilated(
        x.astype(jnp.bfloat16), w_full.astype(jnp.bfloat16),
        window_strides=(stride, stride),
        padding=((padding, padding), (padding, padding)),
        rhs_dilation=(dilation, dilation),
        dimension_numbers=("NCHW", "OIHW", "NCHW"),
        preferred_element_type=jnp.float32,
    ) + bias.reshape(1, -1, 1, 1)
    ref = ref.astype(jnp.bfloat16).astype(jnp.float32)
    ref = jax.block_until_ready(ref)

    assert out.shape == (N, out_channels, H, W), out.shape
    err = float(jnp.max(jnp.abs(out - ref)))
    assert err < 6e-2, err   # <= ~1 bf16 ulp of the largest output value
    print("KERNEL_OK")
</pallas_src>

<mosaic_0001>
module attributes {stable_mosaic.version = 11 : i64} {
  func.func @kernel(%arg0: i32, %arg1: i32, %arg2: memref<1x18x18x8xbf16, #tpu.memory_space<vmem>>, %arg3: memref<72x128xbf16, #tpu.memory_space<vmem>>, %arg4: memref<1x128xf32, #tpu.memory_space<vmem>>, %arg5: memref<1x256x128xbf16, #tpu.memory_space<vmem>>, %arg6: memref<16x16x72xbf16, #tpu.memory_space<vmem>>) attributes {dimension_semantics = [#tpu.dimension_semantics<parallel>, #tpu.dimension_semantics<parallel>], iteration_bounds = array<i64: 2, 1>, scalar_prefetch = 0 : i64, scratch_operands = 1 : i64, tpu.core_type = #tpu.core_type<tc>, window_params = [{transform_indices = @transform_0, window_bounds = array<i64: 1, 18, 18, 8>}, {pipeline_mode = #tpu.pipeline_mode<synchronous>, transform_indices = @transform_1, window_bounds = array<i64: 72, 128>}, {pipeline_mode = #tpu.pipeline_mode<synchronous>, transform_indices = @transform_2, window_bounds = array<i64: 1, 128>}, {transform_indices = @transform_3, window_bounds = array<i64: 1, 256, 128>}]} {
    %c16_i32 = arith.constant 16 : i32
    %0 = arith.muli %arg1, %c16_i32 : i32
    %1 = tpu.assume_multiple %0, 16 : i32
    %c0_i32 = arith.constant 0 : i32
    %2 = arith.addi %1, %c0_i32 : i32
    %c0 = arith.constant 0 : index
    %3 = arith.index_cast %2 : i32 to index
    %c0_0 = arith.constant 0 : index
    %c0_1 = arith.constant 0 : index
    %4 = vector.load %arg2[%c0, %3, %c0_0, %c0_1] : memref<1x18x18x8xbf16, #tpu.memory_space<vmem>>, vector<1x16x16x8xbf16>
    %5 = vector.shape_cast %4 : vector<1x16x16x8xbf16> to vector<16x16x8xbf16>
    %c0_2 = arith.constant 0 : index
    %c0_3 = arith.constant 0 : index
    %c0_4 = arith.constant 0 : index
    %6 = vector.load %arg6[%c0_2, %c0_3, %c0_4] : memref<16x16x72xbf16, #tpu.memory_space<vmem>>, vector<16x16x8xbf16>
    tpu.vector_store %arg6[%c0_2, %c0_3, %c0_4], %5 {strides = array<i32>} : memref<16x16x72xbf16, #tpu.memory_space<vmem>>, vector<16x16x8xbf16>,
    %c0_i32_5 = arith.constant 0 : i32
    %7 = arith.addi %1, %c0_i32_5 : i32
    %c0_6 = arith.constant 0 : index
    %8 = arith.index_cast %7 : i32 to index
    %c1 = arith.constant 1 : index
    %c0_7 = arith.constant 0 : index
    %9 = vector.load %arg2[%c0_6, %8, %c1, %c0_7] : memref<1x18x18x8xbf16, #tpu.memory_space<vmem>>, vector<1x16x16x8xbf16>
    %10 = vector.shape_cast %9 : vector<1x16x16x8xbf16> to vector<16x16x8xbf16>
    %c0_8 = arith.constant 0 : index
    %c0_9 = arith.constant 0 : index
    %c8 = arith.constant 8 : index
    %11 = vector.load %arg6[%c0_8, %c0_9, %c8] : memref<16x16x72xbf16, #tpu.memory_space<vmem>>, vector<16x16x8xbf16>
    tpu.vector_store %arg6[%c0_8, %c0_9, %c8], %10 {strides = array<i32>} : memref<16x16x72xbf16, #tpu.memory_space<vmem>>, vector<16x16x8xbf16>,
    %c0_i32_10 = arith.constant 0 : i32
    %12 = arith.addi %1, %c0_i32_10 : i32
    %c0_11 = arith.constant 0 : index
    %13 = arith.index_cast %12 : i32 to index
    %c2 = arith.constant 2 : index
    %c0_12 = arith.constant 0 : index
    %14 = vector.load %arg2[%c0_11, %13, %c2, %c0_12] : memref<1x18x18x8xbf16, #tpu.memory_space<vmem>>, vector<1x16x16x8xbf16>
    %15 = vector.shape_cast %14 : vector<1x16x16x8xbf16> to vector<16x16x8xbf16>
    %c0_13 = arith.constant 0 : index
    %c0_14 = arith.constant 0 : index
    %c16 = arith.constant 16 : index
    %16 = vector.load %arg6[%c0_13, %c0_14, %c16] : memref<16x16x72xbf16, #tpu.memory_space<vmem>>, vector<16x16x8xbf16>
    tpu.vector_store %arg6[%c0_13, %c0_14, %c16], %15 {strides = array<i32>} : memref<16x16x72xbf16, #tpu.memory_space<vmem>>, vector<16x16x8xbf16>,
    %c1_i32 = arith.constant 1 : i32
    %17 = arith.addi %1, %c1_i32 : i32
    %c0_15 = arith.constant 0 : index
    %18 = arith.index_cast %17 : i32 to index
    %c0_16 = arith.constant 0 : index
    %c0_17 = arith.constant 0 : index
    %19 = vector.load %arg2[%c0_15, %18, %c0_16, %c0_17] : memref<1x18x18x8xbf16, #tpu.memory_space<vmem>>, vector<1x16x16x8xbf16>
    %20 = vector.shape_cast %19 : vector<1x16x16x8xbf16> to vector<16x16x8xbf16>
    %c0_18 = arith.constant 0 : index
    %c0_19 = arith.constant 0 : index
    %c24 = arith.constant 24 : index
    %21 = vector.load %arg6[%c0_18, %c0_19, %c24] : memref<16x16x72xbf16, #tpu.memory_space<vmem>>, vector<16x16x8xbf16>
    tpu.vector_store %arg6[%c0_18, %c0_19, %c24], %20 {strides = array<i32>} : memref<16x16x72xbf16, #tpu.memory_space<vmem>>, vector<16x16x8xbf16>,
    %c1_i32_20 = arith.constant 1 : i32
    %22 = arith.addi %1, %c1_i32_20 : i32
    %c0_21 = arith.constant 0 : index
    %23 = arith.index_cast %22 : i32 to index
    %c1_22 = arith.constant 1 : index
    %c0_23 = arith.constant 0 : index
    %24 = vector.load %arg2[%c0_21, %23, %c1_22, %c0_23] : memref<1x18x18x8xbf16, #tpu.memory_space<vmem>>, vector<1x16x16x8xbf16>
    %25 = vector.shape_cast %24 : vector<1x16x16x8xbf16> to vector<16x16x8xbf16>
    %c0_24 = arith.constant 0 : index
    %c0_25 = arith.constant 0 : index
    %c32 = arith.constant 32 : index
    %26 = vector.load %arg6[%c0_24, %c0_25, %c32] : memref<16x16x72xbf16, #tpu.memory_space<vmem>>, vector<16x16x8xbf16>
    tpu.vector_store %arg6[%c0_24, %c0_25, %c32], %25 {strides = array<i32>} : memref<16x16x72xbf16, #tpu.memory_space<vmem>>, vector<16x16x8xbf16>,
    %c1_i32_26 = arith.constant 1 : i32
    %27 = arith.addi %1, %c1_i32_26 : i32
    %c0_27 = arith.constant 0 : index
    %28 = arith.index_cast %27 : i32 to index
    %c2_28 = arith.constant 2 : index
    %c0_29 = arith.constant 0 : index
    %29 = vector.load %arg2[%c0_27, %28, %c2_28, %c0_29] : memref<1x18x18x8xbf16, #tpu.memory_space<vmem>>, vector<1x16x16x8xbf16>
    %30 = vector.shape_cast %29 : vector<1x16x16x8xbf16> to vector<16x16x8xbf16>
    %c0_30 = arith.constant 0 : index
    %c0_31 = arith.constant 0 : index
    %c40 = arith.constant 40 : index
    %31 = vector.load %arg6[%c0_30, %c0_31, %c40] : memref<16x16x72xbf16, #tpu.memory_space<vmem>>, vector<16x16x8xbf16>
    tpu.vector_store %arg6[%c0_30, %c0_31, %c40], %30 {strides = array<i32>} : memref<16x16x72xbf16, #tpu.memory_space<vmem>>, vector<16x16x8xbf16>,
    %c2_i32 = arith.constant 2 : i32
    %32 = arith.addi %1, %c2_i32 : i32
    %c0_32 = arith.constant 0 : index
    %33 = arith.index_cast %32 : i32 to index
    %c0_33 = arith.constant 0 : index
    %c0_34 = arith.constant 0 : index
    %34 = vector.load %arg2[%c0_32, %33, %c0_33, %c0_34] : memref<1x18x18x8xbf16, #tpu.memory_space<vmem>>, vector<1x16x16x8xbf16>
    %35 = vector.shape_cast %34 : vector<1x16x16x8xbf16> to vector<16x16x8xbf16>
    %c0_35 = arith.constant 0 : index
    %c0_36 = arith.constant 0 : index
    %c48 = arith.constant 48 : index
    %36 = vector.load %arg6[%c0_35, %c0_36, %c48] : memref<16x16x72xbf16, #tpu.memory_space<vmem>>, vector<16x16x8xbf16>
    tpu.vector_store %arg6[%c0_35, %c0_36, %c48], %35 {strides = array<i32>} : memref<16x16x72xbf16, #tpu.memory_space<vmem>>, vector<16x16x8xbf16>,
    %c2_i32_37 = arith.constant 2 : i32
    %37 = arith.addi %1, %c2_i32_37 : i32
    %c0_38 = arith.constant 0 : index
    %38 = arith.index_cast %37 : i32 to index
    %c1_39 = arith.constant 1 : index
    %c0_40 = arith.constant 0 : index
    %39 = vector.load %arg2[%c0_38, %38, %c1_39, %c0_40] : memref<1x18x18x8xbf16, #tpu.memory_space<vmem>>, vector<1x16x16x8xbf16>
    %40 = vector.shape_cast %39 : vector<1x16x16x8xbf16> to vector<16x16x8xbf16>
    %c0_41 = arith.constant 0 : index
    %c0_42 = arith.constant 0 : index
    %c56 = arith.constant 56 : index
    %41 = vector.load %arg6[%c0_41, %c0_42, %c56] : memref<16x16x72xbf16, #tpu.memory_space<vmem>>, vector<16x16x8xbf16>
    tpu.vector_store %arg6[%c0_41, %c0_42, %c56], %40 {strides = array<i32>} : memref<16x16x72xbf16, #tpu.memory_space<vmem>>, vector<16x16x8xbf16>,
    %c2_i32_43 = arith.constant 2 : i32
    %42 = arith.addi %1, %c2_i32_43 : i32
    %c0_44 = arith.constant 0 : index
    %43 = arith.index_cast %42 : i32 to index
    %c2_45 = arith.constant 2 : index
    %c0_46 = arith.constant 0 : index
    %44 = vector.load %arg2[%c0_44, %43, %c2_45, %c0_46] : memref<1x18x18x8xbf16, #tpu.memory_space<vmem>>, vector<1x16x16x8xbf16>
    %45 = vector.shape_cast %44 : vector<1x16x16x8xbf16> to vector<16x16x8xbf16>
    %c0_47 = arith.constant 0 : index
    %c0_48 = arith.constant 0 : index
    %c64 = arith.constant 64 : index
    %46 = vector.load %arg6[%c0_47, %c0_48, %c64] : memref<16x16x72xbf16, #tpu.memory_space<vmem>>, vector<16x16x8xbf16>
    tpu.vector_store %arg6[%c0_47, %c0_48, %c64], %45 {strides = array<i32>} : memref<16x16x72xbf16, #tpu.memory_space<vmem>>, vector<16x16x8xbf16>,
    %c0_49 = arith.constant 0 : index
    %c0_50 = arith.constant 0 : index
    %c0_51 = arith.constant 0 : index
    %47 = vector.load %arg6[%c0_49, %c0_50, %c0_51] : memref<16x16x72xbf16, #tpu.memory_space<vmem>>, vector<16x16x72xbf16>
    %48 = vector.shape_cast %47 : vector<16x16x72xbf16> to vector<256x72xbf16>
    %c0_52 = arith.constant 0 : index
    %c0_53 = arith.constant 0 : index
    %49 = vector.load %arg3[%c0_52, %c0_53] : memref<72x128xbf16, #tpu.memory_space<vmem>>, vector<72x128xbf16>
    %cst = arith.constant dense<0.000000e+00> : vector<256x128xf32>
    %50 = tpu.matmul %48, %49, %cst {dimension_numbers = #tpu.dot_dimension_numbers<[1], [0], [0], [1], [0, 0, 1, 1], [], []>} : vector<256x72xbf16>, vector<72x128xbf16>, vector<256x128xf32> -> vector<256x128xf32>
    %c0_54 = arith.constant 0 : index
    %c0_55 = arith.constant 0 : index
    %51 = vector.load %arg4[%c0_54, %c0_55] : memref<1x128xf32, #tpu.memory_space<vmem>>, vector<1x128xf32>
    %52 = vector.broadcast %51 : vector<1x128xf32> to vector<256x128xf32>
    %53 = arith.addf %50, %52 : vector<256x128xf32>
    %54 = arith.truncf %53 : vector<256x128xf32> to vector<256x128xbf16>
    %c0_56 = arith.constant 0 : index
    %c0_57 = arith.constant 0 : index
    %c0_58 = arith.constant 0 : index
    %55 = vector.load %arg5[%c0_56, %c0_57, %c0_58] : memref<1x256x128xbf16, #tpu.memory_space<vmem>>, vector<1x256x128xbf16>
    %56 = vector.shape_cast %55 : vector<1x256x128xbf16> to vector<256x128xbf16>
    %57 = vector.shape_cast %54 : vector<256x128xbf16> to vector<1x256x128xbf16>
    tpu.vector_store %arg5[%c0_56, %c0_57, %c0_58], %57 {strides = array<i32>} : memref<1x256x128xbf16, #tpu.memory_space<vmem>>, vector<1x256x128xbf16>,
    return
  }
  func.func @transform_0(%arg0: i32, %arg1: i32) -> (i32, i32, i32, i32) {
    %c0_i32 = arith.constant 0 : i32
    %c0_i32_0 = arith.constant 0 : i32
    %c0_i32_1 = arith.constant 0 : i32
    %c0_i32_2 = arith.constant 0 : i32
    return %arg0, %c0_i32, %c0_i32_0, %c0_i32_1 : i32, i32, i32, i32
  }
  func.func @transform_1(%arg0: i32, %arg1: i32) -> (i32, i32) {
    %c0_i32 = arith.constant 0 : i32
    %c0_i32_0 = arith.constant 0 : i32
    %c0_i32_1 = arith.constant 0 : i32
    return %c0_i32, %c0_i32_0 : i32, i32
  }
  func.func @transform_2(%arg0: i32, %arg1: i32) -> (i32, i32) {
    %c0_i32 = arith.constant 0 : i32
    %c0_i32_0 = arith.constant 0 : i32
    %c0_i32_1 = arith.constant 0 : i32
    return %c0_i32, %c0_i32_0 : i32, i32
  }
  func.func @transform_3(%arg0: i32, %arg1: i32) -> (i32, i32, i32) {
    %c0_i32 = arith.constant 0 : i32
    %c0_i32_0 = arith.constant 0 : i32
    return %arg0, %arg1, %c0_i32 : i32, i32, i32
  }
}

</mosaic_0001>

<llo_original>
// kernel: quaternion_conv2d.1
$region0: #{quaternion_conv2d.1}
  #allocation0 [shape = 'u32[]', space=smem, size = 0x4, offset = 0x4, fixed_abs, tag = 'smem constant byte address 0x4 - core index']
  #allocation1 [shape = 'u32[72,128]{1,0:T(1,128)}', space=vmem, size = 0x9000, scoped, tag = 'internal scratch']
  #allocation2 [shape = 'bf16[16,16,72]{2,1,0:T(8,128)(2,1)}', space=vmem, size = 0x10000, scoped, tag = 'scratch operand']
  %s0 = inlined_call_operand.vmem [shape: bf16[2,18,18,8], index: 0, kind: input, shape index: {}]
  %s1 = inlined_call_operand.vmem [shape: bf16[72,128], index: 1, kind: input, shape index: {}]
  %s2 = inlined_call_operand.vmem [shape: f32[1,128], index: 2, kind: input, shape index: {}]
  %s3 = inlined_call_operand.vmem [shape: bf16[2,256,128], index: 3, kind: output, shape index: {}]
  %s4 = sld [smem:[#allocation0]]
  $region45: #{quaternion_conv2d.1} parent=0
    _
  %s6 = ssub.s32 1, %s4
  %s7 = scalar_select 0, %s6, %s4
  loop: start=0, step=1, limit=4
  $region2: #{quaternion_conv2d.1} parent=0 // loop_pre_header
    _
  $region3: #{quaternion_conv2d.1} parent=0 // loop_header
    %s9 = sphi 0, %s13
    %p10 = scmp.ge.s32.totalorder %s9, 4
    %s16 = sphi 0, %s28
    %s17 = sphi 0, %s24
    %s18 = sphi 0, %s16
    %s19 = sphi 0, %s17
    %s20 = sphi 0, %s18
    %s21 = sphi 0, %s19
    %s31 = sphi 0, %s33
    %s34 = sphi 0, %s31
    %s35 = sphi 0, %s34
    %s51 = sphi 0, %s35
    %s55 = sphi 0, %s55
    %s57 = sphi 0, %s55
    %s58 = sphi 0, %s57
    %s72 = sphi 0, %s58
    %s76 = sphi 0, %s76
    %s78 = sphi 0, %s76
    %s79 = sphi 0, %s78
    %s93 = sphi 0, %s79
    %s101 = sphi 0, %s103
    %s104 = sphi 0, %s101
    %s105 = sphi 0, %s104
    %s121 = sphi 0, %s105
  $region4: #{quaternion_conv2d.1} parent=0 // loop_header_branch
    %12 = sbr.rel (%p10) target = $region8
  $region5: #{quaternion_conv2d.1} parent=0 // loop_body
    %s14 = ssub.s32 %s9, 1
    %s15 = ssub.s32 %s9, 2
    %s22 = sadd.s32 1, %s17
    %p23 = scmp.ge.s32.totalorder %s22, 1
    %s24 = scalar_select %p23, 0, %s22
    %s25 = sadd.s32 1, %s16
    %s26 = scalar_select %p23, %s25, %s16
    %p27 = scmp.ge.s32.totalorder %s26, 2
    %s28 = scalar_select %p27, 0, %s26
    %s29 = ssub.s32 %s16, %s28
    %p30 = scmp.eq.s32.totalorder %s29, 0
    %s32 = sadd.s32 %s31, 1
    %s33 = scalar_select %p30, %s31, %s32
    %p36 = pneg %p30
    %p37 = scmp.eq.s32.totalorder %s9, 1
    %p38 = por %p36, %p37
    %p39 = scmp.ne.s32.totalorder %s31, %s34
    %p40 = scmp.eq.s32.totalorder %s9, 0
    %p41 = por %p39, %p40
    %p42 = scmp.ne.s32.totalorder %s31, %s34
    %p43 = scmp.eq.s32.totalorder %s14, 1
    %p44 = por %p42, %p43
    %p45 = scmp.ne.s32.totalorder %s34, %s35
    %p46 = scmp.eq.s32.totalorder %s14, 0
    %p47 = por %p45, %p46
    %p48 = scmp.ne.s32.totalorder %s34, %s35
    %p49 = scmp.eq.s32.totalorder %s15, 1
    %p50 = por %p48, %p49
    %p52 = scmp.ne.s32.totalorder %s35, %s51
    %p53 = scmp.eq.s32.totalorder %s15, 0
    %p54 = por %p52, %p53
    %s56 = sadd.s32 %s55, 1
    %p59 = scmp.eq.s32.totalorder %s9, 1
    %p60 = scmp.ne.s32.totalorder %s55, %s57
    %p61 = scmp.eq.s32.totalorder %s9, 0
    %p62 = por %p60, %p61
    %p63 = scmp.ne.s32.totalorder %s55, %s57
    %p64 = scmp.eq.s32.totalorder %s14, 1
    %p65 = por %p63, %p64
    %p66 = scmp.ne.s32.totalorder %s57, %s58
    %p67 = scmp.eq.s32.totalorder %s14, 0
    %p68 = por %p66, %p67
    %p69 = scmp.ne.s32.totalorder %s57, %s58
    %p70 = scmp.eq.s32.totalorder %s15, 1
    %p71 = por %p69, %p70
    %p73 = scmp.ne.s32.totalorder %s58, %s72
    %p74 = scmp.eq.s32.totalorder %s15, 0
    %p75 = por %p73, %p74
    %s77 = sadd.s32 %s76, 1
    %p80 = scmp.eq.s32.totalorder %s9, 1
    %p81 = scmp.ne.s32.totalorder %s76, %s78
    %p82 = scmp.eq.s32.totalorder %s9, 0
    %p83 = por %p81, %p82
    %p84 = scmp.ne.s32.totalorder %s76, %s78
    %p85 = scmp.eq.s32.totalorder %s14, 1
    %p86 = por %p84, %p85
    %p87 = scmp.ne.s32.totalorder %s78, %s79
    %p88 = scmp.eq.s32.totalorder %s14, 0
    %p89 = por %p87, %p88
    %p90 = scmp.ne.s32.totalorder %s78, %s79
    %p91 = scmp.eq.s32.totalorder %s15, 1
    %p92 = por %p90, %p91
    %p94 = scmp.ne.s32.totalorder %s79, %s93
    %p95 = scmp.eq.s32.totalorder %s15, 0
    %p96 = por %p94, %p95
    %s97 = ssub.s32 %s16, %s28
    %s98 = ssub.s32 %s17, %s24
    %s99 = sor.u32 %s97, %s98
    %p100 = scmp.eq.s32.totalorder %s99, 0
    %s102 = sadd.s32 %s101, 1
    %s103 = scalar_select %p100, %s101, %s102
    %p106 = pneg %p100
    %p107 = scmp.eq.s32.totalorder %s9, 1
    %p108 = por %p106, %p107
    %p109 = scmp.ne.s32.totalorder %s101, %s104
    %p110 = scmp.eq.s32.totalorder %s9, 0
    %p111 = por %p109, %p110
    %p112 = scmp.ne.s32.totalorder %s101, %s104
    %p113 = scmp.eq.s32.totalorder %s14, 1
    %p114 = por %p112, %p113
    %p115 = scmp.ne.s32.totalorder %s104, %s105
    %p116 = scmp.eq.s32.totalorder %s14, 0
    %p117 = por %p115, %p116
    %p118 = scmp.ne.s32.totalorder %s104, %s105
    %p119 = scmp.eq.s32.totalorder %s15, 1
    %p120 = por %p118, %p119
    %p122 = scmp.ne.s32.totalorder %s105, %s121
    %p123 = scmp.eq.s32.totalorder %s15, 0
    %p124 = por %p122, %p123
    %p125 = scmp.le.s32.totalorder 1, %s9
    %p126 = scmp.lt.s32.totalorder %s9, 3
    %p127 = pnand %p125, %p126
    %p128 = pneg %p127
    // Predicated region
    $region9: #{quaternion_conv2d.1} parent=5 // pred_check
      _
    $region10: #{quaternion_conv2d.1} parent=5 // pred_check_branch
      %130 = sbr.rel (%p127) target = $region12
    $region11: #{quaternion_conv2d.1} parent=5 // pred_region
      %s131 = ssub.s32 %s9, 1
      // Predicated region
      $region13: #{quaternion_conv2d.1} parent=11 // pred_check
        %p132 = pneg %p68
      $region14: #{quaternion_conv2d.1} parent=11 // pred_check_branch
        %134 = sbr.rel (%p132) target = $region16
      $region15: #{quaternion_conv2d.1} parent=11 // pred_region
        _
      $region16: #{quaternion_conv2d.1} parent=11 // pred_fallthru
        _
      // Predicated region
      $region17: #{quaternion_conv2d.1} parent=11 // pred_check
        %p135 = pneg %p89
      $region18: #{quaternion_conv2d.1} parent=11 // pred_check_branch
        %137 = sbr.rel (%p135) target = $region20
      $region19: #{quaternion_conv2d.1} parent=11 // pred_region
        _
      $region20: #{quaternion_conv2d.1} parent=11 // pred_fallthru
        _
    $region12: #{quaternion_conv2d.1} parent=5 // pred_fallthru
      _
    %p138 = scmp.lt.s32.totalorder %s9, 2
    // Predicated region
    $region21: #{quaternion_conv2d.1} parent=5 // pred_check
      %p139 = pneg %p138
    $region22: #{quaternion_conv2d.1} parent=5 // pred_check_branch
      %141 = sbr.rel (%p139) target = $region24
    $region23: #{quaternion_conv2d.1} parent=5 // pred_region
      // Predicated region
      $region25: #{quaternion_conv2d.1} parent=23 // pred_check
        %p142 = pneg %p41
      $region26: #{quaternion_conv2d.1} parent=23 // pred_check_branch
        %144 = sbr.rel (%p142) target = $region28
      $region27: #{quaternion_conv2d.1} parent=23 // pred_region
        %p145 = scmp.lt.s32.totalorder %s16, 1
        %s146 = scalar_select %p145, %s16, 1
        %s147 = smul.addr %s146, 54
        %s148 = smul.addr %s147, 4
        %s149 = scalar_lea.vmem %s0, %s148
      $region28: #{quaternion_conv2d.1} parent=23 // pred_fallthru
        _
    $region24: #{quaternion_conv2d.1} parent=5 // pred_fallthru
      _
    %p150 = scmp.le.s32.totalorder 1, %s9
    %p151 = scmp.lt.s32.totalorder %s9, 3
    %p152 = pnand %p150, %p151
    %p153 = pneg %p152
    // Predicated region
    $region29: #{quaternion_conv2d.1} parent=5 // pred_check
      _
    $region30: #{quaternion_conv2d.1} parent=5 // pred_check_branch
      %155 = sbr.rel (%p152) target = $region32
    $region31: #{quaternion_conv2d.1} parent=5 // pred_region
      %s156 = ssub.s32 %s9, 1
      %p157 = scmp.lt.s32.totalorder %s18, 1
      %s158 = scalar_select %p157, %s18, 1
      %s159 = smul.addr %s158, 54
      %s160 = smul.addr %s159, 4
      %s161 = scalar_lea.vmem %s0, %s160
      %p162 = pneg %p47
      %p163 = pneg %p44
      %p164 = pneg %p68
      %p165 = pneg %p65
      %p166 = pneg %p89
      %p167 = pneg %p86
      %p168 = pneg %p117
      %p169 = pneg %p114
      %s170 = smul.u32 32, %s19
      %p171 = scmp.lt.s32.totalorder %s18, 1
      %s172 = scalar_select %p171, %s18, 1
      %p173 = scmp.lt.s32.totalorder %s170, 31
      %s174 = scalar_select %p173, %s170, 31
      %s175 = smul.addr %s172, 32
      %s176 = sadd.s32 %s174, %s175
      %s177 = smul.addr %s176, 4
      %s178 = scalar_lea.vmem %s3, %s177
      %p179 = scmp.lt.s32.totalorder %s18, 1
      %s180 = scalar_select %p179, %s18, 1
      %s181 = smul.addr %s180, 54
      %s182 = smul.addr %s181, 4
      %s183 = scalar_lea.vmem %s0, %s182
      %s184 = smul.u32 32, %s19
      %p185 = scmp.lt.s32.totalorder %s18, 1
      %s186 = scalar_select %p185, %s18, 1
      %p187 = scmp.lt.s32.totalorder %s184, 31
      %s188 = scalar_select %p187, %s184, 31
      %s189 = smul.addr %s186, 32
      %s190 = sadd.s32 %s188, %s189
      %s191 = smul.addr %s190, 4
      %s192 = scalar_lea.vmem %s3, %s191
      %s193 = smul.u32 32, %s19
      %s195 = smul.u32 %s19, 16
      %s196 = smul.u32 %s195, 3
      %s197 = smul.addr %s196, 4
      %s198 = scalar_lea.vmem %s183, %s197
      %v199 = vld [vmem:[%s198] sm:$0xf]
      %v200 = vld [vmem:[%s198 + $0x4] sm:$0xf]
      %v201 = vld [vmem:[%s198 + $0xc] sm:$0xf]
      %v202 = vld [vmem:[%s198 + $0x10] sm:$0xf]
      %v203 = vld [vmem:[%s198 + $0x18] sm:$0xf]
      %v204 = vld [vmem:[%s198 + $0x1c] sm:$0xf]
      %v205 = vld [vmem:[%s198 + $0x24] sm:$0xf]
      %v206 = vld [vmem:[%s198 + $0x28] sm:$0xf]
      %v207 = vld [vmem:[%s198 + $0x30] sm:$0xf]
      %v208 = vld [vmem:[%s198 + $0x34] sm:$0xf]
      %v209 = vld [vmem:[%s198 + $0x3c] sm:$0xf]
      %v210 = vld [vmem:[%s198 + $0x40] sm:$0xf]
      %v211 = vld [vmem:[%s198 + $0x48] sm:$0xf]
      %v212 = vld [vmem:[%s198 + $0x4c] sm:$0xf]
      %v213 = vld [vmem:[%s198 + $0x54] sm:$0xf]
      %v214 = vld [vmem:[%s198 + $0x58] sm:$0xf]
      %v215 = vld [vmem:[%s198 + $0x60] sm:$0xf]
      %v216 = vld [vmem:[%s198 + $0x64] sm:$0xf]
      %v217 = vld [vmem:[%s198 + $0x6c] sm:$0xf]
      %v218 = vld [vmem:[%s198 + $0x70] sm:$0xf]
      %v219 = vld [vmem:[%s198 + $0x78] sm:$0xf]
      %v220 = vld [vmem:[%s198 + $0x7c] sm:$0xf]
      %v221 = vld [vmem:[%s198 + $0x84] sm:$0xf]
      %v222 = vld [vmem:[%s198 + $0x88] sm:$0xf]
      %v223 = vld [vmem:[%s198 + $0x90] sm:$0xf]
      %v224 = vld [vmem:[%s198 + $0x94] sm:$0xf]
      %v225 = vld [vmem:[%s198 + $0x9c] sm:$0xf]
      %v226 = vld [vmem:[%s198 + $0xa0] sm:$0xf]
      %v227 = vld [vmem:[%s198 + $0xa8] sm:$0xf]
      %v228 = vld [vmem:[%s198 + $0xac] sm:$0xf]
      %v229 = vld [vmem:[%s198 + $0xb4] sm:$0xf]
      %v230 = vld [vmem:[%s198 + $0xb8] sm:$0xf]
      %vm231 = vcmask 60416
      %232 = vst.msk [vmem:[#allocation2] sm:$0xf] %vm231, %v199
      %233 = vst.msk [vmem:[#allocation2 + $0x4] sm:$0xf] %vm231, %v200
      %234 = vst.msk [vmem:[#allocation2 + $0x8] sm:$0xf] %vm231, %v201
      %235 = vst.msk [vmem:[#allocation2 + $0xc] sm:$0xf] %vm231, %v202
      %236 = vst.msk [vmem:[#allocation2 + $0x10] sm:$0xf] %vm231, %v203
      %237 = vst.msk [vmem:[#allocation2 + $0x14] sm:$0xf] %vm231, %v204
      %238 = vst.msk [vmem:[#allocation2 + $0x18] sm:$0xf] %vm231, %v205
      %239 = vst.msk [vmem:[#allocation2 + $0x1c] sm:$0xf] %vm231, %v206
      %240 = vst.msk [vmem:[#allocation2 + $0x20] sm:$0xf] %vm231, %v207
      %241 = vst.msk [vmem:[#allocation2 + $0x24] sm:$0xf] %vm231, %v208
      %242 = vst.msk [vmem:[#allocation2 + $0x28] sm:$0xf] %vm231, %v209
      %243 = vst.msk [vmem:[#allocation2 + $0x2c] sm:$0xf] %vm231, %v210
      %244 = vst.msk [vmem:[#allocation2 + $0x30] sm:$0xf] %vm231, %v211
      %245 = vst.msk [vmem:[#allocation2 + $0x34] sm:$0xf] %vm231, %v212
      %246 = vst.msk [vmem:[#allocation2 + $0x38] sm:$0xf] %vm231, %v213
      %247 = vst.msk [vmem:[#allocation2 + $0x3c] sm:$0xf] %vm231, %v214
      %248 = vst.msk [vmem:[#allocation2 + $0x40] sm:$0xf] %vm231, %v215
      %249 = vst.msk [vmem:[#allocation2 + $0x44] sm:$0xf] %vm231, %v216
      %250 = vst.msk [vmem:[#allocation2 + $0x48] sm:$0xf] %vm231, %v217
      %251 = vst.msk [vmem:[#allocation2 + $0x4c] sm:$0xf] %vm231, %v218
      %252 = vst.msk [vmem:[#allocation2 + $0x50] sm:$0xf] %vm231, %v219
      %253 = vst.msk [vmem:[#allocation2 + $0x54] sm:$0xf] %vm231, %v220
      %254 = vst.msk [vmem:[#allocation2 + $0x58] sm:$0xf] %vm231, %v221
      %255 = vst.msk [vmem:[#allocation2 + $0x5c] sm:$0xf] %vm231, %v222
      %256 = vst.msk [vmem:[#allocation2 + $0x60] sm:$0xf] %vm231, %v223
      %257 = vst.msk [vmem:[#allocation2 + $0x64] sm:$0xf] %vm231, %v224
      %258 = vst.msk [vmem:[#allocation2 + $0x68] sm:$0xf] %vm231, %v225
      %259 = vst.msk [vmem:[#allocation2 + $0x6c] sm:$0xf] %vm231, %v226
      %260 = vst.msk [vmem:[#allocation2 + $0x70] sm:$0xf] %vm231, %v227
      %261 = vst.msk [vmem:[#allocation2 + $0x74] sm:$0xf] %vm231, %v228
      %262 = vst.msk [vmem:[#allocation2 + $0x78] sm:$0xf] %vm231, %v229
      %263 = vst.msk [vmem:[#allocation2 + $0x7c] sm:$0xf] %vm231, %v230
      %v264 = vld [vmem:[%s198] sm:$0xf]
      %v265 = vld [vmem:[%s198 + $0x4] sm:$0xf]
      %v266 = vld [vmem:[%s198 + $0x8] sm:$0x1]
      %v267 = vld [vmem:[%s198 + $0xc] sm:$0xf]
      %v268 = vld [vmem:[%s198 + $0x10] sm:$0xf]
      %v269 = vld [vmem:[%s198 + $0x14] sm:$0x1]
      %v270 = vld [vmem:[%s198 + $0x18] sm:$0xf]
      %v271 = vld [vmem:[%s198 + $0x1c] sm:$0xf]
      %v272 = vld [vmem:[%s198 + $0x20] sm:$0x1]
      %v273 = vld [vmem:[%s198 + $0x24] sm:$0xf]
      %v274 = vld [vmem:[%s198 + $0x28] sm:$0xf]
      %v275 = vld [vmem:[%s198 + $0x2c] sm:$0x1]
      %v276 = vld [vmem:[%s198 + $0x30] sm:$0xf]
      %v277 = vld [vmem:[%s198 + $0x34] sm:$0xf]
      %v278 = vld [vmem:[%s198 + $0x38] sm:$0x1]
      %v279 = vld [vmem:[%s198 + $0x3c] sm:$0xf]
      %v280 = vld [vmem:[%s198 + $0x40] sm:$0xf]
      %v281 = vld [vmem:[%s198 + $0x44] sm:$0x1]
      %v282 = vld [vmem:[%s198 + $0x48] sm:$0xf]
      %v283 = vld [vmem:[%s198 + $0x4c] sm:$0xf]
      %v284 = vld [vmem:[%s198 + $0x50] sm:$0x1]
      %v285 = vld [vmem:[%s198 + $0x54] sm:$0xf]
      %v286 = vld [vmem:[%s198 + $0x58] sm:$0xf]
      %v287 = vld [vmem:[%s198 + $0x5c] sm:$0x1]
      %v288 = vld [vmem:[%s198 + $0x60] sm:$0xf]
      %v289 = vld [vmem:[%s198 + $0x64] sm:$0xf]
      %v290 = vld [vmem:[%s198 + $0x68] sm:$0x1]
      %v291 = vld [vmem:[%s198 + $0x6c] sm:$0xf]
      %v292 = vld [vmem:[%s198 + $0x70] sm:$0xf]
      %v293 = vld [vmem:[%s198 + $0x74] sm:$0x1]
      %v294 = vld [vmem:[%s198 + $0x78] sm:$0xf]
      %v295 = vld [vmem:[%s198 + $0x7c] sm:$0xf]
      %v296 = vld [vmem:[%s198 + $0x80] sm:$0x1]
      %v297 = vld [vmem:[%s198 + $0x84] sm:$0xf]
      %v298 = vld [vmem:[%s198 + $0x88] sm:$0xf]
      %v299 = vld [vmem:[%s198 + $0x8c] sm:$0x1]
      %v300 = vld [vmem:[%s198 + $0x90] sm:$0xf]
      %v301 = vld [vmem:[%s198 + $0x94] sm:$0xf]
      %v302 = vld [vmem:[%s198 + $0x98] sm:$0x1]
      %v303 = vld [vmem:[%s198 + $0x9c] sm:$0xf]
      %v304 = vld [vmem:[%s198 + $0xa0] sm:$0xf]
      %v305 = vld [vmem:[%s198 + $0xa4] sm:$0x1]
      %v306 = vld [vmem:[%s198 + $0xa8] sm:$0xf]
      %v307 = vld [vmem:[%s198 + $0xac] sm:$0xf]
      %v308 = vld [vmem:[%s198 + $0xb0] sm:$0x1]
      %v309 = vld [vmem:[%s198 + $0xb4] sm:$0xf]
      %v310 = vld [vmem:[%s198 + $0xb8] sm:$0xf]
      %v311 = vld [vmem:[%s198 + $0xbc] sm:$0x1]
      %vm312 = vsmask.f32 3328
      %vm313 = vsmask.f32 7440
      %vm314 = vmor %vm312, %vm313
      %v316 = vshrl.u32 %v264, 16
      %v318 = vrot.slane %v316, 4
      %v319 = vshll.u32 %v264, 16
      %v321 = vrot.slane %v319, 5
      %v322 = vor.u32 %v318, %v321
      %v323 = vrot.slane %v322, 4
      %v325 = vshll.u32 %v265, 16
      %v327 = vrot.slane %v325, 5
      %v328 = vsel %vm314, %v323, %v327
      %v329 = vshrl.u32 %v265, 16
      %v331 = vrot.slane %v329, 4
      %v332 = vor.u32 %v331, %v327
      %v333 = vrot.slane %v332, 4
      %v335 = vshll.u32 %v266, 16
      %v337 = vrot.slane %v335, 5
      %v338 = vsel %vm314, %v333, %v337
      %v340 = vshrl.u32 %v267, 16
      %v342 = vrot.slane %v340, 4
      %v343 = vshll.u32 %v267, 16
      %v345 = vrot.slane %v343, 5
      %v346 = vor.u32 %v342, %v345
      %v347 = vrot.slane %v346, 4
      %v349 = vshll.u32 %v268, 16
      %v351 = vrot.slane %v349, 5
      %v352 = vsel %vm314, %v347, %v351
      %v353 = vshrl.u32 %v268, 16
      %v355 = vrot.slane %v353, 4
      %v356 = vor.u32 %v355, %v351
      %v357 = vrot.slane %v356, 4
      %v359 = vshll.u32 %v269, 16
      %v361 = vrot.slane %v359, 5
      %v362 = vsel %vm314, %v357, %v361
      %v364 = vshrl.u32 %v270, 16
      %v366 = vrot.slane %v364, 4
      %v367 = vshll.u32 %v270, 16
      %v369 = vrot.slane %v367, 5
      %v370 = vor.u32 %v366, %v369
      %v371 = vrot.slane %v370, 4
      %v373 = vshll.u32 %v271, 16
      %v375 = vrot.slane %v373, 5
      %v376 = vsel %vm314, %v371, %v375
      %v377 = vshrl.u32 %v271, 16
      %v379 = vrot.slane %v377, 4
      %v380 = vor.u32 %v379, %v375
      %v381 = vrot.slane %v380, 4
      %v383 = vshll.u32 %v272, 16
      %v385 = vrot.slane %v383, 5
      %v386 = vsel %vm314, %v381, %v385
      %v388 = vshrl.u32 %v273, 16
      %v390 = vrot.slane %v388, 4
      %v391 = vshll.u32 %v273, 16
      %v393 = vrot.slane %v391, 5
      %v394 = vor.u32 %v390, %v393
      %v395 = vrot.slane %v394, 4
      %v397 = vshll.u32 %v274, 16
      %v399 = vrot.slane %v397, 5
      %v400 = vsel %vm314, %v395, %v399
      %v401 = vshrl.u32 %v274, 16
      %v403 = vrot.slane %v401, 4
      %v404 = vor.u32 %v403, %v399
      %v405 = vrot.slane %v404, 4
      %v407 = vshll.u32 %v275, 16
      %v409 = vrot.slane %v407, 5
      %v410 = vsel %vm314, %v405, %v409
      %v412 = vshrl.u32 %v276, 16
      %v414 = vrot.slane %v412, 4
      %v415 = vshll.u32 %v276, 16
      %v417 = vrot.slane %v415, 5
      %v418 = vor.u32 %v414, %v417
      %v419 = vrot.slane %v418, 4
      %v421 = vshll.u32 %v277, 16
      %v423 = vrot.slane %v421, 5
      %v424 = vsel %vm314, %v419, %v423
      %v425 = vshrl.u32 %v277, 16
      %v427 = vrot.slane %v425, 4
      %v428 = vor.u32 %v427, %v423
      %v429 = vrot.slane %v428, 4
      %v431 = vshll.u32 %v278, 16
      %v433 = vrot.slane %v431, 5
      %v434 = vsel %vm314, %v429, %v433
      %v436 = vshrl.u32 %v279, 16
      %v438 = vrot.slane %v436, 4
      %v439 = vshll.u32 %v279, 16
      %v441 = vrot.slane %v439, 5
      %v442 = vor.u32 %v438, %v441
      %v443 = vrot.slane %v442, 4
      %v445 = vshll.u32 %v280, 16
      %v447 = vrot.slane %v445, 5
      %v448 = vsel %vm314, %v443, %v447
      %v449 = vshrl.u32 %v280, 16
      %v451 = vrot.slane %v449, 4
      %v452 = vor.u32 %v451, %v447
      %v453 = vrot.slane %v452, 4
      %v455 = vshll.u32 %v281, 16
      %v457 = vrot.slane %v455, 5
      %v458 = vsel %vm314, %v453, %v457
      %v460 = vshrl.u32 %v282, 16
      %v462 = vrot.slane %v460, 4
      %v463 = vshll.u32 %v282, 16
      %v465 = vrot.slane %v463, 5
      %v466 = vor.u32 %v462, %v465
      %v467 = vrot.slane %v466, 4
      %v469 = vshll.u32 %v283, 16
      %v471 = vrot.slane %v469, 5
      %v472 = vsel %vm314, %v467, %v471
      %v473 = vshrl.u32 %v283, 16
      %v475 = vrot.slane %v473, 4
      %v476 = vor.u32 %v475, %v471
      %v477 = vrot.slane %v476, 4
      %v479 = vshll.u32 %v284, 16
      %v481 = vrot.slane %v479, 5
      %v482 = vsel %vm314, %v477, %v481
      %v484 = vshrl.u32 %v285, 16
      %v486 = vrot.slane %v484, 4
      %v487 = vshll.u32 %v285, 16
      %v489 = vrot.slane %v487, 5
      %v490 = vor.u32 %v486, %v489
      %v491 = vrot.slane %v490, 4
      %v493 = vshll.u32 %v286, 16
      %v495 = vrot.slane %v493, 5
      %v496 = vsel %vm314, %v491, %v495
      %v497 = vshrl.u32 %v286, 16
      %v499 = vrot.slane %v497, 4
      %v500 = vor.u32 %v499, %v495
      %v501 = vrot.slane %v500, 4
      %v503 = vshll.u32 %v287, 16
      %v505 = vrot.slane %v503, 5
      %v506 = vsel %vm314, %v501, %v505
      %v508 = vshrl.u32 %v288, 16
      %v510 = vrot.slane %v508, 4
      %v511 = vshll.u32 %v288, 16
      %v513 = vrot.slane %v511, 5
      %v514 = vor.u32 %v510, %v513
      %v515 = vrot.slane %v514, 4
      %v517 = vshll.u32 %v289, 16
      %v519 = vrot.slane %v517, 5
      %v520 = vsel %vm314, %v515, %v519
      %v521 = vshrl.u32 %v289, 16
      %v523 = vrot.slane %v521, 4
      %v524 = vor.u32 %v523, %v519
      %v525 = vrot.slane %v524, 4
      %v527 = vshll.u32 %v290, 16
      %v529 = vrot.slane %v527, 5
      %v530 = vsel %vm314, %v525, %v529
      %v532 = vshrl.u32 %v291, 16
      %v534 = vrot.slane %v532, 4
      %v535 = vshll.u32 %v291, 16
      %v537 = vrot.slane %v535, 5
      %v538 = vor.u32 %v534, %v537
      %v539 = vrot.slane %v538, 4
      %v541 = vshll.u32 %v292, 16
      %v543 = vrot.slane %v541, 5
      %v544 = vsel %vm314, %v539, %v543
      %v545 = vshrl.u32 %v292, 16
      %v547 = vrot.slane %v545, 4
      %v548 = vor.u32 %v547, %v543
      %v549 = vrot.slane %v548, 4
      %v551 = vshll.u32 %v293, 16
      %v553 = vrot.slane %v551, 5
      %v554 = vsel %vm314, %v549, %v553
      %v556 = vshrl.u32 %v294, 16
      %v558 = vrot.slane %v556, 4
      %v559 = vshll.u32 %v294, 16
      %v561 = vrot.slane %v559, 5
      %v562 = vor.u32 %v558, %v561
      %v563 = vrot.slane %v562, 4
      %v565 = vshll.u32 %v295, 16
      %v567 = vrot.slane %v565, 5
      %v568 = vsel %vm314, %v563, %v567
      %v569 = vshrl.u32 %v295, 16
      %v571 = vrot.slane %v569, 4
      %v572 = vor.u32 %v571, %v567
      %v573 = vrot.slane %v572, 4
      %v575 = vshll.u32 %v296, 16
      %v577 = vrot.slane %v575, 5
      %v578 = vsel %vm314, %v573, %v577
      %v580 = vshrl.u32 %v297, 16
      %v582 = vrot.slane %v580, 4
      %v583 = vshll.u32 %v297, 16
      %v585 = vrot.slane %v583, 5
      %v586 = vor.u32 %v582, %v585
      %v587 = vrot.slane %v586, 4
      %v589 = vshll.u32 %v298, 16
      %v591 = vrot.slane %v589, 5
      %v592 = vsel %vm314, %v587, %v591
      %v593 = vshrl.u32 %v298, 16
      %v595 = vrot.slane %v593, 4
      %v596 = vor.u32 %v595, %v591
      %v597 = vrot.slane %v596, 4
      %v599 = vshll.u32 %v299, 16
      %v601 = vrot.slane %v599, 5
      %v602 = vsel %vm314, %v597, %v601
      %v604 = vshrl.u32 %v300, 16
      %v606 = vrot.slane %v604, 4
      %v607 = vshll.u32 %v300, 16
      %v609 = vrot.slane %v607, 5
      %v610 = vor.u32 %v606, %v609
      %v611 = vrot.slane %v610, 4
      %v613 = vshll.u32 %v301, 16
      %v615 = vrot.slane %v613, 5
      %v616 = vsel %vm314, %v611, %v615
      %v617 = vshrl.u32 %v301, 16
      %v619 = vrot.slane %v617, 4
      %v620 = vor.u32 %v619, %v615
      %v621 = vrot.slane %v620, 4
      %v623 = vshll.u32 %v302, 16
      %v625 = vrot.slane %v623, 5
      %v626 = vsel %vm314, %v621, %v625
      %v628 = vshrl.u32 %v303, 16
      %v630 = vrot.slane %v628, 4
      %v631 = vshll.u32 %v303, 16
      %v633 = vrot.slane %v631, 5
      %v634 = vor.u32 %v630, %v633
      %v635 = vrot.slane %v634, 4
      %v637 = vshll.u32 %v304, 16
      %v639 = vrot.slane %v637, 5
      %v640 = vsel %vm314, %v635, %v639
      %v641 = vshrl.u32 %v304, 16
      %v643 = vrot.slane %v641, 4
      %v644 = vor.u32 %v643, %v639
      %v645 = vrot.slane %v644, 4
      %v647 = vshll.u32 %v305, 16
      %v649 = vrot.slane %v647, 5
      %v650 = vsel %vm314, %v645, %v649
      %v652 = vshrl.u32 %v306, 16
      %v654 = vrot.slane %v652, 4
      %v655 = vshll.u32 %v306, 16
      %v657 = vrot.slane %v655, 5
      %v658 = vor.u32 %v654, %v657
      %v659 = vrot.slane %v658, 4
      %v661 = vshll.u32 %v307, 16
      %v663 = vrot.slane %v661, 5
      %v664 = vsel %vm314, %v659, %v663
      %v665 = vshrl.u32 %v307, 16
      %v667 = vrot.slane %v665, 4
      %v668 = vor.u32 %v667, %v663
      %v669 = vrot.slane %v668, 4
      %v671 = vshll.u32 %v308, 16
      %v673 = vrot.slane %v671, 5
      %v674 = vsel %vm314, %v669, %v673
      %v676 = vshrl.u32 %v309, 16
      %v678 = vrot.slane %v676, 4
      %v679 = vshll.u32 %v309, 16
      %v681 = vrot.slane %v679, 5
      %v682 = vor.u32 %v678, %v681
      %v683 = vrot.slane %v682, 4
      %v685 = vshll.u32 %v310, 16
      %v687 = vrot.slane %v685, 5
      %v688 = vsel %vm314, %v683, %v687
      %v689 = vshrl.u32 %v310, 16
      %v691 = vrot.slane %v689, 4
      %v692 = vor.u32 %v691, %v687
      %v693 = vrot.slane %v692, 4
      %v695 = vshll.u32 %v311, 16
      %v697 = vrot.slane %v695, 5
      %v698 = vsel %vm314, %v693, %v697
      %699 = vrot.lane.b32.xlu0 %v328, 8
      %v700 = vpop.permute.xlu0 %699
      %701 = vrot.lane.b32.xlu0 %v338, 8
      %v702 = vpop.permute.xlu0 %701
      %703 = vrot.lane.b32.xlu0 %v352, 8
      %v704 = vpop.permute.xlu0 %703
      %705 = vrot.lane.b32.xlu0 %v362, 8
      %v706 = vpop.permute.xlu0 %705
      %707 = vrot.lane.b32.xlu0 %v376, 8
      %v708 = vpop.permute.xlu0 %707
      %709 = vrot.lane.b32.xlu0 %v386, 8
      %v710 = vpop.permute.xlu0 %709
      %711 = vrot.lane.b32.xlu0 %v400, 8
      %v712 = vpop.permute.xlu0 %711
      %713 = vrot.lane.b32.xlu0 %v410, 8
      %v714 = vpop.permute.xlu0 %713
      %715 = vrot.lane.b32.xlu0 %v424, 8
      %v716 = vpop.permute.xlu0 %715
      %717 = vrot.lane.b32.xlu0 %v434, 8
      %v718 = vpop.permute.xlu0 %717
      %719 = vrot.lane.b32.xlu0 %v448, 8
      %v720 = vpop.permute.xlu0 %719
      %721 = vrot.lane.b32.xlu0 %v458, 8
      %v722 = vpop.permute.xlu0 %721
      %723 = vrot.lane.b32.xlu0 %v472, 8
      %v724 = vpop.permute.xlu0 %723
      %725 = vrot.lane.b32.xlu0 %v482, 8
      %v726 = vpop.permute.xlu0 %725
      %727 = vrot.lane.b32.xlu0 %v496, 8
      %v728 = vpop.permute.xlu0 %727
      %729 = vrot.lane.b32.xlu0 %v506, 8
      %v730 = vpop.permute.xlu0 %729
      %731 = vrot.lane.b32.xlu0 %v520, 8
      %v732 = vpop.permute.xlu0 %731
      %733 = vrot.lane.b32.xlu0 %v530, 8
      %v734 = vpop.permute.xlu0 %733
      %735 = vrot.lane.b32.xlu0 %v544, 8
      %v736 = vpop.permute.xlu0 %735
      %737 = vrot.lane.b32.xlu0 %v554, 8
      %v738 = vpop.permute.xlu0 %737
      %739 = vrot.lane.b32.xlu0 %v568, 8
      %v740 = vpop.permute.xlu0 %739
      %741 = vrot.lane.b32.xlu0 %v578, 8
      %v742 = vpop.permute.xlu0 %741
      %743 = vrot.lane.b32.xlu0 %v592, 8
      %v744 = vpop.permute.xlu0 %743
      %745 = vrot.lane.b32.xlu0 %v602, 8
      %v746 = vpop.permute.xlu0 %745
      %747 = vrot.lane.b32.xlu0 %v616, 8
      %v748 = vpop.permute.xlu0 %747
      %749 = vrot.lane.b32.xlu0 %v626, 8
      %v750 = vpop.permute.xlu0 %749
      %751 = vrot.lane.b32.xlu0 %v640, 8
      %v752 = vpop.permute.xlu0 %751
      %753 = vrot.lane.b32.xlu0 %v650, 8
      %v754 = vpop.permute.xlu0 %753
      %755 = vrot.lane.b32.xlu0 %v664, 8
      %v756 = vpop.permute.xlu0 %755
      %757 = vrot.lane.b32.xlu0 %v674, 8
      %v758 = vpop.permute.xlu0 %757
      %759 = vrot.lane.b32.xlu0 %v688, 8
      %v760 = vpop.permute.xlu0 %759
      %761 = vrot.lane.b32.xlu0 %v698, 8
      %v762 = vpop.permute.xlu0 %761
      %vm795 = vcmask 126016
      %796 = vst.msk [vmem:[#allocation2] sm:$0xf] %vm795, %v700
      %797 = vst.msk [vmem:[#allocation2 + $0x4] sm:$0xf] %vm795, %v702
      %798 = vst.msk [vmem:[#allocation2 + $0x8] sm:$0xf] %vm795, %v704
      %799 = vst.msk [vmem:[#allocation2 + $0xc] sm:$0xf] %vm795, %v706
      %800 = vst.msk [vmem:[#allocation2 + $0x10] sm:$0xf] %vm795, %v708
      %801 = vst.msk [vmem:[#allocation2 + $0x14] sm:$0xf] %vm795, %v710
      %802 = vst.msk [vmem:[#allocation2 + $0x18] sm:$0xf] %vm795, %v712
      %803 = vst.msk [vmem:[#allocation2 + $0x1c] sm:$0xf] %vm795, %v714
      %804 = vst.msk [vmem:[#allocation2 + $0x20] sm:$0xf] %vm795, %v716
      %805 = vst.msk [vmem:[#allocation2 + $0x24] sm:$0xf] %vm795, %v718
      %806 = vst.msk [vmem:[#allocation2 + $0x28] sm:$0xf] %vm795, %v720
      %807 = vst.msk [vmem:[#allocation2 + $0x2c] sm:$0xf] %vm795, %v722
      %808 = vst.msk [vmem:[#allocation2 + $0x30] sm:$0xf] %vm795, %v724
      %809 = vst.msk [vmem:[#allocation2 + $0x34] sm:$0xf] %vm795, %v726
      %810 = vst.msk [vmem:[#allocation2 + $0x38] sm:$0xf] %vm795, %v728
      %811 = vst.msk [vmem:[#allocation2 + $0x3c] sm:$0xf] %vm795, %v730
      %812 = vst.msk [vmem:[#allocation2 + $0x40] sm:$0xf] %vm795, %v732
      %813 = vst.msk [vmem:[#allocation2 + $0x44] sm:$0xf] %vm795, %v734
      %814 = vst.msk [vmem:[#allocation2 + $0x48] sm:$0xf] %vm795, %v736
      %815 = vst.msk [vmem:[#allocation2 + $0x4c] sm:$0xf] %vm795, %v738
      %816 = vst.msk [vmem:[#allocation2 + $0x50] sm:$0xf] %vm795, %v740
      %817 = vst.msk [vmem:[#allocation2 + $0x54] sm:$0xf] %vm795, %v742
      %818 = vst.msk [vmem:[#allocation2 + $0x58] sm:$0xf] %vm795, %v744
      %819 = vst.msk [vmem:[#allocation2 + $0x5c] sm:$0xf] %vm795, %v746
      %820 = vst.msk [vmem:[#allocation2 + $0x60] sm:$0xf] %vm795, %v748
      %821 = vst.msk [vmem:[#allocation2 + $0x64] sm:$0xf] %vm795, %v750
      %822 = vst.msk [vmem:[#allocation2 + $0x68] sm:$0xf] %vm795, %v752
      %823 = vst.msk [vmem:[#allocation2 + $0x6c] sm:$0xf] %vm795, %v754
      %824 = vst.msk [vmem:[#allocation2 + $0x70] sm:$0xf] %vm795, %v756
      %825 = vst.msk [vmem:[#allocation2 + $0x74] sm:$0xf] %vm795, %v758
      %826 = vst.msk [vmem:[#allocation2 + $0x78] sm:$0xf] %vm795, %v760
      %827 = vst.msk [vmem:[#allocation2 + $0x7c] sm:$0xf] %vm795, %v762
      %v828 = vld [vmem:[%s198] sm:$0xe]
      %v829 = vld [vmem:[%s198 + $0x4] sm:$0xf]
      %v830 = vld [vmem:[%s198 + $0x8] sm:$0x1]
      %v831 = vld [vmem:[%s198 + $0xc] sm:$0xe]
      %v832 = vld [vmem:[%s198 + $0x10] sm:$0xf]
      %v833 = vld [vmem:[%s198 + $0x14] sm:$0x1]
      %v834 = vld [vmem:[%s198 + $0x18] sm:$0xe]
      %v835 = vld [vmem:[%s198 + $0x1c] sm:$0xf]
      %v836 = vld [vmem:[%s198 + $0x20] sm:$0x1]
      %v837 = vld [vmem:[%s198 + $0x24] sm:$0xe]
      %v838 = vld [vmem:[%s198 + $0x28] sm:$0xf]
      %v839 = vld [vmem:[%s198 + $0x2c] sm:$0x1]
      %v840 = vld [vmem:[%s198 + $0x30] sm:$0xe]
      %v841 = vld [vmem:[%s198 + $0x34] sm:$0xf]
      %v842 = vld [vmem:[%s198 + $0x38] sm:$0x1]
      %v843 = vld [vmem:[%s198 + $0x3c] sm:$0xe]
      %v844 = vld [vmem:[%s198 + $0x40] sm:$0xf]
      %v845 = vld [vmem:[%s198 + $0x44] sm:$0x1]
      %v846 = vld [vmem:[%s198 + $0x48] sm:$0xe]
      %v847 = vld [vmem:[%s198 + $0x4c] sm:$0xf]
      %v848 = vld [vmem:[%s198 + $0x50] sm:$0x1]
      %v849 = vld [vmem:[%s198 + $0x54] sm:$0xe]
      %v850 = vld [vmem:[%s198 + $0x58] sm:$0xf]
      %v851 = vld [vmem:[%s198 + $0x5c] sm:$0x1]
      %v852 = vld [vmem:[%s198 + $0x60] sm:$0xe]
      %v853 = vld [vmem:[%s198 + $0x64] sm:$0xf]
      %v854 = vld [vmem:[%s198 + $0x68] sm:$0x1]
      %v855 = vld [vmem:[%s198 + $0x6c] sm:$0xe]
      %v856 = vld [vmem:[%s198 + $0x70] sm:$0xf]
      %v857 = vld [vmem:[%s198 + $0x74] sm:$0x1]
      %v858 = vld [vmem:[%s198 + $0x78] sm:$0xe]
      %v859 = vld [vmem:[%s198 + $0x7c] sm:$0xf]
      %v860 = vld [vmem:[%s198 + $0x80] sm:$0x1]
      %v861 = vld [vmem:[%s198 + $0x84] sm:$0xe]
      %v862 = vld [vmem:[%s198 + $0x88] sm:$0xf]
      %v863 = vld [vmem:[%s198 + $0x8c] sm:$0x1]
      %v864 = vld [vmem:[%s198 + $0x90] sm:$0xe]
      %v865 = vld [vmem:[%s198 + $0x94] sm:$0xf]
      %v866 = vld [vmem:[%s198 + $0x98] sm:$0x1]
      %v867 = vld [vmem:[%s198 + $0x9c] sm:$0xe]
      %v868 = vld [vmem:[%s198 + $0xa0] sm:$0xf]
      %v869 = vld [vmem:[%s198 + $0xa4] sm:$0x1]
      %v870 = vld [vmem:[%s198 + $0xa8] sm:$0xe]
      %v871 = vld [vmem:[%s198 + $0xac] sm:$0xf]
      %v872 = vld [vmem:[%s198 + $0xb0] sm:$0x1]
      %v873 = vld [vmem:[%s198 + $0xb4] sm:$0xe]
      %v874 = vld [vmem:[%s198 + $0xb8] sm:$0xf]
      %v875 = vld [vmem:[%s198 + $0xbc] sm:$0x1]
      %vm924 = vcmask 1042432
      %vm925 = vcmask 1046532
      %vm926 = vmor %vm924, %vm925
      %v927 = vrot.slane %v828, 5
      %v928 = vrot.slane %v927, 4
      %v929 = vrot.slane %v829, 5
      %v930 = vsel %vm926, %v928, %v929
      %v931 = vrot.slane %v929, 4
      %v932 = vrot.slane %v830, 5
      %v933 = vsel %vm926, %v931, %v932
      %v934 = vrot.slane %v831, 5
      %v935 = vrot.slane %v934, 4
      %v936 = vrot.slane %v832, 5
      %v937 = vsel %vm926, %v935, %v936
      %v938 = vrot.slane %v936, 4
      %v939 = vrot.slane %v833, 5
      %v940 = vsel %vm926, %v938, %v939
      %v941 = vrot.slane %v834, 5
      %v942 = vrot.slane %v941, 4
      %v943 = vrot.slane %v835, 5
      %v944 = vsel %vm926, %v942, %v943
      %v945 = vrot.slane %v943, 4
      %v946 = vrot.slane %v836, 5
      %v947 = vsel %vm926, %v945, %v946
      %v948 = vrot.slane %v837, 5
      %v949 = vrot.slane %v948, 4
      %v950 = vrot.slane %v838, 5
      %v951 = vsel %vm926, %v949, %v950
      %v952 = vrot.slane %v950, 4
      %v953 = vrot.slane %v839, 5
      %v954 = vsel %vm926, %v952, %v953
      %v955 = vrot.slane %v840, 5
      %v956 = vrot.slane %v955, 4
      %v957 = vrot.slane %v841, 5
      %v958 = vsel %vm926, %v956, %v957
      %v959 = vrot.slane %v957, 4
      %v960 = vrot.slane %v842, 5
      %v961 = vsel %vm926, %v959, %v960
      %v962 = vrot.slane %v843, 5
      %v963 = vrot.slane %v962, 4
      %v964 = vrot.slane %v844, 5
      %v965 = vsel %vm926, %v963, %v964
      %v966 = vrot.slane %v964, 4
      %v967 = vrot.slane %v845, 5
      %v968 = vsel %vm926, %v966, %v967
      %v969 = vrot.slane %v846, 5
      %v970 = vrot.slane %v969, 4
      %v971 = vrot.slane %v847, 5
      %v972 = vsel %vm926, %v970, %v971
      %v973 = vrot.slane %v971, 4
      %v974 = vrot.slane %v848, 5
      %v975 = vsel %vm926, %v973, %v974
      %v976 = vrot.slane %v849, 5
      %v977 = vrot.slane %v976, 4
      %v978 = vrot.slane %v850, 5
      %v979 = vsel %vm926, %v977, %v978
      %v980 = vrot.slane %v978, 4
      %v981 = vrot.slane %v851, 5
      %v982 = vsel %vm926, %v980, %v981
      %v983 = vrot.slane %v852, 5
      %v984 = vrot.slane %v983, 4
      %v985 = vrot.slane %v853, 5
      %v986 = vsel %vm926, %v984, %v985
      %v987 = vrot.slane %v985, 4
      %v988 = vrot.slane %v854, 5
      %v989 = vsel %vm926, %v987, %v988
      %v990 = vrot.slane %v855, 5
      %v991 = vrot.slane %v990, 4
      %v992 = vrot.slane %v856, 5
      %v993 = vsel %vm926, %v991, %v992
      %v994 = vrot.slane %v992, 4
      %v995 = vrot.slane %v857, 5
      %v996 = vsel %vm926, %v994, %v995
      %v997 = vrot.slane %v858, 5
      %v998 = vrot.slane %v997, 4
      %v999 = vrot.slane %v859, 5
      %v1000 = vsel %vm926, %v998, %v999
      %v1001 = vrot.slane %v999, 4
      %v1002 = vrot.slane %v860, 5
      %v1003 = vsel %vm926, %v1001, %v1002
      %v1004 = vrot.slane %v861, 5
      %v1005 = vrot.slane %v1004, 4
      %v1006 = vrot.slane %v862, 5
      %v1007 = vsel %vm926, %v1005, %v1006
      %v1008 = vrot.slane %v1006, 4
      %v1009 = vrot.slane %v863, 5
      %v1010 = vsel %vm926, %v1008, %v1009
      %v1011 = vrot.slane %v864, 5
      %v1012 = vrot.slane %v1011, 4
      %v1013 = vrot.slane %v865, 5
      %v1014 = vsel %vm926, %v1012, %v1013
      %v1015 = vrot.slane %v1013, 4
      %v1016 = vrot.slane %v866, 5
      %v1017 = vsel %vm926, %v1015, %v1016
      %v1018 = vrot.slane %v867, 5
      %v1019 = vrot.slane %v1018, 4
      %v1020 = vrot.slane %v868, 5
      %v1021 = vsel %vm926, %v1019, %v1020
      %v1022 = vrot.slane %v1020, 4
      %v1023 = vrot.slane %v869, 5
      %v1024 = vsel %vm926, %v1022, %v1023
      %v1025 = vrot.slane %v870, 5
      %v1026 = vrot.slane %v1025, 4
      %v1027 = vrot.slane %v871, 5
      %v1028 = vsel %vm926, %v1026, %v1027
      %v1029 = vrot.slane %v1027, 4
      %v1030 = vrot.slane %v872, 5
      %v1031 = vsel %vm926, %v1029, %v1030
      %v1032 = vrot.slane %v873, 5
      %v1033 = vrot.slane %v1032, 4
      %v1034 = vrot.slane %v874, 5
      %v1035 = vsel %vm926, %v1033, %v1034
      %v1036 = vrot.slane %v1034, 4
      %v1037 = vrot.slane %v875, 5
      %v1038 = vsel %vm926, %v1036, %v1037
      %1039 = vrot.lane.b32.xlu0 %v930, 16
      %v1040 = vpop.permute.xlu0 %1039
      %1041 = vrot.lane.b32.xlu0 %v933, 16
      %v1042 = vpop.permute.xlu0 %1041
      %1043 = vrot.lane.b32.xlu0 %v937, 16
      %v1044 = vpop.permute.xlu0 %1043
      %1045 = vrot.lane.b32.xlu0 %v940, 16
      %v1046 = vpop.permute.xlu0 %1045
      %1047 = vrot.lane.b32.xlu0 %v944, 16
      %v1048 = vpop.permute.xlu0 %1047
      %1049 = vrot.lane.b32.xlu0 %v947, 16
      %v1050 = vpop.permute.xlu0 %1049
      %1051 = vrot.lane.b32.xlu0 %v951, 16
      %v1052 = vpop.permute.xlu0 %1051
      %1053 = vrot.lane.b32.xlu0 %v954, 16
      %v1054 = vpop.permute.xlu0 %1053
      %1055 = vrot.lane.b32.xlu0 %v958, 16
      %v1056 = vpop.permute.xlu0 %1055
      %1057 = vrot.lane.b32.xlu0 %v961, 16
      %v1058 = vpop.permute.xlu0 %1057
      %1059 = vrot.lane.b32.xlu0 %v965, 16
      %v1060 = vpop.permute.xlu0 %1059
      %1061 = vrot.lane.b32.xlu0 %v968, 16
      %v1062 = vpop.permute.xlu0 %1061
      %1063 = vrot.lane.b32.xlu0 %v972, 16
      %v1064 = vpop.permute.xlu0 %1063
      %1065 = vrot.lane.b32.xlu0 %v975, 16
      %v1066 = vpop.permute.xlu0 %1065
      %1067 = vrot.lane.b32.xlu0 %v979, 16
      %v1068 = vpop.permute.xlu0 %1067
      %1069 = vrot.lane.b32.xlu0 %v982, 16
      %v1070 = vpop.permute.xlu0 %1069
      %1071 = vrot.lane.b32.xlu0 %v986, 16
      %v1072 = vpop.permute.xlu0 %1071
      %1073 = vrot.lane.b32.xlu0 %v989, 16
      %v1074 = vpop.permute.xlu0 %1073
      %1075 = vrot.lane.b32.xlu0 %v993, 16
      %v1076 = vpop.permute.xlu0 %1075
      %1077 = vrot.lane.b32.xlu0 %v996, 16
      %v1078 = vpop.permute.xlu0 %1077
      %1079 = vrot.lane.b32.xlu0 %v1000, 16
      %v1080 = vpop.permute.xlu0 %1079
      %1081 = vrot.lane.b32.xlu0 %v1003, 16
      %v1082 = vpop.permute.xlu0 %1081
      %1083 = vrot.lane.b32.xlu0 %v1007, 16
      %v1084 = vpop.permute.xlu0 %1083
      %1085 = vrot.lane.b32.xlu0 %v1010, 16
      %v1086 = vpop.permute.xlu0 %1085
      %1087 = vrot.lane.b32.xlu0 %v1014, 16
      %v1088 = vpop.permute.xlu0 %1087
      %1089 = vrot.lane.b32.xlu0 %v1017, 16
      %v1090 = vpop.permute.xlu0 %1089
      %1091 = vrot.lane.b32.xlu0 %v1021, 16
      %v1092 = vpop.permute.xlu0 %1091
      %1093 = vrot.lane.b32.xlu0 %v1024, 16
      %v1094 = vpop.permute.xlu0 %1093
      %1095 = vrot.lane.b32.xlu0 %v1028, 16
      %v1096 = vpop.permute.xlu0 %1095
      %1097 = vrot.lane.b32.xlu0 %v1031, 16
      %v1098 = vpop.permute.xlu0 %1097
      %1099 = vrot.lane.b32.xlu0 %v1035, 16
      %v1100 = vpop.permute.xlu0 %1099
      %1101 = vrot.lane.b32.xlu0 %v1038, 16
      %v1102 = vpop.permute.xlu0 %1101
      %vm1135 = vcmask 191616
      %1136 = vst.msk [vmem:[#allocation2] sm:$0xf] %vm1135, %v1040
      %1137 = vst.msk [vmem:[#allocation2 + $0x4] sm:$0xf] %vm1135, %v1042
      %1138 = vst.msk [vmem:[#allocation2 + $0x8] sm:$0xf] %vm1135, %v1044
      %1139 = vst.msk [vmem:[#allocation2 + $0xc] sm:$0xf] %vm1135, %v1046
      %1140 = vst.msk [vmem:[#allocation2 + $0x10] sm:$0xf] %vm1135, %v1048
      %1141 = vst.msk [vmem:[#allocation2 + $0x14] sm:$0xf] %vm1135, %v1050
      %1142 = vst.msk [vmem:[#allocation2 + $0x18] sm:$0xf] %vm1135, %v1052
      %1143 = vst.msk [vmem:[#allocation2 + $0x1c] sm:$0xf] %vm1135, %v1054
      %1144 = vst.msk [vmem:[#allocation2 + $0x20] sm:$0xf] %vm1135, %v1056
      %1145 = vst.msk [vmem:[#allocation2 + $0x24] sm:$0xf] %vm1135, %v1058
      %1146 = vst.msk [vmem:[#allocation2 + $0x28] sm:$0xf] %vm1135, %v1060
      %1147 = vst.msk [vmem:[#allocation2 + $0x2c] sm:$0xf] %vm1135, %v1062
      %1148 = vst.msk [vmem:[#allocation2 + $0x30] sm:$0xf] %vm1135, %v1064
      %1149 = vst.msk [vmem:[#allocation2 + $0x34] sm:$0xf] %vm1135, %v1066
      %1150 = vst.msk [vmem:[#allocation2 + $0x38] sm:$0xf] %vm1135, %v1068
      %1151 = vst.msk [vmem:[#allocation2 + $0x3c] sm:$0xf] %vm1135, %v1070
      %1152 = vst.msk [vmem:[#allocation2 + $0x40] sm:$0xf] %vm1135, %v1072
      %1153 = vst.msk [vmem:[#allocation2 + $0x44] sm:$0xf] %vm1135, %v1074
      %1154 = vst.msk [vmem:[#allocation2 + $0x48] sm:$0xf] %vm1135, %v1076
      %1155 = vst.msk [vmem:[#allocation2 + $0x4c] sm:$0xf] %vm1135, %v1078
      %1156 = vst.msk [vmem:[#allocation2 + $0x50] sm:$0xf] %vm1135, %v1080
      %1157 = vst.msk [vmem:[#allocation2 + $0x54] sm:$0xf] %vm1135, %v1082
      %1158 = vst.msk [vmem:[#allocation2 + $0x58] sm:$0xf] %vm1135, %v1084
      %1159 = vst.msk [vmem:[#allocation2 + $0x5c] sm:$0xf] %vm1135, %v1086
      %1160 = vst.msk [vmem:[#allocation2 + $0x60] sm:$0xf] %vm1135, %v1088
      %1161 = vst.msk [vmem:[#allocation2 + $0x64] sm:$0xf] %vm1135, %v1090
      %1162 = vst.msk [vmem:[#allocation2 + $0x68] sm:$0xf] %vm1135, %v1092
      %1163 = vst.msk [vmem:[#allocation2 + $0x6c] sm:$0xf] %vm1135, %v1094
      %1164 = vst.msk [vmem:[#allocation2 + $0x70] sm:$0xf] %vm1135, %v1096
      %1165 = vst.msk [vmem:[#allocation2 + $0x74] sm:$0xf] %vm1135, %v1098
      %1166 = vst.msk [vmem:[#allocation2 + $0x78] sm:$0xf] %vm1135, %v1100
      %1167 = vst.msk [vmem:[#allocation2 + $0x7c] sm:$0xf] %vm1135, %v1102
      %s1168 = sadd.s32 %s195, 1
      %s1169 = smul.u32 %s1168, 3
      %s1170 = smul.addr %s1169, 4
      %s1171 = scalar_lea.vmem %s183, %s1170
      %v1172 = vld [vmem:[%s1171] sm:$0xf]
      %v1173 = vld [vmem:[%s1171 + $0x4] sm:$0xf]
      %v1174 = vld [vmem:[%s1171 + $0xc] sm:$0xf]
      %v1175 = vld [vmem:[%s1171 + $0x10] sm:$0xf]
      %v1176 = vld [vmem:[%s1171 + $0x18] sm:$0xf]
      %v1177 = vld [vmem:[%s1171 + $0x1c] sm:$0xf]
      %v1178 = vld [vmem:[%s1171 + $0x24] sm:$0xf]
      %v1179 = vld [vmem:[%s1171 + $0x28] sm:$0xf]
      %v1180 = vld [vmem:[%s1171 + $0x30] sm:$0xf]
      %v1181 = vld [vmem:[%s1171 + $0x34] sm:$0xf]
      %v1182 = vld [vmem:[%s1171 + $0x3c] sm:$0xf]
      %v1183 = vld [vmem:[%s1171 + $0x40] sm:$0xf]
      %v1184 = vld [vmem:[%s1171 + $0x48] sm:$0xf]
      %v1185 = vld [vmem:[%s1171 + $0x4c] sm:$0xf]
      %v1186 = vld [vmem:[%s1171 + $0x54] sm:$0xf]
      %v1187 = vld [vmem:[%s1171 + $0x58] sm:$0xf]
      %v1188 = vld [vmem:[%s1171 + $0x60] sm:$0xf]
      %v1189 = vld [vmem:[%s1171 + $0x64] sm:$0xf]
      %v1190 = vld [vmem:[%s1171 + $0x6c] sm:$0xf]
      %v1191 = vld [vmem:[%s1171 + $0x70] sm:$0xf]
      %v1192 = vld [vmem:[%s1171 + $0x78] sm:$0xf]
      %v1193 = vld [vmem:[%s1171 + $0x7c] sm:$0xf]
      %v1194 = vld [vmem:[%s1171 + $0x84] sm:$0xf]
      %v1195 = vld [vmem:[%s1171 + $0x88] sm:$0xf]
      %v1196 = vld [vmem:[%s1171 + $0x90] sm:$0xf]
      %v1197 = vld [vmem:[%s1171 + $0x94] sm:$0xf]
      %v1198 = vld [vmem:[%s1171 + $0x9c] sm:$0xf]
      %v1199 = vld [vmem:[%s1171 + $0xa0] sm:$0xf]
      %v1200 = vld [vmem:[%s1171 + $0xa8] sm:$0xf]
      %v1201 = vld [vmem:[%s1171 + $0xac] sm:$0xf]
      %v1202 = vld [vmem:[%s1171 + $0xb4] sm:$0xf]
      %v1203 = vld [vmem:[%s1171 + $0xb8] sm:$0xf]
      %1236 = vrot.lane.b32.xlu0 %v1172, 24
      %v1237 = vpop.permute.xlu0 %1236
      %1238 = vrot.lane.b32.xlu0 %v1173, 24
      %v1239 = vpop.permute.xlu0 %1238
      %1240 = vrot.lane.b32.xlu0 %v1174, 24
      %v1241 = vpop.permute.xlu0 %1240
      %1242 = vrot.lane.b32.xlu0 %v1175, 24
      %v1243 = vpop.permute.xlu0 %1242
      %1244 = vrot.lane.b32.xlu0 %v1176, 24
      %v1245 = vpop.permute.xlu0 %1244
      %1246 = vrot.lane.b32.xlu0 %v1177, 24
      %v1247 = vpop.permute.xlu0 %1246
      %1248 = vrot.lane.b32.xlu0 %v1178, 24
      %v1249 = vpop.permute.xlu0 %1248
      %1250 = vrot.lane.b32.xlu0 %v1179, 24
      %v1251 = vpop.permute.xlu0 %1250
      %1252 = vrot.lane.b32.xlu0 %v1180, 24
      %v1253 = vpop.permute.xlu0 %1252
      %1254 = vrot.lane.b32.xlu0 %v1181, 24
      %v1255 = vpop.permute.xlu0 %1254
      %1256 = vrot.lane.b32.xlu0 %v1182, 24
      %v1257 = vpop.permute.xlu0 %1256
      %1258 = vrot.lane.b32.xlu0 %v1183, 24
      %v1259 = vpop.permute.xlu0 %1258
      %1260 = vrot.lane.b32.xlu0 %v1184, 24
      %v1261 = vpop.permute.xlu0 %1260
      %1262 = vrot.lane.b32.xlu0 %v1185, 24
      %v1263 = vpop.permute.xlu0 %1262
      %1264 = vrot.lane.b32.xlu0 %v1186, 24
      %v1265 = vpop.permute.xlu0 %1264
      %1266 = vrot.lane.b32.xlu0 %v1187, 24
      %v1267 = vpop.permute.xlu0 %1266
      %1268 = vrot.lane.b32.xlu0 %v1188, 24
      %v1269 = vpop.permute.xlu0 %1268
      %1270 = vrot.lane.b32.xlu0 %v1189, 24
      %v1271 = vpop.permute.xlu0 %1270
      %1272 = vrot.lane.b32.xlu0 %v1190, 24
      %v1273 = vpop.permute.xlu0 %1272
      %1274 = vrot.lane.b32.xlu0 %v1191, 24
      %v1275 = vpop.permute.xlu0 %1274
      %1276 = vrot.lane.b32.xlu0 %v1192, 24
      %v1277 = vpop.permute.xlu0 %1276
      %1278 = vrot.lane.b32.xlu0 %v1193, 24
      %v1279 = vpop.permute.xlu0 %1278
      %1280 = vrot.lane.b32.xlu0 %v1194, 24
      %v1281 = vpop.permute.xlu0 %1280
      %1282 = vrot.lane.b32.xlu0 %v1195, 24
      %v1283 = vpop.permute.xlu0 %1282
      %1284 = vrot.lane.b32.xlu0 %v1196, 24
      %v1285 = vpop.permute.xlu0 %1284
      %1286 = vrot.lane.b32.xlu0 %v1197, 24
      %v1287 = vpop.permute.xlu0 %1286
      %1288 = vrot.lane.b32.xlu0 %v1198, 24
      %v1289 = vpop.permute.xlu0 %1288
      %1290 = vrot.lane.b32.xlu0 %v1199, 24
      %v1291 = vpop.permute.xlu0 %1290
      %1292 = vrot.lane.b32.xlu0 %v1200, 24
      %v1293 = vpop.permute.xlu0 %1292
      %1294 = vrot.lane.b32.xlu0 %v1201, 24
      %v1295 = vpop.permute.xlu0 %1294
      %1296 = vrot.lane.b32.xlu0 %v1202, 24
      %v1297 = vpop.permute.xlu0 %1296
      %1298 = vrot.lane.b32.xlu0 %v1203, 24
      %v1299 = vpop.permute.xlu0 %1298
      %vm1332 = vcmask 257216
      %1333 = vst.msk [vmem:[#allocation2] sm:$0xf] %vm1332, %v1237
      %1334 = vst.msk [vmem:[#allocation2 + $0x4] sm:$0xf] %vm1332, %v1239
      %1335 = vst.msk [vmem:[#allocation2 + $0x8] sm:$0xf] %vm1332, %v1241
      %1336 = vst.msk [vmem:[#allocation2 + $0xc] sm:$0xf] %vm1332, %v1243
      %1337 = vst.msk [vmem:[#allocation2 + $0x10] sm:$0xf] %vm1332, %v1245
      %1338 = vst.msk [vmem:[#allocation2 + $0x14] sm:$0xf] %vm1332, %v1247
      %1339 = vst.msk [vmem:[#allocation2 + $0x18] sm:$0xf] %vm1332, %v1249
      %1340 = vst.msk [vmem:[#allocation2 + $0x1c] sm:$0xf] %vm1332, %v1251
      %1341 = vst.msk [vmem:[#allocation2 + $0x20] sm:$0xf] %vm1332, %v1253
      %1342 = vst.msk [vmem:[#allocation2 + $0x24] sm:$0xf] %vm1332, %v1255
      %1343 = vst.msk [vmem:[#allocation2 + $0x28] sm:$0xf] %vm1332, %v1257
      %1344 = vst.msk [vmem:[#allocation2 + $0x2c] sm:$0xf] %vm1332, %v1259
      %1345 = vst.msk [vmem:[#allocation2 + $0x30] sm:$0xf] %vm1332, %v1261
      %1346 = vst.msk [vmem:[#allocation2 + $0x34] sm:$0xf] %vm1332, %v1263
      %1347 = vst.msk [vmem:[#allocation2 + $0x38] sm:$0xf] %vm1332, %v1265
      %1348 = vst.msk [vmem:[#allocation2 + $0x3c] sm:$0xf] %vm1332, %v1267
      %1349 = vst.msk [vmem:[#allocation2 + $0x40] sm:$0xf] %vm1332, %v1269
      %1350 = vst.msk [vmem:[#allocation2 + $0x44] sm:$0xf] %vm1332, %v1271
      %1351 = vst.msk [vmem:[#allocation2 + $0x48] sm:$0xf] %vm1332, %v1273
      %1352 = vst.msk [vmem:[#allocation2 + $0x4c] sm:$0xf] %vm1332, %v1275
      %1353 = vst.msk [vmem:[#allocation2 + $0x50] sm:$0xf] %vm1332, %v1277
      %1354 = vst.msk [vmem:[#allocation2 + $0x54] sm:$0xf] %vm1332, %v1279
      %1355 = vst.msk [vmem:[#allocation2 + $0x58] sm:$0xf] %vm1332, %v1281
      %1356 = vst.msk [vmem:[#allocation2 + $0x5c] sm:$0xf] %vm1332, %v1283
      %1357 = vst.msk [vmem:[#allocation2 + $0x60] sm:$0xf] %vm1332, %v1285
      %1358 = vst.msk [vmem:[#allocation2 + $0x64] sm:$0xf] %vm1332, %v1287
      %1359 = vst.msk [vmem:[#allocation2 + $0x68] sm:$0xf] %vm1332, %v1289
      %1360 = vst.msk [vmem:[#allocation2 + $0x6c] sm:$0xf] %vm1332, %v1291
      %1361 = vst.msk [vmem:[#allocation2 + $0x70] sm:$0xf] %vm1332, %v1293
      %1362 = vst.msk [vmem:[#allocation2 + $0x74] sm:$0xf] %vm1332, %v1295
      %1363 = vst.msk [vmem:[#allocation2 + $0x78] sm:$0xf] %vm1332, %v1297
      %1364 = vst.msk [vmem:[#allocation2 + $0x7c] sm:$0xf] %vm1332, %v1299
      %v1365 = vld [vmem:[%s1171] sm:$0xf]
      %v1366 = vld [vmem:[%s1171 + $0x4] sm:$0xf]
      %v1367 = vld [vmem:[%s1171 + $0x8] sm:$0x1]
      %v1368 = vld [vmem:[%s1171 + $0xc] sm:$0xf]
      %v1369 = vld [vmem:[%s1171 + $0x10] sm:$0xf]
      %v1370 = vld [vmem:[%s1171 + $0x14] sm:$0x1]
      %v1371 = vld [vmem:[%s1171 + $0x18] sm:$0xf]
      %v1372 = vld [vmem:[%s1171 + $0x1c] sm:$0xf]
      %v1373 = vld [vmem:[%s1171 + $0x20] sm:$0x1]
      %v1374 = vld [vmem:[%s1171 + $0x24] sm:$0xf]
      %v1375 = vld [vmem:[%s1171 + $0x28] sm:$0xf]
      %v1376 = vld [vmem:[%s1171 + $0x2c] sm:$0x1]
      %v1377 = vld [vmem:[%s1171 + $0x30] sm:$0xf]
      %v1378 = vld [vmem:[%s1171 + $0x34] sm:$0xf]
      %v1379 = vld [vmem:[%s1171 + $0x38] sm:$0x1]
      %v1380 = vld [vmem:[%s1171 + $0x3c] sm:$0xf]
      %v1381 = vld [vmem:[%s1171 + $0x40] sm:$0xf]
      %v1382 = vld [vmem:[%s1171 + $0x44] sm:$0x1]
      %v1383 = vld [vmem:[%s1171 + $0x48] sm:$0xf]
      %v1384 = vld [vmem:[%s1171 + $0x4c] sm:$0xf]
      %v1385 = vld [vmem:[%s1171 + $0x50] sm:$0x1]
      %v1386 = vld [vmem:[%s1171 + $0x54] sm:$0xf]
      %v1387 = vld [vmem:[%s1171 + $0x58] sm:$0xf]
      %v1388 = vld [vmem:[%s1171 + $0x5c] sm:$0x1]
      %v1389 = vld [vmem:[%s1171 + $0x60] sm:$0xf]
      %v1390 = vld [vmem:[%s1171 + $0x64] sm:$0xf]
      %v1391 = vld [vmem:[%s1171 + $0x68] sm:$0x1]
      %v1392 = vld [vmem:[%s1171 + $0x6c] sm:$0xf]
      %v1393 = vld [vmem:[%s1171 + $0x70] sm:$0xf]
      %v1394 = vld [vmem:[%s1171 + $0x74] sm:$0x1]
      %v1395 = vld [vmem:[%s1171 + $0x78] sm:$0xf]
      %v1396 = vld [vmem:[%s1171 + $0x7c] sm:$0xf]
      %v1397 = vld [vmem:[%s1171 + $0x80] sm:$0x1]
      %v1398 = vld [vmem:[%s1171 + $0x84] sm:$0xf]
      %v1399 = vld [vmem:[%s1171 + $0x88] sm:$0xf]
      %v1400 = vld [vmem:[%s1171 + $0x8c] sm:$0x1]
      %v1401 = vld [vmem:[%s1171 + $0x90] sm:$0xf]
      %v1402 = vld [vmem:[%s1171 + $0x94] sm:$0xf]
      %v1403 = vld [vmem:[%s1171 + $0x98] sm:$0x1]
      %v1404 = vld [vmem:[%s1171 + $0x9c] sm:$0xf]
      %v1405 = vld [vmem:[%s1171 + $0xa0] sm:$0xf]
      %v1406 = vld [vmem:[%s1171 + $0xa4] sm:$0x1]
      %v1407 = vld [vmem:[%s1171 + $0xa8] sm:$0xf]
      %v1408 = vld [vmem:[%s1171 + $0xac] sm:$0xf]
      %v1409 = vld [vmem:[%s1171 + $0xb0] sm:$0x1]
      %v1410 = vld [vmem:[%s1171 + $0xb4] sm:$0xf]
      %v1411 = vld [vmem:[%s1171 + $0xb8] sm:$0xf]
      %v1412 = vld [vmem:[%s1171 + $0xbc] sm:$0x1]
      %v1414 = vshrl.u32 %v1365, 16
      %v1416 = vrot.slane %v1414, 4
      %v1417 = vshll.u32 %v1365, 16
      %v1419 = vrot.slane %v1417, 5
      %v1420 = vor.u32 %v1416, %v1419
      %v1421 = vrot.slane %v1420, 4
      %v1423 = vshll.u32 %v1366, 16
      %v1425 = vrot.slane %v1423, 5
      %v1426 = vsel %vm314, %v1421, %v1425
      %v1427 = vshrl.u32 %v1366, 16
      %v1429 = vrot.slane %v1427, 4
      %v1430 = vor.u32 %v1429, %v1425
      %v1431 = vrot.slane %v1430, 4
      %v1433 = vshll.u32 %v1367, 16
      %v1435 = vrot.slane %v1433, 5
      %v1436 = vsel %vm314, %v1431, %v1435
      %v1438 = vshrl.u32 %v1368, 16
      %v1440 = vrot.slane %v1438, 4
      %v1441 = vshll.u32 %v1368, 16
      %v1443 = vrot.slane %v1441, 5
      %v1444 = vor.u32 %v1440, %v1443
      %v1445 = vrot.slane %v1444, 4
      %v1447 = vshll.u32 %v1369, 16
      %v1449 = vrot.slane %v1447, 5
      %v1450 = vsel %vm314, %v1445, %v1449
      %v1451 = vshrl.u32 %v1369, 16
      %v1453 = vrot.slane %v1451, 4
      %v1454 = vor.u32 %v1453, %v1449
      %v1455 = vrot.slane %v1454, 4
      %v1457 = vshll.u32 %v1370, 16
      %v1459 = vrot.slane %v1457, 5
      %v1460 = vsel %vm314, %v1455, %v1459
      %v1462 = vshrl.u32 %v1371, 16
      %v1464 = vrot.slane %v1462, 4
      %v1465 = vshll.u32 %v1371, 16
      %v1467 = vrot.slane %v1465, 5
      %v1468 = vor.u32 %v1464, %v1467
      %v1469 = vrot.slane %v1468, 4
      %v1471 = vshll.u32 %v1372, 16
      %v1473 = vrot.slane %v1471, 5
      %v1474 = vsel %vm314, %v1469, %v1473
      %v1475 = vshrl.u32 %v1372, 16
      %v1477 = vrot.slane %v1475, 4
      %v1478 = vor.u32 %v1477, %v1473
      %v1479 = vrot.slane %v1478, 4
      %v1481 = vshll.u32 %v1373, 16
      %v1483 = vrot.slane %v1481, 5
      %v1484 = vsel %vm314, %v1479, %v1483
      %v1486 = vshrl.u32 %v1374, 16
      %v1488 = vrot.slane %v1486, 4
      %v1489 = vshll.u32 %v1374, 16
      %v1491 = vrot.slane %v1489, 5
      %v1492 = vor.u32 %v1488, %v1491
      %v1493 = vrot.slane %v1492, 4
      %v1495 = vshll.u32 %v1375, 16
      %v1497 = vrot.slane %v1495, 5
      %v1498 = vsel %vm314, %v1493, %v1497
      %v1499 = vshrl.u32 %v1375, 16
      %v1501 = vrot.slane %v1499, 4
      %v1502 = vor.u32 %v1501, %v1497
      %v1503 = vrot.slane %v1502, 4
      %v1505 = vshll.u32 %v1376, 16
      %v1507 = vrot.slane %v1505, 5
      %v1508 = vsel %vm314, %v1503, %v1507
      %v1510 = vshrl.u32 %v1377, 16
      %v1512 = vrot.slane %v1510, 4
      %v1513 = vshll.u32 %v1377, 16
      %v1515 = vrot.slane %v1513, 5
      %v1516 = vor.u32 %v1512, %v1515
      %v1517 = vrot.slane %v1516, 4
      %v1519 = vshll.u32 %v1378, 16
      %v1521 = vrot.slane %v1519, 5
      %v1522 = vsel %vm314, %v1517, %v1521
      %v1523 = vshrl.u32 %v1378, 16
      %v1525 = vrot.slane %v1523, 4
      %v1526 = vor.u32 %v1525, %v1521
      %v1527 = vrot.slane %v1526, 4
      %v1529 = vshll.u32 %v1379, 16
      %v1531 = vrot.slane %v1529, 5
      %v1532 = vsel %vm314, %v1527, %v1531
      %v1534 = vshrl.u32 %v1380, 16
      %v1536 = vrot.slane %v1534, 4
      %v1537 = vshll.u32 %v1380, 16
      %v1539 = vrot.slane %v1537, 5
      %v1540 = vor.u32 %v1536, %v1539
      %v1541 = vrot.slane %v1540, 4
      %v1543 = vshll.u32 %v1381, 16
      %v1545 = vrot.slane %v1543, 5
      %v1546 = vsel %vm314, %v1541, %v1545
      %v1547 = vshrl.u32 %v1381, 16
      %v1549 = vrot.slane %v1547, 4
      %v1550 = vor.u32 %v1549, %v1545
      %v1551 = vrot.slane %v1550, 4
      %v1553 = vshll.u32 %v1382, 16
      %v1555 = vrot.slane %v1553, 5
      %v1556 = vsel %vm314, %v1551, %v1555
      %v1558 = vshrl.u32 %v1383, 16
      %v1560 = vrot.slane %v1558, 4
      %v1561 = vshll.u32 %v1383, 16
      %v1563 = vrot.slane %v1561, 5
      %v1564 = vor.u32 %v1560, %v1563
      %v1565 = vrot.slane %v1564, 4
      %v1567 = vshll.u32 %v1384, 16
      %v1569 = vrot.slane %v1567, 5
      %v1570 = vsel %vm314, %v1565, %v1569
      %v1571 = vshrl.u32 %v1384, 16
      %v1573 = vrot.slane %v1571, 4
      %v1574 = vor.u32 %v1573, %v1569
      %v1575 = vrot.slane %v1574, 4
      %v1577 = vshll.u32 %v1385, 16
      %v1579 = vrot.slane %v1577, 5
      %v1580 = vsel %vm314, %v1575, %v1579
      %v1582 = vshrl.u32 %v1386, 16
      %v1584 = vrot.slane %v1582, 4
      %v1585 = vshll.u32 %v1386, 16
      %v1587 = vrot.slane %v1585, 5
      %v1588 = vor.u32 %v1584, %v1587
      %v1589 = vrot.slane %v1588, 4
      %v1591 = vshll.u32 %v1387, 16
      %v1593 = vrot.slane %v1591, 5
      %v1594 = vsel %vm314, %v1589, %v1593
      %v1595 = vshrl.u32 %v1387, 16
      %v1597 = vrot.slane %v1595, 4
      %v1598 = vor.u32 %v1597, %v1593
      %v1599 = vrot.slane %v1598, 4
      %v1601 = vshll.u32 %v1388, 16
      %v1603 = vrot.slane %v1601, 5
      %v1604 = vsel %vm314, %v1599, %v1603
      %v1606 = vshrl.u32 %v1389, 16
      %v1608 = vrot.slane %v1606, 4
      %v1609 = vshll.u32 %v1389, 16
      %v1611 = vrot.slane %v1609, 5
      %v1612 = vor.u32 %v1608, %v1611
      %v1613 = vrot.slane %v1612, 4
      %v1615 = vshll.u32 %v1390, 16
      %v1617 = vrot.slane %v1615, 5
      %v1618 = vsel %vm314, %v1613, %v1617
      %v1619 = vshrl.u32 %v1390, 16
      %v1621 = vrot.slane %v1619, 4
      %v1622 = vor.u32 %v1621, %v1617
      %v1623 = vrot.slane %v1622, 4
      %v1625 = vshll.u32 %v1391, 16
      %v1627 = vrot.slane %v1625, 5
      %v1628 = vsel %vm314, %v1623, %v1627
      %v1630 = vshrl.u32 %v1392, 16
      %v1632 = vrot.slane %v1630, 4
      %v1633 = vshll.u32 %v1392, 16
      %v1635 = vrot.slane %v1633, 5
      %v1636 = vor.u32 %v1632, %v1635
      %v1637 = vrot.slane %v1636, 4
      %v1639 = vshll.u32 %v1393, 16
      %v1641 = vrot.slane %v1639, 5
      %v1642 = vsel %vm314, %v1637, %v1641
      %v1643 = vshrl.u32 %v1393, 16
      %v1645 = vrot.slane %v1643, 4
      %v1646 = vor.u32 %v1645, %v1641
      %v1647 = vrot.slane %v1646, 4
      %v1649 = vshll.u32 %v1394, 16
      %v1651 = vrot.slane %v1649, 5
      %v1652 = vsel %vm314, %v1647, %v1651
      %v1654 = vshrl.u32 %v1395, 16
      %v1656 = vrot.slane %v1654, 4
      %v1657 = vshll.u32 %v1395, 16
      %v1659 = vrot.slane %v1657, 5
      %v1660 = vor.u32 %v1656, %v1659
      %v1661 = vrot.slane %v1660, 4
      %v1663 = vshll.u32 %v1396, 16
      %v1665 = vrot.slane %v1663, 5
      %v1666 = vsel %vm314, %v1661, %v1665
      %v1667 = vshrl.u32 %v1396, 16
      %v1669 = vrot.slane %v1667, 4
      %v1670 = vor.u32 %v1669, %v1665
      %v1671 = vrot.slane %v1670, 4
      %v1673 = vshll.u32 %v1397, 16
      %v1675 = vrot.slane %v1673, 5
      %v1676 = vsel %vm314, %v1671, %v1675
      %v1678 = vshrl.u32 %v1398, 16
      %v1680 = vrot.slane %v1678, 4
      %v1681 = vshll.u32 %v1398, 16
      %v1683 = vrot.slane %v1681, 5
      %v1684 = vor.u32 %v1680, %v1683
      %v1685 = vrot.slane %v1684, 4
      %v1687 = vshll.u32 %v1399, 16
      %v1689 = vrot.slane %v1687, 5
      %v1690 = vsel %vm314, %v1685, %v1689
      %v1691 = vshrl.u32 %v1399, 16
      %v1693 = vrot.slane %v1691, 4
      %v1694 = vor.u32 %v1693, %v1689
      %v1695 = vrot.slane %v1694, 4
      %v1697 = vshll.u32 %v1400, 16
      %v1699 = vrot.slane %v1697, 5
      %v1700 = vsel %vm314, %v1695, %v1699
      %v1702 = vshrl.u32 %v1401, 16
      %v1704 = vrot.slane %v1702, 4
      %v1705 = vshll.u32 %v1401, 16
      %v1707 = vrot.slane %v1705, 5
      %v1708 = vor.u32 %v1704, %v1707
      %v1709 = vrot.slane %v1708, 4
      %v1711 = vshll.u32 %v1402, 16
      %v1713 = vrot.slane %v1711, 5
      %v1714 = vsel %vm314, %v1709, %v1713
      %v1715 = vshrl.u32 %v1402, 16
      %v1717 = vrot.slane %v1715, 4
      %v1718 = vor.u32 %v1717, %v1713
      %v1719 = vrot.slane %v1718, 4
      %v1721 = vshll.u32 %v1403, 16
      %v1723 = vrot.slane %v1721, 5
      %v1724 = vsel %vm314, %v1719, %v1723
      %v1726 = vshrl.u32 %v1404, 16
      %v1728 = vrot.slane %v1726, 4
      %v1729 = vshll.u32 %v1404, 16
      %v1731 = vrot.slane %v1729, 5
      %v1732 = vor.u32 %v1728, %v1731
      %v1733 = vrot.slane %v1732, 4
      %v1735 = vshll.u32 %v1405, 16
      %v1737 = vrot.slane %v1735, 5
      %v1738 = vsel %vm314, %v1733, %v1737
      %v1739 = vshrl.u32 %v1405, 16
      %v1741 = vrot.slane %v1739, 4
      %v1742 = vor.u32 %v1741, %v1737
      %v1743 = vrot.slane %v1742, 4
      %v1745 = vshll.u32 %v1406, 16
      %v1747 = vrot.slane %v1745, 5
      %v1748 = vsel %vm314, %v1743, %v1747
      %v1750 = vshrl.u32 %v1407, 16
      %v1752 = vrot.slane %v1750, 4
      %v1753 = vshll.u32 %v1407, 16
      %v1755 = vrot.slane %v1753, 5
      %v1756 = vor.u32 %v1752, %v1755
      %v1757 = vrot.slane %v1756, 4
      %v1759 = vshll.u32 %v1408, 16
      %v1761 = vrot.slane %v1759, 5
      %v1762 = vsel %vm314, %v1757, %v1761
      %v1763 = vshrl.u32 %v1408, 16
      %v1765 = vrot.slane %v1763, 4
      %v1766 = vor.u32 %v1765, %v1761
      %v1767 = vrot.slane %v1766, 4
      %v1769 = vshll.u32 %v1409, 16
      %v1771 = vrot.slane %v1769, 5
      %v1772 = vsel %vm314, %v1767, %v1771
      %v1774 = vshrl.u32 %v1410, 16
      %v1776 = vrot.slane %v1774, 4
      %v1777 = vshll.u32 %v1410, 16
      %v1779 = vrot.slane %v1777, 5
      %v1780 = vor.u32 %v1776, %v1779
      %v1781 = vrot.slane %v1780, 4
      %v1783 = vshll.u32 %v1411, 16
      %v1785 = vrot.slane %v1783, 5
      %v1786 = vsel %vm314, %v1781, %v1785
      %v1787 = vshrl.u32 %v1411, 16
      %v1789 = vrot.slane %v1787, 4
      %v1790 = vor.u32 %v1789, %v1785
      %v1791 = vrot.slane %v1790, 4
      %v1793 = vshll.u32 %v1412, 16
      %v1795 = vrot.slane %v1793, 5
      %v1796 = vsel %vm314, %v1791, %v1795
      %1797 = vrot.lane.b32.xlu0 %v1426, 32
      %v1798 = vpop.permute.xlu0 %1797
      %1799 = vrot.lane.b32.xlu0 %v1436, 32
      %v1800 = vpop.permute.xlu0 %1799
      %1801 = vrot.lane.b32.xlu0 %v1450, 32
      %v1802 = vpop.permute.xlu0 %1801
      %1803 = vrot.lane.b32.xlu0 %v1460, 32
      %v1804 = vpop.permute.xlu0 %1803
      %1805 = vrot.lane.b32.xlu0 %v1474, 32
      %v1806 = vpop.permute.xlu0 %1805
      %1807 = vrot.lane.b32.xlu0 %v1484, 32
      %v1808 = vpop.permute.xlu0 %1807
      %1809 = vrot.lane.b32.xlu0 %v1498, 32
      %v1810 = vpop.permute.xlu0 %1809
      %1811 = vrot.lane.b32.xlu0 %v1508, 32
      %v1812 = vpop.permute.xlu0 %1811
      %1813 = vrot.lane.b32.xlu0 %v1522, 32
      %v1814 = vpop.permute.xlu0 %1813
      %1815 = vrot.lane.b32.xlu0 %v1532, 32
      %v1816 = vpop.permute.xlu0 %1815
      %1817 = vrot.lane.b32.xlu0 %v1546, 32
      %v1818 = vpop.permute.xlu0 %1817
      %1819 = vrot.lane.b32.xlu0 %v1556, 32
      %v1820 = vpop.permute.xlu0 %1819
      %1821 = vrot.lane.b32.xlu0 %v1570, 32
      %v1822 = vpop.permute.xlu0 %1821
      %1823 = vrot.lane.b32.xlu0 %v1580, 32
      %v1824 = vpop.permute.xlu0 %1823
      %1825 = vrot.lane.b32.xlu0 %v1594, 32
      %v1826 = vpop.permute.xlu0 %1825
      %1827 = vrot.lane.b32.xlu0 %v1604, 32
      %v1828 = vpop.permute.xlu0 %1827
      %1829 = vrot.lane.b32.xlu0 %v1618, 32
      %v1830 = vpop.permute.xlu0 %1829
      %1831 = vrot.lane.b32.xlu0 %v1628, 32
      %v1832 = vpop.permute.xlu0 %1831
      %1833 = vrot.lane.b32.xlu0 %v1642, 32
      %v1834 = vpop.permute.xlu0 %1833
      %1835 = vrot.lane.b32.xlu0 %v1652, 32
      %v1836 = vpop.permute.xlu0 %1835
      %1837 = vrot.lane.b32.xlu0 %v1666, 32
      %v1838 = vpop.permute.xlu0 %1837
      %1839 = vrot.lane.b32.xlu0 %v1676, 32
      %v1840 = vpop.permute.xlu0 %1839
      %1841 = vrot.lane.b32.xlu0 %v1690, 32
      %v1842 = vpop.permute.xlu0 %1841
      %1843 = vrot.lane.b32.xlu0 %v1700, 32
      %v1844 = vpop.permute.xlu0 %1843
      %1845 = vrot.lane.b32.xlu0 %v1714, 32
      %v1846 = vpop.permute.xlu0 %1845
      %1847 = vrot.lane.b32.xlu0 %v1724, 32
      %v1848 = vpop.permute.xlu0 %1847
      %1849 = vrot.lane.b32.xlu0 %v1738, 32
      %v1850 = vpop.permute.xlu0 %1849
      %1851 = vrot.lane.b32.xlu0 %v1748, 32
      %v1852 = vpop.permute.xlu0 %1851
      %1853 = vrot.lane.b32.xlu0 %v1762, 32
      %v1854 = vpop.permute.xlu0 %1853
      %1855 = vrot.lane.b32.xlu0 %v1772, 32
      %v1856 = vpop.permute.xlu0 %1855
      %1857 = vrot.lane.b32.xlu0 %v1786, 32
      %v1858 = vpop.permute.xlu0 %1857
      %1859 = vrot.lane.b32.xlu0 %v1796, 32
      %v1860 = vpop.permute.xlu0 %1859
      %vm1893 = vcmask 322816
      %1894 = vst.msk [vmem:[#allocation2] sm:$0xf] %vm1893, %v1798
      %1895 = vst.msk [vmem:[#allocation2 + $0x4] sm:$0xf] %vm1893, %v1800
      %1896 = vst.msk [vmem:[#allocation2 + $0x8] sm:$0xf] %vm1893, %v1802
      %1897 = vst.msk [vmem:[#allocation2 + $0xc] sm:$0xf] %vm1893, %v1804
      %1898 = vst.msk [vmem:[#allocation2 + $0x10] sm:$0xf] %vm1893, %v1806
      %1899 = vst.msk [vmem:[#allocation2 + $0x14] sm:$0xf] %vm1893, %v1808
      %1900 = vst.msk [vmem:[#allocation2 + $0x18] sm:$0xf] %vm1893, %v1810
      %1901 = vst.msk [vmem:[#allocation2 + $0x1c] sm:$0xf] %vm1893, %v1812
      %1902 = vst.msk [vmem:[#allocation2 + $0x20] sm:$0xf] %vm1893, %v1814
      %1903 = vst.msk [vmem:[#allocation2 + $0x24] sm:$0xf] %vm1893, %v1816
      %1904 = vst.msk [vmem:[#allocation2 + $0x28] sm:$0xf] %vm1893, %v1818
      %1905 = vst.msk [vmem:[#allocation2 + $0x2c] sm:$0xf] %vm1893, %v1820
      %1906 = vst.msk [vmem:[#allocation2 + $0x30] sm:$0xf] %vm1893, %v1822
      %1907 = vst.msk [vmem:[#allocation2 + $0x34] sm:$0xf] %vm1893, %v1824
      %1908 = vst.msk [vmem:[#allocation2 + $0x38] sm:$0xf] %vm1893, %v1826
      %1909 = vst.msk [vmem:[#allocation2 + $0x3c] sm:$0xf] %vm1893, %v1828
      %1910 = vst.msk [vmem:[#allocation2 + $0x40] sm:$0xf] %vm1893, %v1830
      %1911 = vst.msk [vmem:[#allocation2 + $0x44] sm:$0xf] %vm1893, %v1832
      %1912 = vst.msk [vmem:[#allocation2 + $0x48] sm:$0xf] %vm1893, %v1834
      %1913 = vst.msk [vmem:[#allocation2 + $0x4c] sm:$0xf] %vm1893, %v1836
      %1914 = vst.msk [vmem:[#allocation2 + $0x50] sm:$0xf] %vm1893, %v1838
      %1915 = vst.msk [vmem:[#allocation2 + $0x54] sm:$0xf] %vm1893, %v1840
      %1916 = vst.msk [vmem:[#allocation2 + $0x58] sm:$0xf] %vm1893, %v1842
      %1917 = vst.msk [vmem:[#allocation2 + $0x5c] sm:$0xf] %vm1893, %v1844
      %1918 = vst.msk [vmem:[#allocation2 + $0x60] sm:$0xf] %vm1893, %v1846
      %1919 = vst.msk [vmem:[#allocation2 + $0x64] sm:$0xf] %vm1893, %v1848
      %1920 = vst.msk [vmem:[#allocation2 + $0x68] sm:$0xf] %vm1893, %v1850
      %1921 = vst.msk [vmem:[#allocation2 + $0x6c] sm:$0xf] %vm1893, %v1852
      %1922 = vst.msk [vmem:[#allocation2 + $0x70] sm:$0xf] %vm1893, %v1854
      %1923 = vst.msk [vmem:[#allocation2 + $0x74] sm:$0xf] %vm1893, %v1856
      %1924 = vst.msk [vmem:[#allocation2 + $0x78] sm:$0xf] %vm1893, %v1858
      %1925 = vst.msk [vmem:[#allocation2 + $0x7c] sm:$0xf] %vm1893, %v1860
      %v1926 = vld [vmem:[%s1171] sm:$0xe]
      %v1927 = vld [vmem:[%s1171 + $0x4] sm:$0xf]
      %v1928 = vld [vmem:[%s1171 + $0x8] sm:$0x1]
      %v1929 = vld [vmem:[%s1171 + $0xc] sm:$0xe]
      %v1930 = vld [vmem:[%s1171 + $0x10] sm:$0xf]
      %v1931 = vld [vmem:[%s1171 + $0x14] sm:$0x1]
      %v1932 = vld [vmem:[%s1171 + $0x18] sm:$0xe]
      %v1933 = vld [vmem:[%s1171 + $0x1c] sm:$0xf]
      %v1934 = vld [vmem:[%s1171 + $0x20] sm:$0x1]
      %v1935 = vld [vmem:[%s1171 + $0x24] sm:$0xe]
      %v1936 = vld [vmem:[%s1171 + $0x28] sm:$0xf]
      %v1937 = vld [vmem:[%s1171 + $0x2c] sm:$0x1]
      %v1938 = vld [vmem:[%s1171 + $0x30] sm:$0xe]
      %v1939 = vld [vmem:[%s1171 + $0x34] sm:$0xf]
      %v1940 = vld [vmem:[%s1171 + $0x38] sm:$0x1]
      %v1941 = vld [vmem:[%s1171 + $0x3c] sm:$0xe]
      %v1942 = vld [vmem:[%s1171 + $0x40] sm:$0xf]
      %v1943 = vld [vmem:[%s1171 + $0x44] sm:$0x1]
      %v1944 = vld [vmem:[%s1171 + $0x48] sm:$0xe]
      %v1945 = vld [vmem:[%s1171 + $0x4c] sm:$0xf]
      %v1946 = vld [vmem:[%s1171 + $0x50] sm:$0x1]
      %v1947 = vld [vmem:[%s1171 + $0x54] sm:$0xe]
      %v1948 = vld [vmem:[%s1171 + $0x58] sm:$0xf]
      %v1949 = vld [vmem:[%s1171 + $0x5c] sm:$0x1]
      %v1950 = vld [vmem:[%s1171 + $0x60] sm:$0xe]
      %v1951 = vld [vmem:[%s1171 + $0x64] sm:$0xf]
      %v1952 = vld [vmem:[%s1171 + $0x68] sm:$0x1]
      %v1953 = vld [vmem:[%s1171 + $0x6c] sm:$0xe]
      %v1954 = vld [vmem:[%s1171 + $0x70] sm:$0xf]
      %v1955 = vld [vmem:[%s1171 + $0x74] sm:$0x1]
      %v1956 = vld [vmem:[%s1171 + $0x78] sm:$0xe]
      %v1957 = vld [vmem:[%s1171 + $0x7c] sm:$0xf]
      %v1958 = vld [vmem:[%s1171 + $0x80] sm:$0x1]
      %v1959 = vld [vmem:[%s1171 + $0x84] sm:$0xe]
      %v1960 = vld [vmem:[%s1171 + $0x88] sm:$0xf]
      %v1961 = vld [vmem:[%s1171 + $0x8c] sm:$0x1]
      %v1962 = vld [vmem:[%s1171 + $0x90] sm:$0xe]
      %v1963 = vld [vmem:[%s1171 + $0x94] sm:$0xf]
      %v1964 = vld [vmem:[%s1171 + $0x98] sm:$0x1]
      %v1965 = vld [vmem:[%s1171 + $0x9c] sm:$0xe]
      %v1966 = vld [vmem:[%s1171 + $0xa0] sm:$0xf]
      %v1967 = vld [vmem:[%s1171 + $0xa4] sm:$0x1]
      %v1968 = vld [vmem:[%s1171 + $0xa8] sm:$0xe]
      %v1969 = vld [vmem:[%s1171 + $0xac] sm:$0xf]
      %v1970 = vld [vmem:[%s1171 + $0xb0] sm:$0x1]
      %v1971 = vld [vmem:[%s1171 + $0xb4] sm:$0xe]
      %v1972 = vld [vmem:[%s1171 + $0xb8] sm:$0xf]
      %v1973 = vld [vmem:[%s1171 + $0xbc] sm:$0x1]
      %v2022 = vrot.slane %v1926, 5
      %v2023 = vrot.slane %v2022, 4
      %v2024 = vrot.slane %v1927, 5
      %v2025 = vsel %vm926, %v2023, %v2024
      %v2026 = vrot.slane %v2024, 4
      %v2027 = vrot.slane %v1928, 5
      %v2028 = vsel %vm926, %v2026, %v2027
      %v2029 = vrot.slane %v1929, 5
      %v2030 = vrot.slane %v2029, 4
      %v2031 = vrot.slane %v1930, 5
      %v2032 = vsel %vm926, %v2030, %v2031
      %v2033 = vrot.slane %v2031, 4
      %v2034 = vrot.slane %v1931, 5
      %v2035 = vsel %vm926, %v2033, %v2034
      %v2036 = vrot.slane %v1932, 5
      %v2037 = vrot.slane %v2036, 4
      %v2038 = vrot.slane %v1933, 5
      %v2039 = vsel %vm926, %v2037, %v2038
      %v2040 = vrot.slane %v2038, 4
      %v2041 = vrot.slane %v1934, 5
      %v2042 = vsel %vm926, %v2040, %v2041
      %v2043 = vrot.slane %v1935, 5
      %v2044 = vrot.slane %v2043, 4
      %v2045 = vrot.slane %v1936, 5
      %v2046 = vsel %vm926, %v2044, %v2045
      %v2047 = vrot.slane %v2045, 4
      %v2048 = vrot.slane %v1937, 5
      %v2049 = vsel %vm926, %v2047, %v2048
      %v2050 = vrot.slane %v1938, 5
      %v2051 = vrot.slane %v2050, 4
      %v2052 = vrot.slane %v1939, 5
      %v2053 = vsel %vm926, %v2051, %v2052
      %v2054 = vrot.slane %v2052, 4
      %v2055 = vrot.slane %v1940, 5
      %v2056 = vsel %vm926, %v2054, %v2055
      %v2057 = vrot.slane %v1941, 5
      %v2058 = vrot.slane %v2057, 4
      %v2059 = vrot.slane %v1942, 5
      %v2060 = vsel %vm926, %v2058, %v2059
      %v2061 = vrot.slane %v2059, 4
      %v2062 = vrot.slane %v1943, 5
      %v2063 = vsel %vm926, %v2061, %v2062
      %v2064 = vrot.slane %v1944, 5
      %v2065 = vrot.slane %v2064, 4
      %v2066 = vrot.slane %v1945, 5
      %v2067 = vsel %vm926, %v2065, %v2066
      %v2068 = vrot.slane %v2066, 4
      %v2069 = vrot.slane %v1946, 5
      %v2070 = vsel %vm926, %v2068, %v2069
      %v2071 = vrot.slane %v1947, 5
      %v2072 = vrot.slane %v2071, 4
      %v2073 = vrot.slane %v1948, 5
      %v2074 = vsel %vm926, %v2072, %v2073
      %v2075 = vrot.slane %v2073, 4
      %v2076 = vrot.slane %v1949, 5
      %v2077 = vsel %vm926, %v2075, %v2076
      %v2078 = vrot.slane %v1950, 5
      %v2079 = vrot.slane %v2078, 4
      %v2080 = vrot.slane %v1951, 5
      %v2081 = vsel %vm926, %v2079, %v2080
      %v2082 = vrot.slane %v2080, 4
      %v2083 = vrot.slane %v1952, 5
      %v2084 = vsel %vm926, %v2082, %v2083
      %v2085 = vrot.slane %v1953, 5
      %v2086 = vrot.slane %v2085, 4
      %v2087 = vrot.slane %v1954, 5
      %v2088 = vsel %vm926, %v2086, %v2087
      %v2089 = vrot.slane %v2087, 4
      %v2090 = vrot.slane %v1955, 5
      %v2091 = vsel %vm926, %v2089, %v2090
      %v2092 = vrot.slane %v1956, 5
      %v2093 = vrot.slane %v2092, 4
      %v2094 = vrot.slane %v1957, 5
      %v2095 = vsel %vm926, %v2093, %v2094
      %v2096 = vrot.slane %v2094, 4
      %v2097 = vrot.slane %v1958, 5
      %v2098 = vsel %vm926, %v2096, %v2097
      %v2099 = vrot.slane %v1959, 5
      %v2100 = vrot.slane %v2099, 4
      %v2101 = vrot.slane %v1960, 5
      %v2102 = vsel %vm926, %v2100, %v2101
      %v2103 = vrot.slane %v2101, 4
      %v2104 = vrot.slane %v1961, 5
      %v2105 = vsel %vm926, %v2103, %v2104
      %v2106 = vrot.slane %v1962, 5
      %v2107 = vrot.slane %v2106, 4
      %v2108 = vrot.slane %v1963, 5
      %v2109 = vsel %vm926, %v2107, %v2108
      %v2110 = vrot.slane %v2108, 4
      %v2111 = vrot.slane %v1964, 5
      %v2112 = vsel %vm926, %v2110, %v2111
      %v2113 = vrot.slane %v1965, 5
      %v2114 = vrot.slane %v2113, 4
      %v2115 = vrot.slane %v1966, 5
      %v2116 = vsel %vm926, %v2114, %v2115
      %v2117 = vrot.slane %v2115, 4
      %v2118 = vrot.slane %v1967, 5
      %v2119 = vsel %vm926, %v2117, %v2118
      %v2120 = vrot.slane %v1968, 5
      %v2121 = vrot.slane %v2120, 4
      %v2122 = vrot.slane %v1969, 5
      %v2123 = vsel %vm926, %v2121, %v2122
      %v2124 = vrot.slane %v2122, 4
      %v2125 = vrot.slane %v1970, 5
      %v2126 = vsel %vm926, %v2124, %v2125
      %v2127 = vrot.slane %v1971, 5
      %v2128 = vrot.slane %v2127, 4
      %v2129 = vrot.slane %v1972, 5
      %v2130 = vsel %vm926, %v2128, %v2129
      %v2131 = vrot.slane %v2129, 4
      %v2132 = vrot.slane %v1973, 5
      %v2133 = vsel %vm926, %v2131, %v2132
      %2134 = vrot.lane.b32.xlu0 %v2025, 40
      %v2135 = vpop.permute.xlu0 %2134
      %2136 = vrot.lane.b32.xlu0 %v2028, 40
      %v2137 = vpop.permute.xlu0 %2136
      %2138 = vrot.lane.b32.xlu0 %v2032, 40
      %v2139 = vpop.permute.xlu0 %2138
      %2140 = vrot.lane.b32.xlu0 %v2035, 40
      %v2141 = vpop.permute.xlu0 %2140
      %2142 = vrot.lane.b32.xlu0 %v2039, 40
      %v2143 = vpop.permute.xlu0 %2142
      %2144 = vrot.lane.b32.xlu0 %v2042, 40
      %v2145 = vpop.permute.xlu0 %2144
      %2146 = vrot.lane.b32.xlu0 %v2046, 40
      %v2147 = vpop.permute.xlu0 %2146
      %2148 = vrot.lane.b32.xlu0 %v2049, 40
      %v2149 = vpop.permute.xlu0 %2148
      %2150 = vrot.lane.b32.xlu0 %v2053, 40
      %v2151 = vpop.permute.xlu0 %2150
      %2152 = vrot.lane.b32.xlu0 %v2056, 40
      %v2153 = vpop.permute.xlu0 %2152
      %2154 = vrot.lane.b32.xlu0 %v2060, 40
      %v2155 = vpop.permute.xlu0 %2154
      %2156 = vrot.lane.b32.xlu0 %v2063, 40
      %v2157 = vpop.permute.xlu0 %2156
      %2158 = vrot.lane.b32.xlu0 %v2067, 40
      %v2159 = vpop.permute.xlu0 %2158
      %2160 = vrot.lane.b32.xlu0 %v2070, 40
      %v2161 = vpop.permute.xlu0 %2160
      %2162 = vrot.lane.b32.xlu0 %v2074, 40
      %v2163 = vpop.permute.xlu0 %2162
      %2164 = vrot.lane.b32.xlu0 %v2077, 40
      %v2165 = vpop.permute.xlu0 %2164
      %2166 = vrot.lane.b32.xlu0 %v2081, 40
      %v2167 = vpop.permute.xlu0 %2166
      %2168 = vrot.lane.b32.xlu0 %v2084, 40
      %v2169 = vpop.permute.xlu0 %2168
      %2170 = vrot.lane.b32.xlu0 %v2088, 40
      %v2171 = vpop.permute.xlu0 %2170
      %2172 = vrot.lane.b32.xlu0 %v2091, 40
      %v2173 = vpop.permute.xlu0 %2172
      %2174 = vrot.lane.b32.xlu0 %v2095, 40
      %v2175 = vpop.permute.xlu0 %2174
      %2176 = vrot.lane.b32.xlu0 %v2098, 40
      %v2177 = vpop.permute.xlu0 %2176
      %2178 = vrot.lane.b32.xlu0 %v2102, 40
      %v2179 = vpop.permute.xlu0 %2178
      %2180 = vrot.lane.b32.xlu0 %v2105, 40
      %v2181 = vpop.permute.xlu0 %2180
      %2182 = vrot.lane.b32.xlu0 %v2109, 40
      %v2183 = vpop.permute.xlu0 %2182
      %2184 = vrot.lane.b32.xlu0 %v2112, 40
      %v2185 = vpop.permute.xlu0 %2184
      %2186 = vrot.lane.b32.xlu0 %v2116, 40
      %v2187 = vpop.permute.xlu0 %2186
      %2188 = vrot.lane.b32.xlu0 %v2119, 40
      %v2189 = vpop.permute.xlu0 %2188
      %2190 = vrot.lane.b32.xlu0 %v2123, 40
      %v2191 = vpop.permute.xlu0 %2190
      %2192 = vrot.lane.b32.xlu0 %v2126, 40
      %v2193 = vpop.permute.xlu0 %2192
      %2194 = vrot.lane.b32.xlu0 %v2130, 40
      %v2195 = vpop.permute.xlu0 %2194
      %2196 = vrot.lane.b32.xlu0 %v2133, 40
      %v2197 = vpop.permute.xlu0 %2196
      %vm2230 = vcmask 388416
      %2231 = vst.msk [vmem:[#allocation2] sm:$0xf] %vm2230, %v2135
      %2232 = vst.msk [vmem:[#allocation2 + $0x4] sm:$0xf] %vm2230, %v2137
      %2233 = vst.msk [vmem:[#allocation2 + $0x8] sm:$0xf] %vm2230, %v2139
      %2234 = vst.msk [vmem:[#allocation2 + $0xc] sm:$0xf] %vm2230, %v2141
      %2235 = vst.msk [vmem:[#allocation2 + $0x10] sm:$0xf] %vm2230, %v2143
      %2236 = vst.msk [vmem:[#allocation2 + $0x14] sm:$0xf] %vm2230, %v2145
      %2237 = vst.msk [vmem:[#allocation2 + $0x18] sm:$0xf] %vm2230, %v2147
      %2238 = vst.msk [vmem:[#allocation2 + $0x1c] sm:$0xf] %vm2230, %v2149
      %2239 = vst.msk [vmem:[#allocation2 + $0x20] sm:$0xf] %vm2230, %v2151
      %2240 = vst.msk [vmem:[#allocation2 + $0x24] sm:$0xf] %vm2230, %v2153
      %2241 = vst.msk [vmem:[#allocation2 + $0x28] sm:$0xf] %vm2230, %v2155
      %2242 = vst.msk [vmem:[#allocation2 + $0x2c] sm:$0xf] %vm2230, %v2157
      %2243 = vst.msk [vmem:[#allocation2 + $0x30] sm:$0xf] %vm2230, %v2159
      %2244 = vst.msk [vmem:[#allocation2 + $0x34] sm:$0xf] %vm2230, %v2161
      %2245 = vst.msk [vmem:[#allocation2 + $0x38] sm:$0xf] %vm2230, %v2163
      %2246 = vst.msk [vmem:[#allocation2 + $0x3c] sm:$0xf] %vm2230, %v2165
      %2247 = vst.msk [vmem:[#allocation2 + $0x40] sm:$0xf] %vm2230, %v2167
      %2248 = vst.msk [vmem:[#allocation2 + $0x44] sm:$0xf] %vm2230, %v2169
      %2249 = vst.msk [vmem:[#allocation2 + $0x48] sm:$0xf] %vm2230, %v2171
      %2250 = vst.msk [vmem:[#allocation2 + $0x4c] sm:$0xf] %vm2230, %v2173
      %2251 = vst.msk [vmem:[#allocation2 + $0x50] sm:$0xf] %vm2230, %v2175
      %2252 = vst.msk [vmem:[#allocation2 + $0x54] sm:$0xf] %vm2230, %v2177
      %2253 = vst.msk [vmem:[#allocation2 + $0x58] sm:$0xf] %vm2230, %v2179
      %2254 = vst.msk [vmem:[#allocation2 + $0x5c] sm:$0xf] %vm2230, %v2181
      %2255 = vst.msk [vmem:[#allocation2 + $0x60] sm:$0xf] %vm2230, %v2183
      %2256 = vst.msk [vmem:[#allocation2 + $0x64] sm:$0xf] %vm2230, %v2185
      %2257 = vst.msk [vmem:[#allocation2 + $0x68] sm:$0xf] %vm2230, %v2187
      %2258 = vst.msk [vmem:[#allocation2 + $0x6c] sm:$0xf] %vm2230, %v2189
      %2259 = vst.msk [vmem:[#allocation2 + $0x70] sm:$0xf] %vm2230, %v2191
      %2260 = vst.msk [vmem:[#allocation2 + $0x74] sm:$0xf] %vm2230, %v2193
      %2261 = vst.msk [vmem:[#allocation2 + $0x78] sm:$0xf] %vm2230, %v2195
      %2262 = vst.msk [vmem:[#allocation2 + $0x7c] sm:$0xf] %vm2230, %v2197
      %s2263 = sadd.s32 %s195, 2
      %s2264 = smul.u32 %s2263, 3
      %s2265 = smul.addr %s2264, 4
      %s2266 = scalar_lea.vmem %s183, %s2265
      %v2267 = vld [vmem:[%s2266] sm:$0xf]
      %v2268 = vld [vmem:[%s2266 + $0x4] sm:$0xf]
      %v2269 = vld [vmem:[%s2266 + $0xc] sm:$0xf]
      %v2270 = vld [vmem:[%s2266 + $0x10] sm:$0xf]
      %v2271 = vld [vmem:[%s2266 + $0x18] sm:$0xf]
      %v2272 = vld [vmem:[%s2266 + $0x1c] sm:$0xf]
      %v2273 = vld [vmem:[%s2266 + $0x24] sm:$0xf]
      %v2274 = vld [vmem:[%s2266 + $0x28] sm:$0xf]
      %v2275 = vld [vmem:[%s2266 + $0x30] sm:$0xf]
      %v2276 = vld [vmem:[%s2266 + $0x34] sm:$0xf]
      %v2277 = vld [vmem:[%s2266 + $0x3c] sm:$0xf]
      %v2278 = vld [vmem:[%s2266 + $0x40] sm:$0xf]
      %v2279 = vld [vmem:[%s2266 + $0x48] sm:$0xf]
      %v2280 = vld [vmem:[%s2266 + $0x4c] sm:$0xf]
      %v2281 = vld [vmem:[%s2266 + $0x54] sm:$0xf]
      %v2282 = vld [vmem:[%s2266 + $0x58] sm:$0xf]
      %v2283 = vld [vmem:[%s2266 + $0x60] sm:$0xf]
      %v2284 = vld [vmem:[%s2266 + $0x64] sm:$0xf]
      %v2285 = vld [vmem:[%s2266 + $0x6c] sm:$0xf]
      %v2286 = vld [vmem:[%s2266 + $0x70] sm:$0xf]
      %v2287 = vld [vmem:[%s2266 + $0x78] sm:$0xf]
      %v2288 = vld [vmem:[%s2266 + $0x7c] sm:$0xf]
      %v2289 = vld [vmem:[%s2266 + $0x84] sm:$0xf]
      %v2290 = vld [vmem:[%s2266 + $0x88] sm:$0xf]
      %v2291 = vld [vmem:[%s2266 + $0x90] sm:$0xf]
      %v2292 = vld [vmem:[%s2266 + $0x94] sm:$0xf]
      %v2293 = vld [vmem:[%s2266 + $0x9c] sm:$0xf]
      %v2294 = vld [vmem:[%s2266 + $0xa0] sm:$0xf]
      %v2295 = vld [vmem:[%s2266 + $0xa8] sm:$0xf]
      %v2296 = vld [vmem:[%s2266 + $0xac] sm:$0xf]
      %v2297 = vld [vmem:[%s2266 + $0xb4] sm:$0xf]
      %v2298 = vld [vmem:[%s2266 + $0xb8] sm:$0xf]
      %2331 = vrot.lane.b32.xlu0 %v2267, 48
      %v2332 = vpop.permute.xlu0 %2331
      %2333 = vrot.lane.b32.xlu0 %v2268, 48
      %v2334 = vpop.permute.xlu0 %2333
      %2335 = vrot.lane.b32.xlu0 %v2269, 48
      %v2336 = vpop.permute.xlu0 %2335
      %2337 = vrot.lane.b32.xlu0 %v2270, 48
      %v2338 = vpop.permute.xlu0 %2337
      %2339 = vrot.lane.b32.xlu0 %v2271, 48
      %v2340 = vpop.permute.xlu0 %2339
      %2341 = vrot.lane.b32.xlu0 %v2272, 48
      %v2342 = vpop.permute.xlu0 %2341
      %2343 = vrot.lane.b32.xlu0 %v2273, 48
      %v2344 = vpop.permute.xlu0 %2343
      %2345 = vrot.lane.b32.xlu0 %v2274, 48
      %v2346 = vpop.permute.xlu0 %2345
      %2347 = vrot.lane.b32.xlu0 %v2275, 48
      %v2348 = vpop.permute.xlu0 %2347
      %2349 = vrot.lane.b32.xlu0 %v2276, 48
      %v2350 = vpop.permute.xlu0 %2349
      %2351 = vrot.lane.b32.xlu0 %v2277, 48
      %v2352 = vpop.permute.xlu0 %2351
      %2353 = vrot.lane.b32.xlu0 %v2278, 48
      %v2354 = vpop.permute.xlu0 %2353
      %2355 = vrot.lane.b32.xlu0 %v2279, 48
      %v2356 = vpop.permute.xlu0 %2355
      %2357 = vrot.lane.b32.xlu0 %v2280, 48
      %v2358 = vpop.permute.xlu0 %2357
      %2359 = vrot.lane.b32.xlu0 %v2281, 48
      %v2360 = vpop.permute.xlu0 %2359
      %2361 = vrot.lane.b32.xlu0 %v2282, 48
      %v2362 = vpop.permute.xlu0 %2361
      %2363 = vrot.lane.b32.xlu0 %v2283, 48
      %v2364 = vpop.permute.xlu0 %2363
      %2365 = vrot.lane.b32.xlu0 %v2284, 48
      %v2366 = vpop.permute.xlu0 %2365
      %2367 = vrot.lane.b32.xlu0 %v2285, 48
      %v2368 = vpop.permute.xlu0 %2367
      %2369 = vrot.lane.b32.xlu0 %v2286, 48
      %v2370 = vpop.permute.xlu0 %2369
      %2371 = vrot.lane.b32.xlu0 %v2287, 48
      %v2372 = vpop.permute.xlu0 %2371
      %2373 = vrot.lane.b32.xlu0 %v2288, 48
      %v2374 = vpop.permute.xlu0 %2373
      %2375 = vrot.lane.b32.xlu0 %v2289, 48
      %v2376 = vpop.permute.xlu0 %2375
      %2377 = vrot.lane.b32.xlu0 %v2290, 48
      %v2378 = vpop.permute.xlu0 %2377
      %2379 = vrot.lane.b32.xlu0 %v2291, 48
      %v2380 = vpop.permute.xlu0 %2379
      %2381 = vrot.lane.b32.xlu0 %v2292, 48
      %v2382 = vpop.permute.xlu0 %2381
      %2383 = vrot.lane.b32.xlu0 %v2293, 48
      %v2384 = vpop.permute.xlu0 %2383
      %2385 = vrot.lane.b32.xlu0 %v2294, 48
      %v2386 = vpop.permute.xlu0 %2385
      %2387 = vrot.lane.b32.xlu0 %v2295, 48
      %v2388 = vpop.permute.xlu0 %2387
      %2389 = vrot.lane.b32.xlu0 %v2296, 48
      %v2390 = vpop.permute.xlu0 %2389
      %2391 = vrot.lane.b32.xlu0 %v2297, 48
      %v2392 = vpop.permute.xlu0 %2391
      %2393 = vrot.lane.b32.xlu0 %v2298, 48
      %v2394 = vpop.permute.xlu0 %2393
      %vm2427 = vcmask 454016
      %2428 = vst.msk [vmem:[#allocation2] sm:$0xf] %vm2427, %v2332
      %2429 = vst.msk [vmem:[#allocation2 + $0x4] sm:$0xf] %vm2427, %v2334
      %2430 = vst.msk [vmem:[#allocation2 + $0x8] sm:$0xf] %vm2427, %v2336
      %2431 = vst.msk [vmem:[#allocation2 + $0xc] sm:$0xf] %vm2427, %v2338
      %2432 = vst.msk [vmem:[#allocation2 + $0x10] sm:$0xf] %vm2427, %v2340
      %2433 = vst.msk [vmem:[#allocation2 + $0x14] sm:$0xf] %vm2427, %v2342
      %2434 = vst.msk [vmem:[#allocation2 + $0x18] sm:$0xf] %vm2427, %v2344
      %2435 = vst.msk [vmem:[#allocation2 + $0x1c] sm:$0xf] %vm2427, %v2346
      %2436 = vst.msk [vmem:[#allocation2 + $0x20] sm:$0xf] %vm2427, %v2348
      %2437 = vst.msk [vmem:[#allocation2 + $0x24] sm:$0xf] %vm2427, %v2350
      %2438 = vst.msk [vmem:[#allocation2 + $0x28] sm:$0xf] %vm2427, %v2352
      %2439 = vst.msk [vmem:[#allocation2 + $0x2c] sm:$0xf] %vm2427, %v2354
      %2440 = vst.msk [vmem:[#allocation2 + $0x30] sm:$0xf] %vm2427, %v2356
      %2441 = vst.msk [vmem:[#allocation2 + $0x34] sm:$0xf] %vm2427, %v2358
      %2442 = vst.msk [vmem:[#allocation2 + $0x38] sm:$0xf] %vm2427, %v2360
      %2443 = vst.msk [vmem:[#allocation2 + $0x3c] sm:$0xf] %vm2427, %v2362
      %2444 = vst.msk [vmem:[#allocation2 + $0x40] sm:$0xf] %vm2427, %v2364
      %2445 = vst.msk [vmem:[#allocation2 + $0x44] sm:$0xf] %vm2427, %v2366
      %2446 = vst.msk [vmem:[#allocation2 + $0x48] sm:$0xf] %vm2427, %v2368
      %2447 = vst.msk [vmem:[#allocation2 + $0x4c] sm:$0xf] %vm2427, %v2370
      %2448 = vst.msk [vmem:[#allocation2 + $0x50] sm:$0xf] %vm2427, %v2372
      %2449 = vst.msk [vmem:[#allocation2 + $0x54] sm:$0xf] %vm2427, %v2374
      %2450 = vst.msk [vmem:[#allocation2 + $0x58] sm:$0xf] %vm2427, %v2376
      %2451 = vst.msk [vmem:[#allocation2 + $0x5c] sm:$0xf] %vm2427, %v2378
      %2452 = vst.msk [vmem:[#allocation2 + $0x60] sm:$0xf] %vm2427, %v2380
      %2453 = vst.msk [vmem:[#allocation2 + $0x64] sm:$0xf] %vm2427, %v2382
      %2454 = vst.msk [vmem:[#allocation2 + $0x68] sm:$0xf] %vm2427, %v2384
      %2455 = vst.msk [vmem:[#allocation2 + $0x6c] sm:$0xf] %vm2427, %v2386
      %2456 = vst.msk [vmem:[#allocation2 + $0x70] sm:$0xf] %vm2427, %v2388
      %2457 = vst.msk [vmem:[#allocation2 + $0x74] sm:$0xf] %vm2427, %v2390
      %2458 = vst.msk [vmem:[#allocation2 + $0x78] sm:$0xf] %vm2427, %v2392
      %2459 = vst.msk [vmem:[#allocation2 + $0x7c] sm:$0xf] %vm2427, %v2394
      %v2460 = vld [vmem:[%s2266] sm:$0xf]
      %v2461 = vld [vmem:[%s2266 + $0x4] sm:$0xf]
      %v2462 = vld [vmem:[%s2266 + $0x8] sm:$0x1]
      %v2463 = vld [vmem:[%s2266 + $0xc] sm:$0xf]
      %v2464 = vld [vmem:[%s2266 + $0x10] sm:$0xf]
      %v2465 = vld [vmem:[%s2266 + $0x14] sm:$0x1]
      %v2466 = vld [vmem:[%s2266 + $0x18] sm:$0xf]
      %v2467 = vld [vmem:[%s2266 + $0x1c] sm:$0xf]
      %v2468 = vld [vmem:[%s2266 + $0x20] sm:$0x1]
      %v2469 = vld [vmem:[%s2266 + $0x24] sm:$0xf]
      %v2470 = vld [vmem:[%s2266 + $0x28] sm:$0xf]
      %v2471 = vld [vmem:[%s2266 + $0x2c] sm:$0x1]
      %v2472 = vld [vmem:[%s2266 + $0x30] sm:$0xf]
      %v2473 = vld [vmem:[%s2266 + $0x34] sm:$0xf]
      %v2474 = vld [vmem:[%s2266 + $0x38] sm:$0x1]
      %v2475 = vld [vmem:[%s2266 + $0x3c] sm:$0xf]
      %v2476 = vld [vmem:[%s2266 + $0x40] sm:$0xf]
      %v2477 = vld [vmem:[%s2266 + $0x44] sm:$0x1]
      %v2478 = vld [vmem:[%s2266 + $0x48] sm:$0xf]
      %v2479 = vld [vmem:[%s2266 + $0x4c] sm:$0xf]
      %v2480 = vld [vmem:[%s2266 + $0x50] sm:$0x1]
      %v2481 = vld [vmem:[%s2266 + $0x54] sm:$0xf]
      %v2482 = vld [vmem:[%s2266 + $0x58] sm:$0xf]
      %v2483 = vld [vmem:[%s2266 + $0x5c] sm:$0x1]
      %v2484 = vld [vmem:[%s2266 + $0x60] sm:$0xf]
      %v2485 = vld [vmem:[%s2266 + $0x64] sm:$0xf]
      %v2486 = vld [vmem:[%s2266 + $0x68] sm:$0x1]
      %v2487 = vld [vmem:[%s2266 + $0x6c] sm:$0xf]
      %v2488 = vld [vmem:[%s2266 + $0x70] sm:$0xf]
      %v2489 = vld [vmem:[%s2266 + $0x74] sm:$0x1]
      %v2490 = vld [vmem:[%s2266 + $0x78] sm:$0xf]
      %v2491 = vld [vmem:[%s2266 + $0x7c] sm:$0xf]
      %v2492 = vld [vmem:[%s2266 + $0x80] sm:$0x1]
      %v2493 = vld [vmem:[%s2266 + $0x84] sm:$0xf]
      %v2494 = vld [vmem:[%s2266 + $0x88] sm:$0xf]
      %v2495 = vld [vmem:[%s2266 + $0x8c] sm:$0x1]
      %v2496 = vld [vmem:[%s2266 + $0x90] sm:$0xf]
      %v2497 = vld [vmem:[%s2266 + $0x94] sm:$0xf]
      %v2498 = vld [vmem:[%s2266 + $0x98] sm:$0x1]
      %v2499 = vld [vmem:[%s2266 + $0x9c] sm:$0xf]
      %v2500 = vld [vmem:[%s2266 + $0xa0] sm:$0xf]
      %v2501 = vld [vmem:[%s2266 + $0xa4] sm:$0x1]
      %v2502 = vld [vmem:[%s2266 + $0xa8] sm:$0xf]
      %v2503 = vld [vmem:[%s2266 + $0xac] sm:$0xf]
      %v2504 = vld [vmem:[%s2266 + $0xb0] sm:$0x1]
      %v2505 = vld [vmem:[%s2266 + $0xb4] sm:$0xf]
      %v2506 = vld [vmem:[%s2266 + $0xb8] sm:$0xf]
      %v2507 = vld [vmem:[%s2266 + $0xbc] sm:$0x1]
      %v2509 = vshrl.u32 %v2460, 16
      %v2511 = vrot.slane %v2509, 4
      %v2512 = vshll.u32 %v2460, 16
      %v2514 = vrot.slane %v2512, 5
      %v2515 = vor.u32 %v2511, %v2514
      %v2516 = vrot.slane %v2515, 4
      %v2518 = vshll.u32 %v2461, 16
      %v2520 = vrot.slane %v2518, 5
      %v2521 = vsel %vm314, %v2516, %v2520
      %v2522 = vshrl.u32 %v2461, 16
      %v2524 = vrot.slane %v2522, 4
      %v2525 = vor.u32 %v2524, %v2520
      %v2526 = vrot.slane %v2525, 4
      %v2528 = vshll.u32 %v2462, 16
      %v2530 = vrot.slane %v2528, 5
      %v2531 = vsel %vm314, %v2526, %v2530
      %v2533 = vshrl.u32 %v2463, 16
      %v2535 = vrot.slane %v2533, 4
      %v2536 = vshll.u32 %v2463, 16
      %v2538 = vrot.slane %v2536, 5
      %v2539 = vor.u32 %v2535, %v2538
      %v2540 = vrot.slane %v2539, 4
      %v2542 = vshll.u32 %v2464, 16
      %v2544 = vrot.slane %v2542, 5
      %v2545 = vsel %vm314, %v2540, %v2544
      %v2546 = vshrl.u32 %v2464, 16
      %v2548 = vrot.slane %v2546, 4
      %v2549 = vor.u32 %v2548, %v2544
      %v2550 = vrot.slane %v2549, 4
      %v2552 = vshll.u32 %v2465, 16
      %v2554 = vrot.slane %v2552, 5
      %v2555 = vsel %vm314, %v2550, %v2554
      %v2557 = vshrl.u32 %v2466, 16
      %v2559 = vrot.slane %v2557, 4
      %v2560 = vshll.u32 %v2466, 16
      %v2562 = vrot.slane %v2560, 5
      %v2563 = vor.u32 %v2559, %v2562
      %v2564 = vrot.slane %v2563, 4
      %v2566 = vshll.u32 %v2467, 16
      %v2568 = vrot.slane %v2566, 5
      %v2569 = vsel %vm314, %v2564, %v2568
      %v2570 = vshrl.u32 %v2467, 16
      %v2572 = vrot.slane %v2570, 4
      %v2573 = vor.u32 %v2572, %v2568
      %v2574 = vrot.slane %v2573, 4
      %v2576 = vshll.u32 %v2468, 16
      %v2578 = vrot.slane %v2576, 5
      %v2579 = vsel %vm314, %v2574, %v2578
      %v2581 = vshrl.u32 %v2469, 16
      %v2583 = vrot.slane %v2581, 4
      %v2584 = vshll.u32 %v2469, 16
      %v2586 = vrot.slane %v2584, 5
      %v2587 = vor.u32 %v2583, %v2586
      %v2588 = vrot.slane %v2587, 4
      %v2590 = vshll.u32 %v2470, 16
      %v2592 = vrot.slane %v2590, 5
      %v2593 = vsel %vm314, %v2588, %v2592
      %v2594 = vshrl.u32 %v2470, 16
      %v2596 = vrot.slane %v2594, 4
      %v2597 = vor.u32 %v2596, %v2592
      %v2598 = vrot.slane %v2597, 4
      %v2600 = vshll.u32 %v2471, 16
      %v2602 = vrot.slane %v2600, 5
      %v2603 = vsel %vm314, %v2598, %v2602
      %v2605 = vshrl.u32 %v2472, 16
      %v2607 = vrot.slane %v2605, 4
      %v2608 = vshll.u32 %v2472, 16
      %v2610 = vrot.slane %v2608, 5
      %v2611 = vor.u32 %v2607, %v2610
      %v2612 = vrot.slane %v2611, 4
      %v2614 = vshll.u32 %v2473, 16
      %v2616 = vrot.slane %v2614, 5
      %v2617 = vsel %vm314, %v2612, %v2616
      %v2618 = vshrl.u32 %v2473, 16
      %v2620 = vrot.slane %v2618, 4
      %v2621 = vor.u32 %v2620, %v2616
      %v2622 = vrot.slane %v2621, 4
      %v2624 = vshll.u32 %v2474, 16
      %v2626 = vrot.slane %v2624, 5
      %v2627 = vsel %vm314, %v2622, %v2626
      %v2629 = vshrl.u32 %v2475, 16
      %v2631 = vrot.slane %v2629, 4
      %v2632 = vshll.u32 %v2475, 16
      %v2634 = vrot.slane %v2632, 5
      %v2635 = vor.u32 %v2631, %v2634
      %v2636 = vrot.slane %v2635, 4
      %v2638 = vshll.u32 %v2476, 16
      %v2640 = vrot.slane %v2638, 5
      %v2641 = vsel %vm314, %v2636, %v2640
      %v2642 = vshrl.u32 %v2476, 16
      %v2644 = vrot.slane %v2642, 4
      %v2645 = vor.u32 %v2644, %v2640
      %v2646 = vrot.slane %v2645, 4
      %v2648 = vshll.u32 %v2477, 16
      %v2650 = vrot.slane %v2648, 5
      %v2651 = vsel %vm314, %v2646, %v2650
      %v2653 = vshrl.u32 %v2478, 16
      %v2655 = vrot.slane %v2653, 4
      %v2656 = vshll.u32 %v2478, 16
      %v2658 = vrot.slane %v2656, 5
      %v2659 = vor.u32 %v2655, %v2658
      %v2660 = vrot.slane %v2659, 4
      %v2662 = vshll.u32 %v2479, 16
      %v2664 = vrot.slane %v2662, 5
      %v2665 = vsel %vm314, %v2660, %v2664
      %v2666 = vshrl.u32 %v2479, 16
      %v2668 = vrot.slane %v2666, 4
      %v2669 = vor.u32 %v2668, %v2664
      %v2670 = vrot.slane %v2669, 4
      %v2672 = vshll.u32 %v2480, 16
      %v2674 = vrot.slane %v2672, 5
      %v2675 = vsel %vm314, %v2670, %v2674
      %v2677 = vshrl.u32 %v2481, 16
      %v2679 = vrot.slane %v2677, 4
      %v2680 = vshll.u32 %v2481, 16
      %v2682 = vrot.slane %v2680, 5
      %v2683 = vor.u32 %v2679, %v2682
      %v2684 = vrot.slane %v2683, 4
      %v2686 = vshll.u32 %v2482, 16
      %v2688 = vrot.slane %v2686, 5
      %v2689 = vsel %vm314, %v2684, %v2688
      %v2690 = vshrl.u32 %v2482, 16
      %v2692 = vrot.slane %v2690, 4
      %v2693 = vor.u32 %v2692, %v2688
      %v2694 = vrot.slane %v2693, 4
      %v2696 = vshll.u32 %v2483, 16
      %v2698 = vrot.slane %v2696, 5
      %v2699 = vsel %vm314, %v2694, %v2698
      %v2701 = vshrl.u32 %v2484, 16
      %v2703 = vrot.slane %v2701, 4
      %v2704 = vshll.u32 %v2484, 16
      %v2706 = vrot.slane %v2704, 5
      %v2707 = vor.u32 %v2703, %v2706
      %v2708 = vrot.slane %v2707, 4
      %v2710 = vshll.u32 %v2485, 16
      %v2712 = vrot.slane %v2710, 5
      %v2713 = vsel %vm314, %v2708, %v2712
      %v2714 = vshrl.u32 %v2485, 16
      %v2716 = vrot.slane %v2714, 4
      %v2717 = vor.u32 %v2716, %v2712
      %v2718 = vrot.slane %v2717, 4
      %v2720 = vshll.u32 %v2486, 16
      %v2722 = vrot.slane %v2720, 5
      %v2723 = vsel %vm314, %v2718, %v2722
      %v2725 = vshrl.u32 %v2487, 16
      %v2727 = vrot.slane %v2725, 4
      %v2728 = vshll.u32 %v2487, 16
      %v2730 = vrot.slane %v2728, 5
      %v2731 = vor.u32 %v2727, %v2730
      %v2732 = vrot.slane %v2731, 4
      %v2734 = vshll.u32 %v2488, 16
      %v2736 = vrot.slane %v2734, 5
      %v2737 = vsel %vm314, %v2732, %v2736
      %v2738 = vshrl.u32 %v2488, 16
      %v2740 = vrot.slane %v2738, 4
      %v2741 = vor.u32 %v2740, %v2736
      %v2742 = vrot.slane %v2741, 4
      %v2744 = vshll.u32 %v2489, 16
      %v2746 = vrot.slane %v2744, 5
      %v2747 = vsel %vm314, %v2742, %v2746
      %v2749 = vshrl.u32 %v2490, 16
      %v2751 = vrot.slane %v2749, 4
      %v2752 = vshll.u32 %v2490, 16
      %v2754 = vrot.slane %v2752, 5
      %v2755 = vor.u32 %v2751, %v2754
      %v2756 = vrot.slane %v2755, 4
      %v2758 = vshll.u32 %v2491, 16
      %v2760 = vrot.slane %v2758, 5
      %v2761 = vsel %vm314, %v2756, %v2760
      %v2762 = vshrl.u32 %v2491, 16
      %v2764 = vrot.slane %v2762, 4
      %v2765 = vor.u32 %v2764, %v2760
      %v2766 = vrot.slane %v2765, 4
      %v2768 = vshll.u32 %v2492, 16
      %v2770 = vrot.slane %v2768, 5
      %v2771 = vsel %vm314, %v2766, %v2770
      %v2773 = vshrl.u32 %v2493, 16
      %v2775 = vrot.slane %v2773, 4
      %v2776 = vshll.u32 %v2493, 16
      %v2778 = vrot.slane %v2776, 5
      %v2779 = vor.u32 %v2775, %v2778
      %v2780 = vrot.slane %v2779, 4
      %v2782 = vshll.u32 %v2494, 16
      %v2784 = vrot.slane %v2782, 5
      %v2785 = vsel %vm314, %v2780, %v2784
      %v2786 = vshrl.u32 %v2494, 16
      %v2788 = vrot.slane %v2786, 4
      %v2789 = vor.u32 %v2788, %v2784
      %v2790 = vrot.slane %v2789, 4
      %v2792 = vshll.u32 %v2495, 16
      %v2794 = vrot.slane %v2792, 5
      %v2795 = vsel %vm314, %v2790, %v2794
      %v2797 = vshrl.u32 %v2496, 16
      %v2799 = vrot.slane %v2797, 4
      %v2800 = vshll.u32 %v2496, 16
      %v2802 = vrot.slane %v2800, 5
      %v2803 = vor.u32 %v2799, %v2802
      %v2804 = vrot.slane %v2803, 4
      %v2806 = vshll.u32 %v2497, 16
      %v2808 = vrot.slane %v2806, 5
      %v2809 = vsel %vm314, %v2804, %v2808
      %v2810 = vshrl.u32 %v2497, 16
      %v2812 = vrot.slane %v2810, 4
      %v2813 = vor.u32 %v2812, %v2808
      %v2814 = vrot.slane %v2813, 4
      %v2816 = vshll.u32 %v2498, 16
      %v2818 = vrot.slane %v2816, 5
      %v2819 = vsel %vm314, %v2814, %v2818
      %v2821 = vshrl.u32 %v2499, 16
      %v2823 = vrot.slane %v2821, 4
      %v2824 = vshll.u32 %v2499, 16
      %v2826 = vrot.slane %v2824, 5
      %v2827 = vor.u32 %v2823, %v2826
      %v2828 = vrot.slane %v2827, 4
      %v2830 = vshll.u32 %v2500, 16
      %v2832 = vrot.slane %v2830, 5
      %v2833 = vsel %vm314, %v2828, %v2832
      %v2834 = vshrl.u32 %v2500, 16
      %v2836 = vrot.slane %v2834, 4
      %v2837 = vor.u32 %v2836, %v2832
      %v2838 = vrot.slane %v2837, 4
      %v2840 = vshll.u32 %v2501, 16
      %v2842 = vrot.slane %v2840, 5
      %v2843 = vsel %vm314, %v2838, %v2842
      %v2845 = vshrl.u32 %v2502, 16
      %v2847 = vrot.slane %v2845, 4
      %v2848 = vshll.u32 %v2502, 16
      %v2850 = vrot.slane %v2848, 5
      %v2851 = vor.u32 %v2847, %v2850
      %v2852 = vrot.slane %v2851, 4
      %v2854 = vshll.u32 %v2503, 16
      %v2856 = vrot.slane %v2854, 5
      %v2857 = vsel %vm314, %v2852, %v2856
      %v2858 = vshrl.u32 %v2503, 16
      %v2860 = vrot.slane %v2858, 4
      %v2861 = vor.u32 %v2860, %v2856
      %v2862 = vrot.slane %v2861, 4
      %v2864 = vshll.u32 %v2504, 16
      %v2866 = vrot.slane %v2864, 5
      %v2867 = vsel %vm314, %v2862, %v2866
      %v2869 = vshrl.u32 %v2505, 16
      %v2871 = vrot.slane %v2869, 4
      %v2872 = vshll.u32 %v2505, 16
      %v2874 = vrot.slane %v2872, 5
      %v2875 = vor.u32 %v2871, %v2874
      %v2876 = vrot.slane %v2875, 4
      %v2878 = vshll.u32 %v2506, 16
      %v2880 = vrot.slane %v2878, 5
      %v2881 = vsel %vm314, %v2876, %v2880
      %v2882 = vshrl.u32 %v2506, 16
      %v2884 = vrot.slane %v2882, 4
      %v2885 = vor.u32 %v2884, %v2880
      %v2886 = vrot.slane %v2885, 4
      %v2888 = vshll.u32 %v2507, 16
      %v2890 = vrot.slane %v2888, 5
      %v2891 = vsel %vm314, %v2886, %v2890
      %2892 = vrot.lane.b32.xlu0 %v2521, 56
      %v2893 = vpop.permute.xlu0 %2892
      %2894 = vrot.lane.b32.xlu0 %v2531, 56
      %v2895 = vpop.permute.xlu0 %2894
      %2896 = vrot.lane.b32.xlu0 %v2545, 56
      %v2897 = vpop.permute.xlu0 %2896
      %2898 = vrot.lane.b32.xlu0 %v2555, 56
      %v2899 = vpop.permute.xlu0 %2898
      %2900 = vrot.lane.b32.xlu0 %v2569, 56
      %v2901 = vpop.permute.xlu0 %2900
      %2902 = vrot.lane.b32.xlu0 %v2579, 56
      %v2903 = vpop.permute.xlu0 %2902
      %2904 = vrot.lane.b32.xlu0 %v2593, 56
      %v2905 = vpop.permute.xlu0 %2904
      %2906 = vrot.lane.b32.xlu0 %v2603, 56
      %v2907 = vpop.permute.xlu0 %2906
      %2908 = vrot.lane.b32.xlu0 %v2617, 56
      %v2909 = vpop.permute.xlu0 %2908
      %2910 = vrot.lane.b32.xlu0 %v2627, 56
      %v2911 = vpop.permute.xlu0 %2910
      %2912 = vrot.lane.b32.xlu0 %v2641, 56
      %v2913 = vpop.permute.xlu0 %2912
      %2914 = vrot.lane.b32.xlu0 %v2651, 56
      %v2915 = vpop.permute.xlu0 %2914
      %2916 = vrot.lane.b32.xlu0 %v2665, 56
      %v2917 = vpop.permute.xlu0 %2916
      %2918 = vrot.lane.b32.xlu0 %v2675, 56
      %v2919 = vpop.permute.xlu0 %2918
      %2920 = vrot.lane.b32.xlu0 %v2689, 56
      %v2921 = vpop.permute.xlu0 %2920
      %2922 = vrot.lane.b32.xlu0 %v2699, 56
      %v2923 = vpop.permute.xlu0 %2922
      %2924 = vrot.lane.b32.xlu0 %v2713, 56
      %v2925 = vpop.permute.xlu0 %2924
      %2926 = vrot.lane.b32.xlu0 %v2723, 56
      %v2927 = vpop.permute.xlu0 %2926
      %2928 = vrot.lane.b32.xlu0 %v2737, 56
      %v2929 = vpop.permute.xlu0 %2928
      %2930 = vrot.lane.b32.xlu0 %v2747, 56
      %v2931 = vpop.permute.xlu0 %2930
      %2932 = vrot.lane.b32.xlu0 %v2761, 56
      %v2933 = vpop.permute.xlu0 %2932
      %2934 = vrot.lane.b32.xlu0 %v2771, 56
      %v2935 = vpop.permute.xlu0 %2934
      %2936 = vrot.lane.b32.xlu0 %v2785, 56
      %v2937 = vpop.permute.xlu0 %2936
      %2938 = vrot.lane.b32.xlu0 %v2795, 56
      %v2939 = vpop.permute.xlu0 %2938
      %2940 = vrot.lane.b32.xlu0 %v2809, 56
      %v2941 = vpop.permute.xlu0 %2940
      %2942 = vrot.lane.b32.xlu0 %v2819, 56
      %v2943 = vpop.permute.xlu0 %2942
      %2944 = vrot.lane.b32.xlu0 %v2833, 56
      %v2945 = vpop.permute.xlu0 %2944
      %2946 = vrot.lane.b32.xlu0 %v2843, 56
      %v2947 = vpop.permute.xlu0 %2946
      %2948 = vrot.lane.b32.xlu0 %v2857, 56
      %v2949 = vpop.permute.xlu0 %2948
      %2950 = vrot.lane.b32.xlu0 %v2867, 56
      %v2951 = vpop.permute.xlu0 %2950
      %2952 = vrot.lane.b32.xlu0 %v2881, 56
      %v2953 = vpop.permute.xlu0 %2952
      %2954 = vrot.lane.b32.xlu0 %v2891, 56
      %v2955 = vpop.permute.xlu0 %2954
      %vm2988 = vcmask 519616
      %2989 = vst.msk [vmem:[#allocation2] sm:$0xf] %vm2988, %v2893
      %2990 = vst.msk [vmem:[#allocation2 + $0x4] sm:$0xf] %vm2988, %v2895
      %2991 = vst.msk [vmem:[#allocation2 + $0x8] sm:$0xf] %vm2988, %v2897
      %2992 = vst.msk [vmem:[#allocation2 + $0xc] sm:$0xf] %vm2988, %v2899
      %2993 = vst.msk [vmem:[#allocation2 + $0x10] sm:$0xf] %vm2988, %v2901
      %2994 = vst.msk [vmem:[#allocation2 + $0x14] sm:$0xf] %vm2988, %v2903
      %2995 = vst.msk [vmem:[#allocation2 + $0x18] sm:$0xf] %vm2988, %v2905
      %2996 = vst.msk [vmem:[#allocation2 + $0x1c] sm:$0xf] %vm2988, %v2907
      %2997 = vst.msk [vmem:[#allocation2 + $0x20] sm:$0xf] %vm2988, %v2909
      %2998 = vst.msk [vmem:[#allocation2 + $0x24] sm:$0xf] %vm2988, %v2911
      %2999 = vst.msk [vmem:[#allocation2 + $0x28] sm:$0xf] %vm2988, %v2913
      %3000 = vst.msk [vmem:[#allocation2 + $0x2c] sm:$0xf] %vm2988, %v2915
      %3001 = vst.msk [vmem:[#allocation2 + $0x30] sm:$0xf] %vm2988, %v2917
      %3002 = vst.msk [vmem:[#allocation2 + $0x34] sm:$0xf] %vm2988, %v2919
      %3003 = vst.msk [vmem:[#allocation2 + $0x38] sm:$0xf] %vm2988, %v2921
      %3004 = vst.msk [vmem:[#allocation2 + $0x3c] sm:$0xf] %vm2988, %v2923
      %3005 = vst.msk [vmem:[#allocation2 + $0x40] sm:$0xf] %vm2988, %v2925
      %3006 = vst.msk [vmem:[#allocation2 + $0x44] sm:$0xf] %vm2988, %v2927
      %3007 = vst.msk [vmem:[#allocation2 + $0x48] sm:$0xf] %vm2988, %v2929
      %3008 = vst.msk [vmem:[#allocation2 + $0x4c] sm:$0xf] %vm2988, %v2931
      %3009 = vst.msk [vmem:[#allocation2 + $0x50] sm:$0xf] %vm2988, %v2933
      %3010 = vst.msk [vmem:[#allocation2 + $0x54] sm:$0xf] %vm2988, %v2935
      %3011 = vst.msk [vmem:[#allocation2 + $0x58] sm:$0xf] %vm2988, %v2937
      %3012 = vst.msk [vmem:[#allocation2 + $0x5c] sm:$0xf] %vm2988, %v2939
      %3013 = vst.msk [vmem:[#allocation2 + $0x60] sm:$0xf] %vm2988, %v2941
      %3014 = vst.msk [vmem:[#allocation2 + $0x64] sm:$0xf] %vm2988, %v2943
      %3015 = vst.msk [vmem:[#allocation2 + $0x68] sm:$0xf] %vm2988, %v2945
      %3016 = vst.msk [vmem:[#allocation2 + $0x6c] sm:$0xf] %vm2988, %v2947
      %3017 = vst.msk [vmem:[#allocation2 + $0x70] sm:$0xf] %vm2988, %v2949
      %3018 = vst.msk [vmem:[#allocation2 + $0x74] sm:$0xf] %vm2988, %v2951
      %3019 = vst.msk [vmem:[#allocation2 + $0x78] sm:$0xf] %vm2988, %v2953
      %3020 = vst.msk [vmem:[#allocation2 + $0x7c] sm:$0xf] %vm2988, %v2955
      %v3021 = vld [vmem:[%s2266] sm:$0xe]
      %v3022 = vld [vmem:[%s2266 + $0x4] sm:$0xf]
      %v3023 = vld [vmem:[%s2266 + $0x8] sm:$0x1]
      %v3024 = vld [vmem:[%s2266 + $0xc] sm:$0xe]
      %v3025 = vld [vmem:[%s2266 + $0x10] sm:$0xf]
      %v3026 = vld [vmem:[%s2266 + $0x14] sm:$0x1]
      %v3027 = vld [vmem:[%s2266 + $0x18] sm:$0xe]
      %v3028 = vld [vmem:[%s2266 + $0x1c] sm:$0xf]
      %v3029 = vld [vmem:[%s2266 + $0x20] sm:$0x1]
      %v3030 = vld [vmem:[%s2266 + $0x24] sm:$0xe]
      %v3031 = vld [vmem:[%s2266 + $0x28] sm:$0xf]
      %v3032 = vld [vmem:[%s2266 + $0x2c] sm:$0x1]
      %v3033 = vld [vmem:[%s2266 + $0x30] sm:$0xe]
      %v3034 = vld [vmem:[%s2266 + $0x34] sm:$0xf]
      %v3035 = vld [vmem:[%s2266 + $0x38] sm:$0x1]
      %v3036 = vld [vmem:[%s2266 + $0x3c] sm:$0xe]
      %v3037 = vld [vmem:[%s2266 + $0x40] sm:$0xf]
      %v3038 = vld [vmem:[%s2266 + $0x44] sm:$0x1]
      %v3039 = vld [vmem:[%s2266 + $0x48] sm:$0xe]
      %v3040 = vld [vmem:[%s2266 + $0x4c] sm:$0xf]
      %v3041 = vld [vmem:[%s2266 + $0x50] sm:$0x1]
      %v3042 = vld [vmem:[%s2266 + $0x54] sm:$0xe]
      %v3043 = vld [vmem:[%s2266 + $0x58] sm:$0xf]
      %v3044 = vld [vmem:[%s2266 + $0x5c] sm:$0x1]
      %v3045 = vld [vmem:[%s2266 + $0x60] sm:$0xe]
      %v3046 = vld [vmem:[%s2266 + $0x64] sm:$0xf]
      %v3047 = vld [vmem:[%s2266 + $0x68] sm:$0x1]
      %v3048 = vld [vmem:[%s2266 + $0x6c] sm:$0xe]
      %v3049 = vld [vmem:[%s2266 + $0x70] sm:$0xf]
      %v3050 = vld [vmem:[%s2266 + $0x74] sm:$0x1]
      %v3051 = vld [vmem:[%s2266 + $0x78] sm:$0xe]
      %v3052 = vld [vmem:[%s2266 + $0x7c] sm:$0xf]
      %v3053 = vld [vmem:[%s2266 + $0x80] sm:$0x1]
      %v3054 = vld [vmem:[%s2266 + $0x84] sm:$0xe]
      %v3055 = vld [vmem:[%s2266 + $0x88] sm:$0xf]
      %v3056 = vld [vmem:[%s2266 + $0x8c] sm:$0x1]
      %v3057 = vld [vmem:[%s2266 + $0x90] sm:$0xe]
      %v3058 = vld [vmem:[%s2266 + $0x94] sm:$0xf]
      %v3059 = vld [vmem:[%s2266 + $0x98] sm:$0x1]
      %v3060 = vld [vmem:[%s2266 + $0x9c] sm:$0xe]
      %v3061 = vld [vmem:[%s2266 + $0xa0] sm:$0xf]
      %v3062 = vld [vmem:[%s2266 + $0xa4] sm:$0x1]
      %v3063 = vld [vmem:[%s2266 + $0xa8] sm:$0xe]
      %v3064 = vld [vmem:[%s2266 + $0xac] sm:$0xf]
      %v3065 = vld [vmem:[%s2266 + $0xb0] sm:$0x1]
      %v3066 = vld [vmem:[%s2266 + $0xb4] sm:$0xe]
      %v3067 = vld [vmem:[%s2266 + $0xb8] sm:$0xf]
      %v3068 = vld [vmem:[%s2266 + $0xbc] sm:$0x1]
      %v3117 = vrot.slane %v3021, 5
      %v3118 = vrot.slane %v3117, 4
      %v3119 = vrot.slane %v3022, 5
      %v3120 = vsel %vm926, %v3118, %v3119
      %v3121 = vrot.slane %v3119, 4
      %v3122 = vrot.slane %v3023, 5
      %v3123 = vsel %vm926, %v3121, %v3122
      %v3124 = vrot.slane %v3024, 5
      %v3125 = vrot.slane %v3124, 4
      %v3126 = vrot.slane %v3025, 5
      %v3127 = vsel %vm926, %v3125, %v3126
      %v3128 = vrot.slane %v3126, 4
      %v3129 = vrot.slane %v3026, 5
      %v3130 = vsel %vm926, %v3128, %v3129
      %v3131 = vrot.slane %v3027, 5
      %v3132 = vrot.slane %v3131, 4
      %v3133 = vrot.slane %v3028, 5
      %v3134 = vsel %vm926, %v3132, %v3133
      %v3135 = vrot.slane %v3133, 4
      %v3136 = vrot.slane %v3029, 5
      %v3137 = vsel %vm926, %v3135, %v3136
      %v3138 = vrot.slane %v3030, 5
      %v3139 = vrot.slane %v3138, 4
      %v3140 = vrot.slane %v3031, 5
      %v3141 = vsel %vm926, %v3139, %v3140
      %v3142 = vrot.slane %v3140, 4
      %v3143 = vrot.slane %v3032, 5
      %v3144 = vsel %vm926, %v3142, %v3143
      %v3145 = vrot.slane %v3033, 5
      %v3146 = vrot.slane %v3145, 4
      %v3147 = vrot.slane %v3034, 5
      %v3148 = vsel %vm926, %v3146, %v3147
      %v3149 = vrot.slane %v3147, 4
      %v3150 = vrot.slane %v3035, 5
      %v3151 = vsel %vm926, %v3149, %v3150
      %v3152 = vrot.slane %v3036, 5
      %v3153 = vrot.slane %v3152, 4
      %v3154 = vrot.slane %v3037, 5
      %v3155 = vsel %vm926, %v3153, %v3154
      %v3156 = vrot.slane %v3154, 4
      %v3157 = vrot.slane %v3038, 5
      %v3158 = vsel %vm926, %v3156, %v3157
      %v3159 = vrot.slane %v3039, 5
      %v3160 = vrot.slane %v3159, 4
      %v3161 = vrot.slane %v3040, 5
      %v3162 = vsel %vm926, %v3160, %v3161
      %v3163 = vrot.slane %v3161, 4
      %v3164 = vrot.slane %v3041, 5
      %v3165 = vsel %vm926, %v3163, %v3164
      %v3166 = vrot.slane %v3042, 5
      %v3167 = vrot.slane %v3166, 4
      %v3168 = vrot.slane %v3043, 5
      %v3169 = vsel %vm926, %v3167, %v3168
      %v3170 = vrot.slane %v3168, 4
      %v3171 = vrot.slane %v3044, 5
      %v3172 = vsel %vm926, %v3170, %v3171
      %v3173 = vrot.slane %v3045, 5
      %v3174 = vrot.slane %v3173, 4
      %v3175 = vrot.slane %v3046, 5
      %v3176 = vsel %vm926, %v3174, %v3175
      %v3177 = vrot.slane %v3175, 4
      %v3178 = vrot.slane %v3047, 5
      %v3179 = vsel %vm926, %v3177, %v3178
      %v3180 = vrot.slane %v3048, 5
      %v3181 = vrot.slane %v3180, 4
      %v3182 = vrot.slane %v3049, 5
      %v3183 = vsel %vm926, %v3181, %v3182
      %v3184 = vrot.slane %v3182, 4
      %v3185 = vrot.slane %v3050, 5
      %v3186 = vsel %vm926, %v3184, %v3185
      %v3187 = vrot.slane %v3051, 5
      %v3188 = vrot.slane %v3187, 4
      %v3189 = vrot.slane %v3052, 5
      %v3190 = vsel %vm926, %v3188, %v3189
      %v3191 = vrot.slane %v3189, 4
      %v3192 = vrot.slane %v3053, 5
      %v3193 = vsel %vm926, %v3191, %v3192
      %v3194 = vrot.slane %v3054, 5
      %v3195 = vrot.slane %v3194, 4
      %v3196 = vrot.slane %v3055, 5
      %v3197 = vsel %vm926, %v3195, %v3196
      %v3198 = vrot.slane %v3196, 4
      %v3199 = vrot.slane %v3056, 5
      %v3200 = vsel %vm926, %v3198, %v3199
      %v3201 = vrot.slane %v3057, 5
      %v3202 = vrot.slane %v3201, 4
      %v3203 = vrot.slane %v3058, 5
      %v3204 = vsel %vm926, %v3202, %v3203
      %v3205 = vrot.slane %v3203, 4
      %v3206 = vrot.slane %v3059, 5
      %v3207 = vsel %vm926, %v3205, %v3206
      %v3208 = vrot.slane %v3060, 5
      %v3209 = vrot.slane %v3208, 4
      %v3210 = vrot.slane %v3061, 5
      %v3211 = vsel %vm926, %v3209, %v3210
      %v3212 = vrot.slane %v3210, 4
      %v3213 = vrot.slane %v3062, 5
      %v3214 = vsel %vm926, %v3212, %v3213
      %v3215 = vrot.slane %v3063, 5
      %v3216 = vrot.slane %v3215, 4
      %v3217 = vrot.slane %v3064, 5
      %v3218 = vsel %vm926, %v3216, %v3217
      %v3219 = vrot.slane %v3217, 4
      %v3220 = vrot.slane %v3065, 5
      %v3221 = vsel %vm926, %v3219, %v3220
      %v3222 = vrot.slane %v3066, 5
      %v3223 = vrot.slane %v3222, 4
      %v3224 = vrot.slane %v3067, 5
      %v3225 = vsel %vm926, %v3223, %v3224
      %v3226 = vrot.slane %v3224, 4
      %v3227 = vrot.slane %v3068, 5
      %v3228 = vsel %vm926, %v3226, %v3227
      %3229 = vrot.lane.b32.xlu0 %v3120, 64
      %v3230 = vpop.permute.xlu0 %3229
      %3231 = vrot.lane.b32.xlu0 %v3123, 64
      %v3232 = vpop.permute.xlu0 %3231
      %3233 = vrot.lane.b32.xlu0 %v3127, 64
      %v3234 = vpop.permute.xlu0 %3233
      %3235 = vrot.lane.b32.xlu0 %v3130, 64
      %v3236 = vpop.permute.xlu0 %3235
      %3237 = vrot.lane.b32.xlu0 %v3134, 64
      %v3238 = vpop.permute.xlu0 %3237
      %3239 = vrot.lane.b32.xlu0 %v3137, 64
      %v3240 = vpop.permute.xlu0 %3239
      %3241 = vrot.lane.b32.xlu0 %v3141, 64
      %v3242 = vpop.permute.xlu0 %3241
      %3243 = vrot.lane.b32.xlu0 %v3144, 64
      %v3244 = vpop.permute.xlu0 %3243
      %3245 = vrot.lane.b32.xlu0 %v3148, 64
      %v3246 = vpop.permute.xlu0 %3245
      %3247 = vrot.lane.b32.xlu0 %v3151, 64
      %v3248 = vpop.permute.xlu0 %3247
      %3249 = vrot.lane.b32.xlu0 %v3155, 64
      %v3250 = vpop.permute.xlu0 %3249
      %3251 = vrot.lane.b32.xlu0 %v3158, 64
      %v3252 = vpop.permute.xlu0 %3251
      %3253 = vrot.lane.b32.xlu0 %v3162, 64
      %v3254 = vpop.permute.xlu0 %3253
      %3255 = vrot.lane.b32.xlu0 %v3165, 64
      %v3256 = vpop.permute.xlu0 %3255
      %3257 = vrot.lane.b32.xlu0 %v3169, 64
      %v3258 = vpop.permute.xlu0 %3257
      %3259 = vrot.lane.b32.xlu0 %v3172, 64
      %v3260 = vpop.permute.xlu0 %3259
      %3261 = vrot.lane.b32.xlu0 %v3176, 64
      %v3262 = vpop.permute.xlu0 %3261
      %3263 = vrot.lane.b32.xlu0 %v3179, 64
      %v3264 = vpop.permute.xlu0 %3263
      %3265 = vrot.lane.b32.xlu0 %v3183, 64
      %v3266 = vpop.permute.xlu0 %3265
      %3267 = vrot.lane.b32.xlu0 %v3186, 64
      %v3268 = vpop.permute.xlu0 %3267
      %3269 = vrot.lane.b32.xlu0 %v3190, 64
      %v3270 = vpop.permute.xlu0 %3269
      %3271 = vrot.lane.b32.xlu0 %v3193, 64
      %v3272 = vpop.permute.xlu0 %3271
      %3273 = vrot.lane.b32.xlu0 %v3197, 64
      %v3274 = vpop.permute.xlu0 %3273
      %3275 = vrot.lane.b32.xlu0 %v3200, 64
      %v3276 = vpop.permute.xlu0 %3275
      %3277 = vrot.lane.b32.xlu0 %v3204, 64
      %v3278 = vpop.permute.xlu0 %3277
      %3279 = vrot.lane.b32.xlu0 %v3207, 64
      %v3280 = vpop.permute.xlu0 %3279
      %3281 = vrot.lane.b32.xlu0 %v3211, 64
      %v3282 = vpop.permute.xlu0 %3281
      %3283 = vrot.lane.b32.xlu0 %v3214, 64
      %v3284 = vpop.permute.xlu0 %3283
      %3285 = vrot.lane.b32.xlu0 %v3218, 64
      %v3286 = vpop.permute.xlu0 %3285
      %3287 = vrot.lane.b32.xlu0 %v3221, 64
      %v3288 = vpop.permute.xlu0 %3287
      %3289 = vrot.lane.b32.xlu0 %v3225, 64
      %v3290 = vpop.permute.xlu0 %3289
      %3291 = vrot.lane.b32.xlu0 %v3228, 64
      %v3292 = vpop.permute.xlu0 %3291
      %vm3325 = vcmask 585216
      %3326 = vst.msk [vmem:[#allocation2] sm:$0xf] %vm3325, %v3230
      %3327 = vst.msk [vmem:[#allocation2 + $0x4] sm:$0xf] %vm3325, %v3232
      %3328 = vst.msk [vmem:[#allocation2 + $0x8] sm:$0xf] %vm3325, %v3234
      %3329 = vst.msk [vmem:[#allocation2 + $0xc] sm:$0xf] %vm3325, %v3236
      %3330 = vst.msk [vmem:[#allocation2 + $0x10] sm:$0xf] %vm3325, %v3238
      %3331 = vst.msk [vmem:[#allocation2 + $0x14] sm:$0xf] %vm3325, %v3240
      %3332 = vst.msk [vmem:[#allocation2 + $0x18] sm:$0xf] %vm3325, %v3242
      %3333 = vst.msk [vmem:[#allocation2 + $0x1c] sm:$0xf] %vm3325, %v3244
      %3334 = vst.msk [vmem:[#allocation2 + $0x20] sm:$0xf] %vm3325, %v3246
      %3335 = vst.msk [vmem:[#allocation2 + $0x24] sm:$0xf] %vm3325, %v3248
      %3336 = vst.msk [vmem:[#allocation2 + $0x28] sm:$0xf] %vm3325, %v3250
      %3337 = vst.msk [vmem:[#allocation2 + $0x2c] sm:$0xf] %vm3325, %v3252
      %3338 = vst.msk [vmem:[#allocation2 + $0x30] sm:$0xf] %vm3325, %v3254
      %3339 = vst.msk [vmem:[#allocation2 + $0x34] sm:$0xf] %vm3325, %v3256
      %3340 = vst.msk [vmem:[#allocation2 + $0x38] sm:$0xf] %vm3325, %v3258
      %3341 = vst.msk [vmem:[#allocation2 + $0x3c] sm:$0xf] %vm3325, %v3260
      %3342 = vst.msk [vmem:[#allocation2 + $0x40] sm:$0xf] %vm3325, %v3262
      %3343 = vst.msk [vmem:[#allocation2 + $0x44] sm:$0xf] %vm3325, %v3264
      %3344 = vst.msk [vmem:[#allocation2 + $0x48] sm:$0xf] %vm3325, %v3266
      %3345 = vst.msk [vmem:[#allocation2 + $0x4c] sm:$0xf] %vm3325, %v3268
      %3346 = vst.msk [vmem:[#allocation2 + $0x50] sm:$0xf] %vm3325, %v3270
      %3347 = vst.msk [vmem:[#allocation2 + $0x54] sm:$0xf] %vm3325, %v3272
      %3348 = vst.msk [vmem:[#allocation2 + $0x58] sm:$0xf] %vm3325, %v3274
      %3349 = vst.msk [vmem:[#allocation2 + $0x5c] sm:$0xf] %vm3325, %v3276
      %3350 = vst.msk [vmem:[#allocation2 + $0x60] sm:$0xf] %vm3325, %v3278
      %3351 = vst.msk [vmem:[#allocation2 + $0x64] sm:$0xf] %vm3325, %v3280
      %3352 = vst.msk [vmem:[#allocation2 + $0x68] sm:$0xf] %vm3325, %v3282
      %3353 = vst.msk [vmem:[#allocation2 + $0x6c] sm:$0xf] %vm3325, %v3284
      %3354 = vst.msk [vmem:[#allocation2 + $0x70] sm:$0xf] %vm3325, %v3286
      %3355 = vst.msk [vmem:[#allocation2 + $0x74] sm:$0xf] %vm3325, %v3288
      %3356 = vst.msk [vmem:[#allocation2 + $0x78] sm:$0xf] %vm3325, %v3290
      %3357 = vst.msk [vmem:[#allocation2 + $0x7c] sm:$0xf] %vm3325, %v3292
      %v3358 = vld [vmem:[#allocation2] sm:$0xf]
      %v3359 = vld [vmem:[#allocation2 + $0x4] sm:$0xf]
      %v3360 = vld [vmem:[#allocation2 + $0x8] sm:$0xf]
      %v3361 = vld [vmem:[#allocation2 + $0xc] sm:$0xf]
      %v3362 = vld [vmem:[#allocation2 + $0x10] sm:$0xf]
      %v3363 = vld [vmem:[#allocation2 + $0x14] sm:$0xf]
      %v3364 = vld [vmem:[#allocation2 + $0x18] sm:$0xf]
      %v3365 = vld [vmem:[#allocation2 + $0x1c] sm:$0xf]
      %v3366 = vld [vmem:[#allocation2 + $0x20] sm:$0xf]
      %v3367 = vld [vmem:[#allocation2 + $0x24] sm:$0xf]
      %v3368 = vld [vmem:[#allocation2 + $0x28] sm:$0xf]
      %v3369 = vld [vmem:[#allocation2 + $0x2c] sm:$0xf]
      %v3370 = vld [vmem:[#allocation2 + $0x30] sm:$0xf]
      %v3371 = vld [vmem:[#allocation2 + $0x34] sm:$0xf]
      %v3372 = vld [vmem:[#allocation2 + $0x38] sm:$0xf]
      %v3373 = vld [vmem:[#allocation2 + $0x3c] sm:$0xf]
      %v3374 = vld [vmem:[#allocation2 + $0x40] sm:$0xf]
      %v3375 = vld [vmem:[#allocation2 + $0x44] sm:$0xf]
      %v3376 = vld [vmem:[#allocation2 + $0x48] sm:$0xf]
      %v3377 = vld [vmem:[#allocation2 + $0x4c] sm:$0xf]
      %v3378 = vld [vmem:[#allocation2 + $0x50] sm:$0xf]
      %v3379 = vld [vmem:[#allocation2 + $0x54] sm:$0xf]
      %v3380 = vld [vmem:[#allocation2 + $0x58] sm:$0xf]
      %v3381 = vld [vmem:[#allocation2 + $0x5c] sm:$0xf]
      %v3382 = vld [vmem:[#allocation2 + $0x60] sm:$0xf]
      %v3383 = vld [vmem:[#allocation2 + $0x64] sm:$0xf]
      %v3384 = vld [vmem:[#allocation2 + $0x68] sm:$0xf]
      %v3385 = vld [vmem:[#allocation2 + $0x6c] sm:$0xf]
      %v3386 = vld [vmem:[#allocation2 + $0x70] sm:$0xf]
      %v3387 = vld [vmem:[#allocation2 + $0x74] sm:$0xf]
      %v3388 = vld [vmem:[#allocation2 + $0x78] sm:$0xf]
      %v3389 = vld [vmem:[#allocation2 + $0x7c] sm:$0xf]
      %v3390 = vld [vmem:[%s1] sm:$0xf]
      %v3391 = vld [vmem:[%s1 + $0x4] sm:$0xf]
      %v3392 = vld [vmem:[%s1 + $0x8] sm:$0xf]
      %v3393 = vld [vmem:[%s1 + $0xc] sm:$0xf]
      %v3394 = vld [vmem:[%s1 + $0x10] sm:$0xf]
      %v3395 = vld [vmem:[%s1 + $0x14] sm:$0xf]
      %v3396 = vld [vmem:[%s1 + $0x18] sm:$0xf]
      %v3397 = vld [vmem:[%s1 + $0x1c] sm:$0xf]
      %v3398 = vld [vmem:[%s1 + $0x20] sm:$0xf]
      %v3399 = vld [vmem:[%s2] sm:$0x1]
      %v3401 = vperm.slane %v3399, 0
      %v3435 = vunpack.c.l.b16 %v3358
      %v3436 = vunpack.c.l.b16 %v3359
      %v3437 = vunpack.c.l.b16 %v3360
      %v3438 = vunpack.c.l.b16 %v3361
      %v3439 = vunpack.c.l.b16 %v3362
      %v3440 = vunpack.c.l.b16 %v3363
      %v3441 = vunpack.c.l.b16 %v3364
      %v3442 = vunpack.c.l.b16 %v3365
      %v3443 = vunpack.c.l.b16 %v3366
      %v3444 = vunpack.c.l.b16 %v3367
      %v3445 = vunpack.c.l.b16 %v3368
      %v3446 = vunpack.c.l.b16 %v3369
      %v3447 = vunpack.c.l.b16 %v3370
      %v3448 = vunpack.c.l.b16 %v3371
      %v3449 = vunpack.c.l.b16 %v3372
      %v3450 = vunpack.c.l.b16 %v3373
      %v3451 = vunpack.c.l.b16 %v3374
      %v3452 = vunpack.c.l.b16 %v3375
      %v3453 = vunpack.c.l.b16 %v3376
      %v3454 = vunpack.c.l.b16 %v3377
      %v3455 = vunpack.c.l.b16 %v3378
      %v3456 = vunpack.c.l.b16 %v3379
      %v3457 = vunpack.c.l.b16 %v3380
      %v3458 = vunpack.c.l.b16 %v3381
      %v3459 = vunpack.c.l.b16 %v3382
      %v3460 = vunpack.c.l.b16 %v3383
      %v3461 = vunpack.c.l.b16 %v3384
      %v3462 = vunpack.c.l.b16 %v3385
      %v3463 = vunpack.c.l.b16 %v3386
      %v3464 = vunpack.c.l.b16 %v3387
      %v3465 = vunpack.c.l.b16 %v3388
      %v3466 = vunpack.c.l.b16 %v3389
      %v3467 = vpack.c.b16 %v3436, %v3435
      %v3468 = vpack.c.b16 %v3438, %v3437
      %v3469 = vpack.c.b16 %v3440, %v3439
      %v3470 = vpack.c.b16 %v3442, %v3441
      %v3471 = vpack.c.b16 %v3444, %v3443
      %v3472 = vpack.c.b16 %v3446, %v3445
      %v3473 = vpack.c.b16 %v3448, %v3447
      %v3474 = vpack.c.b16 %v3450, %v3449
      %v3475 = vpack.c.b16 %v3452, %v3451
      %v3476 = vpack.c.b16 %v3454, %v3453
      %v3477 = vpack.c.b16 %v3456, %v3455
      %v3478 = vpack.c.b16 %v3458, %v3457
      %v3479 = vpack.c.b16 %v3460, %v3459
      %v3480 = vpack.c.b16 %v3462, %v3461
      %v3481 = vpack.c.b16 %v3464, %v3463
      %v3482 = vpack.c.b16 %v3466, %v3465
      %v3492 = vunpack.c.l.b16 %v3390
      %v3493 = vunpack.c.l.b16 %v3391
      %v3494 = vunpack.c.l.b16 %v3392
      %v3495 = vunpack.c.l.b16 %v3393
      %v3496 = vunpack.c.l.b16 %v3394
      %v3497 = vunpack.c.l.b16 %v3395
      %v3498 = vunpack.c.l.b16 %v3396
      %v3499 = vunpack.c.l.b16 %v3397
      %v3500 = vunpack.c.l.b16 %v3398
      %v3501 = vpack.c.b16 %v3493, %v3492
      %v3502 = vpack.c.b16 %v3495, %v3494
      %v3503 = vpack.c.b16 %v3497, %v3496
      %v3504 = vpack.c.b16 %v3499, %v3498
      %v3505 = vpack.c.b16 %v3500, %v3500
      %vm3510 = vcmask 588800
      %v3512 = vsel %vm3510, %v3467, 0
      %v3515 = vsel %vm3510, %v3468, 0
      %v3518 = vsel %vm3510, %v3469, 0
      %v3521 = vsel %vm3510, %v3470, 0
      %v3524 = vsel %vm3510, %v3471, 0
      %v3527 = vsel %vm3510, %v3472, 0
      %v3530 = vsel %vm3510, %v3473, 0
      %v3533 = vsel %vm3510, %v3474, 0
      %v3536 = vsel %vm3510, %v3475, 0
      %v3539 = vsel %vm3510, %v3476, 0
      %v3542 = vsel %vm3510, %v3477, 0
      %v3545 = vsel %vm3510, %v3478, 0
      %v3548 = vsel %vm3510, %v3479, 0
      %v3551 = vsel %vm3510, %v3480, 0
      %v3554 = vsel %vm3510, %v3481, 0
      %v3557 = vsel %vm3510, %v3482, 0
      %vm3559 = vcmask 1043456
      %v3561 = vsel %vm3559, %v3505, 0
      %3563 = vmatpush.bf16.msra.mxu0 0
      %3564 = vmatpush.bf16.msra.mxu0 0
      %3565 = vmatpush.bf16.msra.mxu0 0
      %3566 = vmatpush.bf16.msra.mxu0 %v3561
      %3567 = vmatpush.bf16.msra.mxu0 %v3504
      %3568 = vmatpush.bf16.msra.mxu0 %v3503
      %3569 = vmatpush.bf16.msra.mxu0 %v3502
      %3570 = vmatpush.bf16.msra.mxu0 %v3501
      %3571 = vmatmul.bf16.gmra.mxu0 %v3512
      %v3572 = vpop.f32.mrf.mxu0
      %v3573 = vadd.f32 %v3401, %v3572
      %v3574 = vpop.f32.mrf.mxu0
      %v3575 = vadd.f32 %v3401, %v3574
      %3576 = vmatmul.bf16.gmra.mxu0 %v3515
      %v3577 = vpop.f32.mrf.mxu0
      %v3578 = vadd.f32 %v3401, %v3577
      %v3579 = vpop.f32.mrf.mxu0
      %v3580 = vadd.f32 %v3401, %v3579
      %3581 = vmatmul.bf16.gmra.mxu0 %v3518
      %v3582 = vpop.f32.mrf.mxu0
      %v3583 = vadd.f32 %v3401, %v3582
      %v3584 = vpop.f32.mrf.mxu0
      %v3585 = vadd.f32 %v3401, %v3584
      %3586 = vmatmul.bf16.gmra.mxu0 %v3521
      %v3587 = vpop.f32.mrf.mxu0
      %v3588 = vadd.f32 %v3401, %v3587
      %v3589 = vpop.f32.mrf.mxu0
      %v3590 = vadd.f32 %v3401, %v3589
      %3591 = vmatmul.bf16.gmra.mxu0 %v3524
      %v3592 = vpop.f32.mrf.mxu0
      %v3593 = vadd.f32 %v3401, %v3592
      %v3594 = vpop.f32.mrf.mxu0
      %v3595 = vadd.f32 %v3401, %v3594
      %3596 = vmatmul.bf16.gmra.mxu0 %v3527
      %v3597 = vpop.f32.mrf.mxu0
      %v3598 = vadd.f32 %v3401, %v3597
      %v3599 = vpop.f32.mrf.mxu0
      %v3600 = vadd.f32 %v3401, %v3599
      %3601 = vmatmul.bf16.gmra.mxu0 %v3530
      %v3602 = vpop.f32.mrf.mxu0
      %v3603 = vadd.f32 %v3401, %v3602
      %v3604 = vpop.f32.mrf.mxu0
      %v3605 = vadd.f32 %v3401, %v3604
      %3606 = vmatmul.bf16.gmra.mxu0 %v3533
      %v3607 = vpop.f32.mrf.mxu0
      %v3608 = vadd.f32 %v3401, %v3607
      %v3609 = vpop.f32.mrf.mxu0
      %v3610 = vadd.f32 %v3401, %v3609
      %3611 = vmatmul.bf16.gmra.mxu0 %v3536
      %v3612 = vpop.f32.mrf.mxu0
      %v3613 = vadd.f32 %v3401, %v3612
      %v3614 = vpop.f32.mrf.mxu0
      %v3615 = vadd.f32 %v3401, %v3614
      %3616 = vmatmul.bf16.gmra.mxu0 %v3539
      %v3617 = vpop.f32.mrf.mxu0
      %v3618 = vadd.f32 %v3401, %v3617
      %v3619 = vpop.f32.mrf.mxu0
      %v3620 = vadd.f32 %v3401, %v3619
      %3621 = vmatmul.bf16.gmra.mxu0 %v3542
      %v3622 = vpop.f32.mrf.mxu0
      %v3623 = vadd.f32 %v3401, %v3622
      %v3624 = vpop.f32.mrf.mxu0
      %v3625 = vadd.f32 %v3401, %v3624
      %3626 = vmatmul.bf16.gmra.mxu0 %v3545
      %v3627 = vpop.f32.mrf.mxu0
      %v3628 = vadd.f32 %v3401, %v3627
      %v3629 = vpop.f32.mrf.mxu0
      %v3630 = vadd.f32 %v3401, %v3629
      %3631 = vmatmul.bf16.gmra.mxu0 %v3548
      %v3632 = vpop.f32.mrf.mxu0
      %v3633 = vadd.f32 %v3401, %v3632
      %v3634 = vpop.f32.mrf.mxu0
      %v3635 = vadd.f32 %v3401, %v3634
      %3636 = vmatmul.bf16.gmra.mxu0 %v3551
      %v3637 = vpop.f32.mrf.mxu0
      %v3638 = vadd.f32 %v3401, %v3637
      %v3639 = vpop.f32.mrf.mxu0
      %v3640 = vadd.f32 %v3401, %v3639
      %3641 = vmatmul.bf16.gmra.mxu0 %v3554
      %v3642 = vpop.f32.mrf.mxu0
      %v3643 = vadd.f32 %v3401, %v3642
      %v3644 = vpop.f32.mrf.mxu0
      %v3645 = vadd.f32 %v3401, %v3644
      %3646 = vmatmul.bf16.gmra.mxu0 %v3557
      %v3647 = vpop.f32.mrf.mxu0
      %v3648 = vadd.f32 %v3401, %v3647
      %v3649 = vpop.f32.mrf.mxu0
      %v3650 = vadd.f32 %v3401, %v3649
      %3651 = vdwg.mxu0
      %v3652 = vpack.c.bf16 %v3573, %v3573
      %v3653 = vpack.c.bf16 %v3575, %v3575
      %v3654 = vpack.c.bf16 %v3578, %v3578
      %v3655 = vpack.c.bf16 %v3580, %v3580
      %v3656 = vpack.c.bf16 %v3583, %v3583
      %v3657 = vpack.c.bf16 %v3585, %v3585
      %v3658 = vpack.c.bf16 %v3588, %v3588
      %v3659 = vpack.c.bf16 %v3590, %v3590
      %v3660 = vpack.c.bf16 %v3593, %v3593
      %v3661 = vpack.c.bf16 %v3595, %v3595
      %v3662 = vpack.c.bf16 %v3598, %v3598
      %v3663 = vpack.c.bf16 %v3600, %v3600
      %v3664 = vpack.c.bf16 %v3603, %v3603
      %v3665 = vpack.c.bf16 %v3605, %v3605
      %v3666 = vpack.c.bf16 %v3608, %v3608
      %v3667 = vpack.c.bf16 %v3610, %v3610
      %v3668 = vpack.c.bf16 %v3613, %v3613
      %v3669 = vpack.c.bf16 %v3615, %v3615
      %v3670 = vpack.c.bf16 %v3618, %v3618
      %v3671 = vpack.c.bf16 %v3620, %v3620
      %v3672 = vpack.c.bf16 %v3623, %v3623
      %v3673 = vpack.c.bf16 %v3625, %v3625
      %v3674 = vpack.c.bf16 %v3628, %v3628
      %v3675 = vpack.c.bf16 %v3630, %v3630
      %v3676 = vpack.c.bf16 %v3633, %v3633
      %v3677 = vpack.c.bf16 %v3635, %v3635
      %v3678 = vpack.c.bf16 %v3638, %v3638
      %v3679 = vpack.c.bf16 %v3640, %v3640
      %v3680 = vpack.c.bf16 %v3643, %v3643
      %v3681 = vpack.c.bf16 %v3645, %v3645
      %v3682 = vpack.c.bf16 %v3648, %v3648
      %v3683 = vpack.c.bf16 %v3650, %v3650
      %3684 = vst [vmem:[%s192] sm:$0xf] %v3652
      %3685 = vst [vmem:[%s192 + $0x4] sm:$0xf] %v3653
      %3686 = vst [vmem:[%s192 + $0x8] sm:$0xf] %v3654
      %3687 = vst [vmem:[%s192 + $0xc] sm:$0xf] %v3655
      %3688 = vst [vmem:[%s192 + $0x10] sm:$0xf] %v3656
      %3689 = vst [vmem:[%s192 + $0x14] sm:$0xf] %v3657
      %3690 = vst [vmem:[%s192 + $0x18] sm:$0xf] %v3658
      %3691 = vst [vmem:[%s192 + $0x1c] sm:$0xf] %v3659
      %3692 = vst [vmem:[%s192 + $0x20] sm:$0xf] %v3660
      %3693 = vst [vmem:[%s192 + $0x24] sm:$0xf] %v3661
      %3694 = vst [vmem:[%s192 + $0x28] sm:$0xf] %v3662
      %3695 = vst [vmem:[%s192 + $0x2c] sm:$0xf] %v3663
      %3696 = vst [vmem:[%s192 + $0x30] sm:$0xf] %v3664
      %3697 = vst [vmem:[%s192 + $0x34] sm:$0xf] %v3665
      %3698 = vst [vmem:[%s192 + $0x38] sm:$0xf] %v3666
      %3699 = vst [vmem:[%s192 + $0x3c] sm:$0xf] %v3667
      %3700 = vst [vmem:[%s192 + $0x40] sm:$0xf] %v3668
      %3701 = vst [vmem:[%s192 + $0x44] sm:$0xf] %v3669
      %3702 = vst [vmem:[%s192 + $0x48] sm:$0xf] %v3670
      %3703 = vst [vmem:[%s192 + $0x4c] sm:$0xf] %v3671
      %3704 = vst [vmem:[%s192 + $0x50] sm:$0xf] %v3672
      %3705 = vst [vmem:[%s192 + $0x54] sm:$0xf] %v3673
      %3706 = vst [vmem:[%s192 + $0x58] sm:$0xf] %v3674
      %3707 = vst [vmem:[%s192 + $0x5c] sm:$0xf] %v3675
      %3708 = vst [vmem:[%s192 + $0x60] sm:$0xf] %v3676
      %3709 = vst [vmem:[%s192 + $0x64] sm:$0xf] %v3677
      %3710 = vst [vmem:[%s192 + $0x68] sm:$0xf] %v3678
      %3711 = vst [vmem:[%s192 + $0x6c] sm:$0xf] %v3679
      %3712 = vst [vmem:[%s192 + $0x70] sm:$0xf] %v3680
      %3713 = vst [vmem:[%s192 + $0x74] sm:$0xf] %v3681
      %3714 = vst [vmem:[%s192 + $0x78] sm:$0xf] %v3682
      %3715 = vst [vmem:[%s192 + $0x7c] sm:$0xf] %v3683
      %s3716 = smul.u32 32, %s19
      %p3717 = scmp.lt.s32.totalorder %s18, 1
      %s3718 = scalar_select %p3717, %s18, 1
      %p3719 = scmp.lt.s32.totalorder %s3716, 31
      %s3720 = scalar_select %p3719, %s3716, 31
      %s3721 = smul.addr %s3718, 32
      %s3722 = sadd.s32 %s3720, %s3721
      %s3723 = smul.addr %s3722, 4
      %s3724 = scalar_lea.vmem %s3, %s3723
      // Predicated region
      $region33: #{quaternion_conv2d.1} parent=31 // pred_check
        %p3725 = pneg %p114
      $region34: #{quaternion_conv2d.1} parent=31 // pred_check_branch
        %3727 = sbr.rel (%p3725) target = $region36
      $region35: #{quaternion_conv2d.1} parent=31 // pred_region
        %s3728 = smul.u32 32, %s19
      $region36: #{quaternion_conv2d.1} parent=31 // pred_fallthru
        _
    $region32: #{quaternion_conv2d.1} parent=5 // pred_fallthru
      _
    %p3729 = scmp.le.s32.totalorder 2, %s9
    // Predicated region
    $region37: #{quaternion_conv2d.1} parent=5 // pred_check
      %p3730 = pneg %p3729
    $region38: #{quaternion_conv2d.1} parent=5 // pred_check_branch
      %3732 = sbr.rel (%p3730) target = $region40
    $region39: #{quaternion_conv2d.1} parent=5 // pred_region
      %s3733 = ssub.s32 %s9, 2
      // Predicated region
      $region41: #{quaternion_conv2d.1} parent=39 // pred_check
        %p3734 = pneg %p120
      $region42: #{quaternion_conv2d.1} parent=39 // pred_check_branch
        %3736 = sbr.rel (%p3734) target = $region44
      $region43: #{quaternion_conv2d.1} parent=39 // pred_region
        %s3737 = smul.u32 32, %s21
        %p3738 = scmp.lt.s32.totalorder %s20, 1
        %s3739 = scalar_select %p3738, %s20, 1
        %p3740 = scmp.lt.s32.totalorder %s3737, 31
        %s3741 = scalar_select %p3740, %s3737, 31
        %s3742 = smul.addr %s3739, 32
        %s3743 = sadd.s32 %s3741, %s3742
        %s3744 = smul.addr %s3743, 4
        %s3745 = scalar_lea.vmem %s3, %s3744
      $region44: #{quaternion_conv2d.1} parent=39 // pred_fallthru
        _
    $region40: #{quaternion_conv2d.1} parent=5 // pred_fallthru
      _
  $region6: #{quaternion_conv2d.1} parent=0 // loop_footer
    %s13 = sadd.s32 1, %s9
  $region7: #{quaternion_conv2d.1} parent=0 // loop_footer_branch
    %8 = sbr.rel target = $region3
  $region8: #{quaternion_conv2d.1} parent=0 // loop_exit
    _

</llo_original>
